<compile_context>
chip_gen: v5e
topology: v5e:2x2
jax: 0.10.0
libtpu: 0.0.40
codegen_flags: <defaults>
</compile_context>

<pallas_src>
import functools

import jax
import jax.numpy as jnp
from jax.experimental import pallas as pl
from jax.experimental.pallas import tpu as pltpu


LANE = 128   # TPU lane width; channel dims are padded to multiples of 128.


def _round_up(x, m):
    return (x + m - 1) // m * m


def _cpad(c):
    return max(_round_up(c, LANE), LANE)


_CP = pltpu.CompilerParams(
    dimension_semantics=("parallel",),
    vmem_limit_bytes=48 * 1024 * 1024,
)


# ----------------------------- Pallas kernels -----------------------------

def _matmul_kernel(x_ref, w_ref, o_ref, *, relu):
    # (TM, K) x (K, N) -> (TM, N); bf16 inputs, f32 accumulation on the MXU.
    acc = jnp.dot(x_ref[...], w_ref[...], preferred_element_type=jnp.float32)
    if relu:
        acc = jnp.maximum(acc, 0.0)
    o_ref[...] = acc.astype(o_ref.dtype)


def _head_kernel(x_ref, w_ref, o_ref):
    # 1x1 conv (wide, no activation) + per-row L2 normalize (F.normalize p=2, dim=1).
    emb = jnp.dot(x_ref[...], w_ref[...], preferred_element_type=jnp.float32)
    ss = jnp.sum(emb * emb, axis=-1, keepdims=True)
    inv = jax.lax.rsqrt(jnp.maximum(ss, 1e-24))    # rsqrt -> EUP slot
    o_ref[...] = (emb * inv).astype(o_ref.dtype)


def _zero_border(e_ref, Hp, Wp):
    """Zero only the 1-pixel border of the flat padded scratch.

    Flat layout: padded row r occupies flat rows [r*(Wp+2), (r+1)*(Wp+2)).
    The interior is overwritten every grid step, so only the border needs
    (re-)zeroing; done per step so it is correct under any grid partitioning.
    """
    Wq = Wp + 2
    c = e_ref.shape[-1]
    # padded row 0 plus the left pad column of padded row 1 (contiguous).
    e_ref[pl.ds(0, Wq + 1), :] = jnp.zeros((Wq + 1, c), jnp.float32)
    # right pad of padded row y+1 and left pad of padded row y+2 (contiguous pair).
    z2 = jnp.zeros((2, c), jnp.float32)
    for y in range(Hp):
        e_ref[pl.ds((y + 1) * Wq + Wp + 1, 2), :] = z2
    # remainder of the last padded row.
    e_ref[pl.ds((Hp + 1) * Wq + 1, Wp + 1), :] = jnp.zeros((Wp + 1, c), jnp.float32)


def _scatter_rows(e_ref, val, Hp, Wp):
    """Write the dense (Hp*Wp, C) value into the interior of the padded scratch."""
    Wq = Wp + 2
    for y in range(Hp):
        e_ref[pl.ds((y + 1) * Wq + 1, Wp), :] = val[y * Wp:(y + 1) * Wp]


def _dw3x3(e_ref, w2_ref, Hp, Wp):
    """Depthwise 3x3 (pad=1) as 9 whole-slab shifted MACs on the flat padded scratch.

    Returns an (L, C) slab with L = Hp*(Wp+2) - 2; output pixel (y, x) sits at
    slab row y*(Wp+2) + x.  The 2 pad columns per row hold garbage that callers
    strip at store time.  Taps are loaded once (9 loads total).
    """
    Wq = Wp + 2
    L = Hp * Wq - 2
    taps = [w2_ref[k] for k in range(9)]
    acc = e_ref[pl.ds(0, L), :] * taps[0]
    for k in range(1, 9):
        ky, kx = divmod(k, 3)
        acc = acc + e_ref[pl.ds(ky * Wq + kx, L), :] * taps[k]
    return acc


def _dwise_kernel(x_ref, w2_ref, o_ref, e_ref, *, Hp, Wp):
    """FusedMaxPoolDepthwiseConv2dReLU for one image.
       x_ref : (1, 4*Hp*Wp, C) bf16, rows in 2x2-pool phase order
       w2_ref: (9, 1, C) f32 depthwise taps
       o_ref : (1, Hp*Wp, C) bf16 (row-major)
       e_ref : ((Hp+2)*(Wp+2), C) f32 flat zero-bordered scratch
    """
    q = Hp * Wp
    Wq = Wp + 2
    _zero_border(e_ref, Hp, Wp)
    # 2x2/2 maxpool = elementwise max of 4 contiguous phase slabs.
    pooled = jnp.maximum(
        jnp.maximum(x_ref[0, pl.ds(0, q), :], x_ref[0, pl.ds(q, q), :]),
        jnp.maximum(x_ref[0, pl.ds(2 * q, q), :], x_ref[0, pl.ds(3 * q, q), :]),
    ).astype(jnp.float32)
    _scatter_rows(e_ref, pooled, Hp, Wp)
    acc = jnp.maximum(_dw3x3(e_ref, w2_ref, Hp, Wp), 0.0)
    # strip pad columns; each row store is lane-dense (C is a multiple of 128).
    for y in range(Hp):
        o_ref[0, pl.ds(y * Wp, Wp), :] = acc[y * Wq:y * Wq + Wp].astype(o_ref.dtype)


def _bottleneck_kernel(*refs, Hp, Wp, stride, has_expand, expand_relu, has_residual):
    """Fully fused ResidualBottleneck for one image (expanded activation never
    leaves VMEM):
        [1x1 expand (+ReLU)] -> [2x2/2 maxpool] -> dw 3x3 (+ReLU) -> 1x1 project
        (+ residual add, f32)
    For stride==2 the input rows arrive in 2x2-pool phase order so the maxpool of
    the expanded activation is 4 contiguous slab maxes.
    """
    if has_expand:
        x_ref, w1_ref, w2_ref, w3_ref, o_ref, e_ref = refs
    else:
        x_ref, w2_ref, w3_ref, o_ref, e_ref = refs

    q = Hp * Wp
    Wq = Wp + 2
    _zero_border(e_ref, Hp, Wp)

    # 1) 1x1 expand (single MXU matmul) or identity (no eye-matmul).
    if has_expand:
        h = jnp.dot(x_ref[0], w1_ref[...], preferred_element_type=jnp.float32)
        if expand_relu:
            h = jnp.maximum(h, 0.0)
    else:
        h = x_ref[0].astype(jnp.float32)

    # 2) optional 2x2/2 maxpool (4 contiguous phase slabs of the expanded value).
    if stride == 2:
        pooled = jnp.maximum(jnp.maximum(h[0 * q:1 * q], h[1 * q:2 * q]),
                             jnp.maximum(h[2 * q:3 * q], h[3 * q:4 * q]))
    else:
        pooled = h

    # 3) scatter interior rows into the zero-bordered scratch.
    _scatter_rows(e_ref, pooled, Hp, Wp)

    # 4) depthwise 3x3 + ReLU as 9 whole-slab MACs.
    acc = jnp.maximum(_dw3x3(e_ref, w2_ref, Hp, Wp), 0.0)

    # 5) 1x1 project on the padded slab (pad columns carry harmless garbage).
    proj = jnp.dot(acc.astype(jnp.bfloat16), w3_ref[...],
                   preferred_element_type=jnp.float32)

    # 6) strip pad columns, residual add in f32, lane-dense row stores.
    for y in range(Hp):
        row = proj[y * Wq:y * Wq + Wp]
        if has_residual:
            row = row + x_ref[0, pl.ds(y * Wp, Wp), :].astype(jnp.float32)
        o_ref[0, pl.ds(y * Wp, Wp), :] = row.astype(o_ref.dtype)


# ----------------------------- wrappers / glue -----------------------------

def _row_tiled_call(kernel, x, w, out_dtype):
    """(M, K) x (K, N) pallas_call; 128-aligned row tiles, >=2 grid steps when M
    is large (v7x dual TC), ragged M handled by zero-padding."""
    m, k = x.shape
    n = w.shape[1]
    if m <= 256:
        tm, mp = m, m
    else:
        tm = min(1024, _round_up(pl.cdiv(m, 2), 128))
        mp = _round_up(m, tm)
    xp = x if mp == m else jnp.pad(x, ((0, mp - m), (0, 0)))
    y = pl.pallas_call(
        kernel,
        out_shape=jax.ShapeDtypeStruct((mp, n), out_dtype),
        grid=(mp // tm,),
        in_specs=[pl.BlockSpec((tm, k), lambda i: (i, 0)),
                  pl.BlockSpec((k, n), lambda i: (0, 0))],
        out_specs=pl.BlockSpec((tm, n), lambda i: (i, 0)),
        compiler_params=_CP,
    )(xp, w)
    return y[:m] if mp != m else y


def matmul2d(x, w, *, relu, out_dtype):
    return _row_tiled_call(functools.partial(_matmul_kernel, relu=relu),
                           x, w, out_dtype)


def pre_stage(x, w_flat, stride):
    """3x3 conv (pad=1) + ReLU via a single im2col matmul.  The im2col rows are
    emitted directly in 2x2-maxpool phase order so the following dwise kernel
    needs no HBM relayout of the pre-stage output."""
    n, h, w, cin = x.shape
    cout = w_flat.shape[1]
    xp = jnp.pad(x, ((0, 0), (1, 1), (1, 1), (0, 0)))
    ho = (h + 2 - 3) // stride + 1
    wo = (w + 2 - 3) // stride + 1
    assert ho % 2 == 0 and wo % 2 == 0, "dwise 2x2/2 maxpool needs even dims"
    hp, wp = ho // 2, wo // 2

    def phase_rows(p):   # (n, ho, wo, cin) -> (n*ho*wo, cin), pool-phase-major rows
        return (p.reshape(n, hp, 2, wp, 2, cin)
                .transpose(0, 2, 4, 1, 3, 5).reshape(n * ho * wo, cin))

    cols = [phase_rows(xp[:, ky:ky + stride * ho:stride,
                          kx:kx + stride * wo:stride, :])
            for ky in range(3) for kx in range(3)]
    col = jnp.concatenate(cols, axis=-1).astype(jnp.bfloat16)   # (M, 9*Cin)
    y = matmul2d(col, w_flat, relu=True, out_dtype=jnp.bfloat16)
    return y.reshape(n, ho * wo, cout), hp, wp


def dwise_stage(x_phase, w2, hp, wp):
    """FusedMaxPoolDepthwiseConv2dReLU (one fused kernel per image)."""
    n, _, c = x_phase.shape
    q = hp * wp
    return pl.pallas_call(
        functools.partial(_dwise_kernel, Hp=hp, Wp=wp),
        out_shape=jax.ShapeDtypeStruct((n, q, c), jnp.bfloat16),
        grid=(n,),
        in_specs=[pl.BlockSpec((1, 4 * q, c), lambda i: (i, 0, 0)),
                  pl.BlockSpec((9, 1, c), lambda i: (0, 0, 0))],
        out_specs=pl.BlockSpec((1, q, c), lambda i: (i, 0, 0)),
        scratch_shapes=[pltpu.VMEM(((hp + 2) * (wp + 2), c), jnp.float32)],
        compiler_params=_CP,
    )(x_phase, w2)


def residual_bottleneck(x_flat, h, w, blk):
    """One fused ResidualBottleneck block (expand + pool + dw + project + add)."""
    n, _, cinp = x_flat.shape
    stride = blk['stride']
    assert stride in (1, 2)
    hidden_p = blk['conv2'].shape[2]
    coutp = blk['conv3'].shape[1]
    hp, wp = h // stride, w // stride
    has_res = (stride == 1 and blk['in'] == blk['out'])
    has_expand = blk['conv1'] is not None

    if stride == 2:
        assert h % 2 == 0 and w % 2 == 0
        # Phase-order the (narrow, Cin-wide) block input so the in-kernel maxpool
        # of the VMEM-resident expanded activation is 4 contiguous slab maxes.
        # TODO(synk): could be removed by emitting phase order from the producer kernel.
        x_in = (x_flat.reshape(n, h // 2, 2, w // 2, 2, cinp)
                .transpose(0, 2, 4, 1, 3, 5).reshape(n, h * w, cinp))
    else:
        x_in = x_flat

    in_specs = [pl.BlockSpec((1, h * w, cinp), lambda i: (i, 0, 0))]
    args = [x_in]
    if has_expand:
        in_specs.append(pl.BlockSpec((cinp, hidden_p), lambda i: (0, 0)))
        args.append(blk['conv1'])
    in_specs += [pl.BlockSpec((9, 1, hidden_p), lambda i: (0, 0, 0)),
                 pl.BlockSpec((hidden_p, coutp), lambda i: (0, 0))]
    args += [blk['conv2'], blk['conv3']]

    out = pl.pallas_call(
        functools.partial(_bottleneck_kernel, Hp=hp, Wp=wp, stride=stride,
                          has_expand=has_expand, expand_relu=has_expand,
                          has_residual=has_res),
        out_shape=jax.ShapeDtypeStruct((n, hp * wp, coutp), jnp.bfloat16),
        grid=(n,),
        in_specs=in_specs,
        out_specs=pl.BlockSpec((1, hp * wp, coutp), lambda i: (i, 0, 0)),
        scratch_shapes=[pltpu.VMEM(((hp + 2) * (wp + 2), hidden_p), jnp.float32)],
        compiler_params=_CP,
    )(*args)
    return out, hp, wp


def avgpool_conv_l2norm(x, w, pool_size):
    """Classifier head: AvgPool(pool_size, pool_stride=1 per the module) + 1x1
    conv (wide, no act) + F.normalize(p=2, dim=1).  The avg-pool runs in the
    wrapper (tiny tensor); matmul + normalize run in one Pallas kernel."""
    n, h, wd, c = x.shape
    ho, wo = h - pool_size + 1, wd - pool_size + 1
    assert ho >= 1 and wo >= 1
    xf = x.astype(jnp.float32)
    acc = None
    for dy in range(pool_size):
        for dx in range(pool_size):
            v = xf[:, dy:dy + ho, dx:dx + wo, :]
            acc = v if acc is None else acc + v
    pooled = (acc * (1.0 / float(pool_size * pool_size))).astype(jnp.bfloat16)
    emb = _row_tiled_call(_head_kernel, pooled.reshape(n * ho * wo, c), w,
                          out_dtype=jnp.float32)
    return emb.reshape(n, ho, wo, -1)


# ----------------------------- parameters -----------------------------

def make_params(key, *, num_channels, bottleneck_settings, last_layer_width,
                pre_layer_stride, avg_pool_size=4):
    """Deterministic synthetic weights, PyTorch conv layouts converted to kernel
    layouts (im2col / tap-major / (Cin, Cout)), channel dims zero-padded to 128
    multiples for lane-dense stores; MXU weights in bf16."""
    def nxt():
        nonlocal key
        key, sub = jax.random.split(key)
        return sub

    def conv_w(cout, cin, kh, kw):
        fan_in = cin * kh * kw
        w = jax.random.normal(nxt(), (cout, cin, kh, kw), jnp.float32)
        return w * (1.0 / jnp.sqrt(jnp.float32(fan_in)))

    def to_im2col(w, cout_pad):  # (Cout,Cin,kh,kw) -> (kh*kw*Cin, Cout_pad) bf16
        cout, cin, kh, kw = w.shape
        m = jnp.transpose(w, (2, 3, 1, 0)).reshape(kh * kw * cin, cout)
        m = jnp.pad(m, ((0, 0), (0, cout_pad - cout)))
        return m.astype(jnp.bfloat16)

    def to_dw_taps(w, c_pad):    # (C,1,kh,kw) -> (kh*kw, 1, C_pad) f32 (VPU)
        c, _, kh, kw = w.shape
        t = jnp.transpose(w, (2, 3, 1, 0)).reshape(kh * kw, 1, c)
        return jnp.pad(t, ((0, 0), (0, 0), (0, c_pad - c)))

    def to_pw(w, cin_pad, cout_pad):  # (Cout,Cin,1,1) -> (Cin_pad, Cout_pad) bf16
        cout, cin = w.shape[0], w.shape[1]
        m = jnp.transpose(w[:, :, 0, 0], (1, 0))
        m = jnp.pad(m, ((0, cin_pad - cin), (0, cout_pad - cout)))
        return m.astype(jnp.bfloat16)

    c0 = bottleneck_settings[0][1]
    # The reference module hardcodes the dwise stage at 64 channels.
    assert c0 == 64, "AI87MobileNetV2 requires bottleneck_settings[0][1] == 64"

    params = {'pre_stride': pre_layer_stride, 'avg_pool_size': avg_pool_size,
              'embed_dim': 64}
    params['pre'] = to_im2col(conv_w(c0, num_channels, 3, 3), _cpad(c0))
    params['dwise'] = to_dw_taps(conv_w(64, 1, 3, 3), _cpad(64))

    blocks = []
    for setting in bottleneck_settings:
        num_repeat, in_ch, out_ch, stride, expansion = setting
        for r in range(num_repeat):
            b_in = in_ch if r == 0 else out_ch
            b_stride = stride if r == 0 else 1
            hidden = int(round(b_in * expansion))
            blk = {'stride': b_stride, 'in': b_in, 'out': out_ch}
            if hidden == b_in:                 # ai8x: identity (no conv / no ReLU)
                blk['conv1'] = None
            else:
                blk['conv1'] = to_pw(conv_w(hidden, b_in, 1, 1),
                                     _cpad(b_in), _cpad(hidden))
            blk['conv2'] = to_dw_taps(conv_w(hidden, 1, 3, 3), _cpad(hidden))
            blk['conv3'] = to_pw(conv_w(out_ch, hidden, 1, 1),
                                 _cpad(hidden), _cpad(out_ch))
            blocks.append(blk)
    params['blocks'] = blocks

    last_in = bottleneck_settings[-1][2]
    params['post'] = to_pw(conv_w(last_layer_width, last_in, 1, 1),
                           _cpad(last_in), _cpad(last_layer_width))
    params['classifier'] = to_pw(conv_w(64, last_layer_width, 1, 1),
                                 _cpad(last_layer_width), _cpad(64))
    return params


# ----------------------------- forward pass -----------------------------

def ai87_mobilenet_v2_forward(params, x_nchw):
    x = jnp.transpose(x_nchw, (0, 2, 3, 1)).astype(jnp.float32)   # NCHW -> NHWC
    n = x.shape[0]

    # pre_stage: 3x3 conv (pad=1) + ReLU, output rows in 2x2-pool phase order.
    xflat, hp, wp = pre_stage(x, params['pre'], params['pre_stride'])

    # dwise: fused maxpool 2x2/2 + depthwise 3x3 + ReLU (one kernel per image).
    xflat = dwise_stage(xflat, params['dwise'], hp, wp)       # (n, hp*wp, 128)
    h_cur, w_cur = hp, wp

    # feature stages: fully fused ResidualBottleneck blocks.
    for blk in params['blocks']:
        xflat, h_cur, w_cur = residual_bottleneck(xflat, h_cur, w_cur, blk)

    # post_stage: 1x1 conv + ReLU.
    c = xflat.shape[-1]
    xflat = matmul2d(xflat.reshape(n * h_cur * w_cur, c), params['post'],
                     relu=True, out_dtype=jnp.bfloat16)
    x = xflat.reshape(n, h_cur, w_cur, -1)

    # classifier: AvgPool(pool_stride=1) + 1x1 conv (wide) + F.normalize(p=2, dim=1).
    emb = avgpool_conv_l2norm(x, params['classifier'], params['avg_pool_size'])
    emb = emb[..., :params['embed_dim']]                      # drop lane padding
    return jnp.transpose(emb, (0, 3, 1, 2))                   # NHWC -> NCHW


# ----------------------------- demo -----------------------------

if __name__ == "__main__":
    key = jax.random.PRNGKey(0)
    pkey, xkey = jax.random.split(key)

    # Small but structurally faithful config exercising every kernel path:
    # [num_repeat, in_channels, out_channels, stride, expansion_factor]
    #  - block 1: identity expand + residual (expansion 1, stride 1)
    #  - block 2: 1x1 expand + residual (stride 1)
    #  - block 3: 1x1 expand + 2x2/2 maxpool, no residual (stride 2)
    bottleneck_settings = [
        [1, 64, 64, 1, 1],
        [1, 64, 64, 1, 2],
        [1, 64, 128, 2, 2],
    ]
    params = make_params(
        pkey,
        num_channels=3,
        bottleneck_settings=bottleneck_settings,
        last_layer_width=128,
        pre_layer_stride=1,
        avg_pool_size=4,
    )

    # Small NCHW input (batch=2, channels=3, 16x16 spatial).
    x = jax.random.normal(xkey, (2, 3, 16, 16), jnp.float32)

    fwd = jax.jit(lambda xin: ai87_mobilenet_v2_forward(params, xin))
    out = jax.block_until_ready(fwd(x))
    assert out.shape == (2, 64, 1, 1), out.shape
    assert bool(jnp.all(jnp.isfinite(out)))
    print("KERNEL_OK")
</pallas_src>

<mosaic_0001>
module attributes {stable_mosaic.version = 11 : i64} {
  func.func @_matmul_kernel(%arg0: i32, %arg1: memref<256x27xbf16, #tpu.memory_space<vmem>>, %arg2: memref<27x128xbf16, #tpu.memory_space<vmem>>, %arg3: memref<256x128xbf16, #tpu.memory_space<vmem>>) attributes {dimension_semantics = [#tpu.dimension_semantics<parallel>], iteration_bounds = array<i64: 2>, scalar_prefetch = 0 : i64, scratch_operands = 0 : i64, tpu.core_type = #tpu.core_type<tc>, window_params = [{transform_indices = @transform_0, window_bounds = array<i64: 256, 27>}, {pipeline_mode = #tpu.pipeline_mode<synchronous>, transform_indices = @transform_1, window_bounds = array<i64: 27, 128>}, {transform_indices = @transform_2, window_bounds = array<i64: 256, 128>}]} {
    %c0 = arith.constant 0 : index
    %c0_0 = arith.constant 0 : index
    %0 = vector.load %arg1[%c0, %c0_0] : memref<256x27xbf16, #tpu.memory_space<vmem>>, vector<256x27xbf16>
    %c0_1 = arith.constant 0 : index
    %c0_2 = arith.constant 0 : index
    %1 = vector.load %arg2[%c0_1, %c0_2] : memref<27x128xbf16, #tpu.memory_space<vmem>>, vector<27x128xbf16>
    %cst = arith.constant dense<0.000000e+00> : vector<256x128xf32>
    %2 = tpu.matmul %0, %1, %cst {dimension_numbers = #tpu.dot_dimension_numbers<[1], [0], [0], [1], [0, 0, 1, 1], [], []>} : vector<256x27xbf16>, vector<27x128xbf16>, vector<256x128xf32> -> vector<256x128xf32>
    %cst_3 = arith.constant 0.000000e+00 : f32
    %3 = vector.broadcast %cst_3 : f32 to vector<256x128xf32>
    %4 = arith.maximumf %2, %3 : vector<256x128xf32>
    %5 = arith.truncf %4 : vector<256x128xf32> to vector<256x128xbf16>
    %c0_4 = arith.constant 0 : index
    %c0_5 = arith.constant 0 : index
    %6 = vector.load %arg3[%c0_4, %c0_5] : memref<256x128xbf16, #tpu.memory_space<vmem>>, vector<256x128xbf16>
    tpu.vector_store %arg3[%c0_4, %c0_5], %5 {strides = array<i32>} : memref<256x128xbf16, #tpu.memory_space<vmem>>, vector<256x128xbf16>,
    return
  }
  func.func @transform_0(%arg0: i32) -> (i32, i32) {
    %c0_i32 = arith.constant 0 : i32
    %c0_i32_0 = arith.constant 0 : i32
    return %arg0, %c0_i32 : i32, i32
  }
  func.func @transform_1(%arg0: i32) -> (i32, i32) {
    %c0_i32 = arith.constant 0 : i32
    %c0_i32_0 = arith.constant 0 : i32
    %c0_i32_1 = arith.constant 0 : i32
    return %c0_i32, %c0_i32_0 : i32, i32
  }
  func.func @transform_2(%arg0: i32) -> (i32, i32) {
    %c0_i32 = arith.constant 0 : i32
    %c0_i32_0 = arith.constant 0 : i32
    return %arg0, %c0_i32 : i32, i32
  }
}

module attributes {stable_mosaic.version = 11 : i64} {
  func.func @_dwise_kernel(%arg0: i32, %arg1: memref<1x256x128xbf16, #tpu.memory_space<vmem>>, %arg2: memref<9x1x128xf32, #tpu.memory_space<vmem>>, %arg3: memref<1x64x128xbf16, #tpu.memory_space<vmem>>, %arg4: memref<100x128xf32, #tpu.memory_space<vmem>>) attributes {dimension_semantics = [#tpu.dimension_semantics<parallel>], iteration_bounds = array<i64: 2>, scalar_prefetch = 0 : i64, scratch_operands = 1 : i64, tpu.core_type = #tpu.core_type<tc>, window_params = [{transform_indices = @transform_0, window_bounds = array<i64: 1, 256, 128>}, {pipeline_mode = #tpu.pipeline_mode<synchronous>, transform_indices = @transform_1, window_bounds = array<i64: 9, 1, 128>}, {transform_indices = @transform_2, window_bounds = array<i64: 1, 64, 128>}]} {
    %cst = arith.constant 0.000000e+00 : f32
    %0 = vector.broadcast %cst : f32 to vector<11x128xf32>
    %c0 = arith.constant 0 : index
    %c0_0 = arith.constant 0 : index
    %1 = vector.load %arg4[%c0, %c0_0] : memref<100x128xf32, #tpu.memory_space<vmem>>, vector<11x128xf32>
    tpu.vector_store %arg4[%c0, %c0_0], %0 {strides = array<i32>} : memref<100x128xf32, #tpu.memory_space<vmem>>, vector<11x128xf32>,
    %cst_1 = arith.constant 0.000000e+00 : f32
    %2 = vector.broadcast %cst_1 : f32 to vector<2x128xf32>
    %c19 = arith.constant 19 : index
    %c0_2 = arith.constant 0 : index
    %3 = vector.load %arg4[%c19, %c0_2] : memref<100x128xf32, #tpu.memory_space<vmem>>, vector<2x128xf32>
    tpu.vector_store %arg4[%c19, %c0_2], %2 {strides = array<i32>} : memref<100x128xf32, #tpu.memory_space<vmem>>, vector<2x128xf32>,
    %c29 = arith.constant 29 : index
    %c0_3 = arith.constant 0 : index
    %4 = vector.load %arg4[%c29, %c0_3] : memref<100x128xf32, #tpu.memory_space<vmem>>, vector<2x128xf32>
    tpu.vector_store %arg4[%c29, %c0_3], %2 {strides = array<i32>} : memref<100x128xf32, #tpu.memory_space<vmem>>, vector<2x128xf32>,
    %c39 = arith.constant 39 : index
    %c0_4 = arith.constant 0 : index
    %5 = vector.load %arg4[%c39, %c0_4] : memref<100x128xf32, #tpu.memory_space<vmem>>, vector<2x128xf32>
    tpu.vector_store %arg4[%c39, %c0_4], %2 {strides = array<i32>} : memref<100x128xf32, #tpu.memory_space<vmem>>, vector<2x128xf32>,
    %c49 = arith.constant 49 : index
    %c0_5 = arith.constant 0 : index
    %6 = vector.load %arg4[%c49, %c0_5] : memref<100x128xf32, #tpu.memory_space<vmem>>, vector<2x128xf32>
    tpu.vector_store %arg4[%c49, %c0_5], %2 {strides = array<i32>} : memref<100x128xf32, #tpu.memory_space<vmem>>, vector<2x128xf32>,
    %c59 = arith.constant 59 : index
    %c0_6 = arith.constant 0 : index
    %7 = vector.load %arg4[%c59, %c0_6] : memref<100x128xf32, #tpu.memory_space<vmem>>, vector<2x128xf32>
    tpu.vector_store %arg4[%c59, %c0_6], %2 {strides = array<i32>} : memref<100x128xf32, #tpu.memory_space<vmem>>, vector<2x128xf32>,
    %c69 = arith.constant 69 : index
    %c0_7 = arith.constant 0 : index
    %8 = vector.load %arg4[%c69, %c0_7] : memref<100x128xf32, #tpu.memory_space<vmem>>, vector<2x128xf32>
    tpu.vector_store %arg4[%c69, %c0_7], %2 {strides = array<i32>} : memref<100x128xf32, #tpu.memory_space<vmem>>, vector<2x128xf32>,
    %c79 = arith.constant 79 : index
    %c0_8 = arith.constant 0 : index
    %9 = vector.load %arg4[%c79, %c0_8] : memref<100x128xf32, #tpu.memory_space<vmem>>, vector<2x128xf32>
    tpu.vector_store %arg4[%c79, %c0_8], %2 {strides = array<i32>} : memref<100x128xf32, #tpu.memory_space<vmem>>, vector<2x128xf32>,
    %c89 = arith.constant 89 : index
    %c0_9 = arith.constant 0 : index
    %10 = vector.load %arg4[%c89, %c0_9] : memref<100x128xf32, #tpu.memory_space<vmem>>, vector<2x128xf32>
    tpu.vector_store %arg4[%c89, %c0_9], %2 {strides = array<i32>} : memref<100x128xf32, #tpu.memory_space<vmem>>, vector<2x128xf32>,
    %cst_10 = arith.constant 0.000000e+00 : f32
    %11 = vector.broadcast %cst_10 : f32 to vector<9x128xf32>
    %c91 = arith.constant 91 : index
    %c0_11 = arith.constant 0 : index
    %12 = vector.load %arg4[%c91, %c0_11] : memref<100x128xf32, #tpu.memory_space<vmem>>, vector<9x128xf32>
    tpu.vector_store %arg4[%c91, %c0_11], %11 {strides = array<i32>} : memref<100x128xf32, #tpu.memory_space<vmem>>, vector<9x128xf32>,
    %c0_12 = arith.constant 0 : index
    %c0_13 = arith.constant 0 : index
    %c0_14 = arith.constant 0 : index
    %13 = vector.load %arg1[%c0_12, %c0_13, %c0_14] : memref<1x256x128xbf16, #tpu.memory_space<vmem>>, vector<1x64x128xbf16>
    %14 = vector.shape_cast %13 : vector<1x64x128xbf16> to vector<64x128xbf16>
    %c0_15 = arith.constant 0 : index
    %c64 = arith.constant 64 : index
    %c0_16 = arith.constant 0 : index
    %15 = vector.load %arg1[%c0_15, %c64, %c0_16] : memref<1x256x128xbf16, #tpu.memory_space<vmem>>, vector<1x64x128xbf16>
    %16 = vector.shape_cast %15 : vector<1x64x128xbf16> to vector<64x128xbf16>
    %17 = arith.maximumf %14, %16 : vector<64x128xbf16>
    %c0_17 = arith.constant 0 : index
    %c128 = arith.constant 128 : index
    %c0_18 = arith.constant 0 : index
    %18 = vector.load %arg1[%c0_17, %c128, %c0_18] : memref<1x256x128xbf16, #tpu.memory_space<vmem>>, vector<1x64x128xbf16>
    %19 = vector.shape_cast %18 : vector<1x64x128xbf16> to vector<64x128xbf16>
    %c0_19 = arith.constant 0 : index
    %c192 = arith.constant 192 : index
    %c0_20 = arith.constant 0 : index
    %20 = vector.load %arg1[%c0_19, %c192, %c0_20] : memref<1x256x128xbf16, #tpu.memory_space<vmem>>, vector<1x64x128xbf16>
    %21 = vector.shape_cast %20 : vector<1x64x128xbf16> to vector<64x128xbf16>
    %22 = arith.maximumf %19, %21 : vector<64x128xbf16>
    %23 = arith.maximumf %17, %22 : vector<64x128xbf16>
    %24 = arith.extf %23 : vector<64x128xbf16> to vector<64x128xf32>
    %25 = vector.extract_strided_slice %24 {offsets = [0, 0], sizes = [8, 128], strides = [1, 1]} : vector<64x128xf32> to vector<8x128xf32>
    %c11 = arith.constant 11 : index
    %c0_21 = arith.constant 0 : index
    %26 = vector.load %arg4[%c11, %c0_21] : memref<100x128xf32, #tpu.memory_space<vmem>>, vector<8x128xf32>
    tpu.vector_store %arg4[%c11, %c0_21], %25 {strides = array<i32>} : memref<100x128xf32, #tpu.memory_space<vmem>>, vector<8x128xf32>,
    %27 = vector.extract_strided_slice %24 {offsets = [8, 0], sizes = [8, 128], strides = [1, 1]} : vector<64x128xf32> to vector<8x128xf32>
    %c21 = arith.constant 21 : index
    %c0_22 = arith.constant 0 : index
    %28 = vector.load %arg4[%c21, %c0_22] : memref<100x128xf32, #tpu.memory_space<vmem>>, vector<8x128xf32>
    tpu.vector_store %arg4[%c21, %c0_22], %27 {strides = array<i32>} : memref<100x128xf32, #tpu.memory_space<vmem>>, vector<8x128xf32>,
    %29 = vector.extract_strided_slice %24 {offsets = [16, 0], sizes = [8, 128], strides = [1, 1]} : vector<64x128xf32> to vector<8x128xf32>
    %c31 = arith.constant 31 : index
    %c0_23 = arith.constant 0 : index
    %30 = vector.load %arg4[%c31, %c0_23] : memref<100x128xf32, #tpu.memory_space<vmem>>, vector<8x128xf32>
    tpu.vector_store %arg4[%c31, %c0_23], %29 {strides = array<i32>} : memref<100x128xf32, #tpu.memory_space<vmem>>, vector<8x128xf32>,
    %31 = vector.extract_strided_slice %24 {offsets = [24, 0], sizes = [8, 128], strides = [1, 1]} : vector<64x128xf32> to vector<8x128xf32>
    %c41 = arith.constant 41 : index
    %c0_24 = arith.constant 0 : index
    %32 = vector.load %arg4[%c41, %c0_24] : memref<100x128xf32, #tpu.memory_space<vmem>>, vector<8x128xf32>
    tpu.vector_store %arg4[%c41, %c0_24], %31 {strides = array<i32>} : memref<100x128xf32, #tpu.memory_space<vmem>>, vector<8x128xf32>,
    %33 = vector.extract_strided_slice %24 {offsets = [32, 0], sizes = [8, 128], strides = [1, 1]} : vector<64x128xf32> to vector<8x128xf32>
    %c51 = arith.constant 51 : index
    %c0_25 = arith.constant 0 : index
    %34 = vector.load %arg4[%c51, %c0_25] : memref<100x128xf32, #tpu.memory_space<vmem>>, vector<8x128xf32>
    tpu.vector_store %arg4[%c51, %c0_25], %33 {strides = array<i32>} : memref<100x128xf32, #tpu.memory_space<vmem>>, vector<8x128xf32>,
    %35 = vector.extract_strided_slice %24 {offsets = [40, 0], sizes = [8, 128], strides = [1, 1]} : vector<64x128xf32> to vector<8x128xf32>
    %c61 = arith.constant 61 : index
    %c0_26 = arith.constant 0 : index
    %36 = vector.load %arg4[%c61, %c0_26] : memref<100x128xf32, #tpu.memory_space<vmem>>, vector<8x128xf32>
    tpu.vector_store %arg4[%c61, %c0_26], %35 {strides = array<i32>} : memref<100x128xf32, #tpu.memory_space<vmem>>, vector<8x128xf32>,
    %37 = vector.extract_strided_slice %24 {offsets = [48, 0], sizes = [8, 128], strides = [1, 1]} : vector<64x128xf32> to vector<8x128xf32>
    %c71 = arith.constant 71 : index
    %c0_27 = arith.constant 0 : index
    %38 = vector.load %arg4[%c71, %c0_27] : memref<100x128xf32, #tpu.memory_space<vmem>>, vector<8x128xf32>
    tpu.vector_store %arg4[%c71, %c0_27], %37 {strides = array<i32>} : memref<100x128xf32, #tpu.memory_space<vmem>>, vector<8x128xf32>,
    %39 = vector.extract_strided_slice %24 {offsets = [56, 0], sizes = [8, 128], strides = [1, 1]} : vector<64x128xf32> to vector<8x128xf32>
    %c81 = arith.constant 81 : index
    %c0_28 = arith.constant 0 : index
    %40 = vector.load %arg4[%c81, %c0_28] : memref<100x128xf32, #tpu.memory_space<vmem>>, vector<8x128xf32>
    tpu.vector_store %arg4[%c81, %c0_28], %39 {strides = array<i32>} : memref<100x128xf32, #tpu.memory_space<vmem>>, vector<8x128xf32>,
    %c0_29 = arith.constant 0 : index
    %c0_30 = arith.constant 0 : index
    %c0_31 = arith.constant 0 : index
    %41 = vector.load %arg2[%c0_29, %c0_30, %c0_31] : memref<9x1x128xf32, #tpu.memory_space<vmem>>, vector<1x1x128xf32>
    %42 = vector.shape_cast %41 : vector<1x1x128xf32> to vector<1x128xf32>
    %c1 = arith.constant 1 : index
    %c0_32 = arith.constant 0 : index
    %c0_33 = arith.constant 0 : index
    %43 = vector.load %arg2[%c1, %c0_32, %c0_33] : memref<9x1x128xf32, #tpu.memory_space<vmem>>, vector<1x1x128xf32>
    %44 = vector.shape_cast %43 : vector<1x1x128xf32> to vector<1x128xf32>
    %c2 = arith.constant 2 : index
    %c0_34 = arith.constant 0 : index
    %c0_35 = arith.constant 0 : index
    %45 = vector.load %arg2[%c2, %c0_34, %c0_35] : memref<9x1x128xf32, #tpu.memory_space<vmem>>, vector<1x1x128xf32>
    %46 = vector.shape_cast %45 : vector<1x1x128xf32> to vector<1x128xf32>
    %c3 = arith.constant 3 : index
    %c0_36 = arith.constant 0 : index
    %c0_37 = arith.constant 0 : index
    %47 = vector.load %arg2[%c3, %c0_36, %c0_37] : memref<9x1x128xf32, #tpu.memory_space<vmem>>, vector<1x1x128xf32>
    %48 = vector.shape_cast %47 : vector<1x1x128xf32> to vector<1x128xf32>
    %c4 = arith.constant 4 : index
    %c0_38 = arith.constant 0 : index
    %c0_39 = arith.constant 0 : index
    %49 = vector.load %arg2[%c4, %c0_38, %c0_39] : memref<9x1x128xf32, #tpu.memory_space<vmem>>, vector<1x1x128xf32>
    %50 = vector.shape_cast %49 : vector<1x1x128xf32> to vector<1x128xf32>
    %c5 = arith.constant 5 : index
    %c0_40 = arith.constant 0 : index
    %c0_41 = arith.constant 0 : index
    %51 = vector.load %arg2[%c5, %c0_40, %c0_41] : memref<9x1x128xf32, #tpu.memory_space<vmem>>, vector<1x1x128xf32>
    %52 = vector.shape_cast %51 : vector<1x1x128xf32> to vector<1x128xf32>
    %c6 = arith.constant 6 : index
    %c0_42 = arith.constant 0 : index
    %c0_43 = arith.constant 0 : index
    %53 = vector.load %arg2[%c6, %c0_42, %c0_43] : memref<9x1x128xf32, #tpu.memory_space<vmem>>, vector<1x1x128xf32>
    %54 = vector.shape_cast %53 : vector<1x1x128xf32> to vector<1x128xf32>
    %c7 = arith.constant 7 : index
    %c0_44 = arith.constant 0 : index
    %c0_45 = arith.constant 0 : index
    %55 = vector.load %arg2[%c7, %c0_44, %c0_45] : memref<9x1x128xf32, #tpu.memory_space<vmem>>, vector<1x1x128xf32>
    %56 = vector.shape_cast %55 : vector<1x1x128xf32> to vector<1x128xf32>
    %c8 = arith.constant 8 : index
    %c0_46 = arith.constant 0 : index
    %c0_47 = arith.constant 0 : index
    %57 = vector.load %arg2[%c8, %c0_46, %c0_47] : memref<9x1x128xf32, #tpu.memory_space<vmem>>, vector<1x1x128xf32>
    %58 = vector.shape_cast %57 : vector<1x1x128xf32> to vector<1x128xf32>
    %c0_48 = arith.constant 0 : index
    %c0_49 = arith.constant 0 : index
    %59 = vector.load %arg4[%c0_48, %c0_49] : memref<100x128xf32, #tpu.memory_space<vmem>>, vector<78x128xf32>
    %60 = vector.broadcast %42 : vector<1x128xf32> to vector<78x128xf32>
    %61 = arith.mulf %59, %60 : vector<78x128xf32>
    %c1_50 = arith.constant 1 : index
    %c0_51 = arith.constant 0 : index
    %62 = vector.load %arg4[%c1_50, %c0_51] : memref<100x128xf32, #tpu.memory_space<vmem>>, vector<78x128xf32>
    %63 = vector.broadcast %44 : vector<1x128xf32> to vector<78x128xf32>
    %64 = arith.mulf %62, %63 : vector<78x128xf32>
    %65 = arith.addf %61, %64 : vector<78x128xf32>
    %c2_52 = arith.constant 2 : index
    %c0_53 = arith.constant 0 : index
    %66 = vector.load %arg4[%c2_52, %c0_53] : memref<100x128xf32, #tpu.memory_space<vmem>>, vector<78x128xf32>
    %67 = vector.broadcast %46 : vector<1x128xf32> to vector<78x128xf32>
    %68 = arith.mulf %66, %67 : vector<78x128xf32>
    %69 = arith.addf %65, %68 : vector<78x128xf32>
    %c10 = arith.constant 10 : index
    %c0_54 = arith.constant 0 : index
    %70 = vector.load %arg4[%c10, %c0_54] : memref<100x128xf32, #tpu.memory_space<vmem>>, vector<78x128xf32>
    %71 = vector.broadcast %48 : vector<1x128xf32> to vector<78x128xf32>
    %72 = arith.mulf %70, %71 : vector<78x128xf32>
    %73 = arith.addf %69, %72 : vector<78x128xf32>
    %c11_55 = arith.constant 11 : index
    %c0_56 = arith.constant 0 : index
    %74 = vector.load %arg4[%c11_55, %c0_56] : memref<100x128xf32, #tpu.memory_space<vmem>>, vector<78x128xf32>
    %75 = vector.broadcast %50 : vector<1x128xf32> to vector<78x128xf32>
    %76 = arith.mulf %74, %75 : vector<78x128xf32>
    %77 = arith.addf %73, %76 : vector<78x128xf32>
    %c12 = arith.constant 12 : index
    %c0_57 = arith.constant 0 : index
    %78 = vector.load %arg4[%c12, %c0_57] : memref<100x128xf32, #tpu.memory_space<vmem>>, vector<78x128xf32>
    %79 = vector.broadcast %52 : vector<1x128xf32> to vector<78x128xf32>
    %80 = arith.mulf %78, %79 : vector<78x128xf32>
    %81 = arith.addf %77, %80 : vector<78x128xf32>
    %c20 = arith.constant 20 : index
    %c0_58 = arith.constant 0 : index
    %82 = vector.load %arg4[%c20, %c0_58] : memref<100x128xf32, #tpu.memory_space<vmem>>, vector<78x128xf32>
    %83 = vector.broadcast %54 : vector<1x128xf32> to vector<78x128xf32>
    %84 = arith.mulf %82, %83 : vector<78x128xf32>
    %85 = arith.addf %81, %84 : vector<78x128xf32>
    %c21_59 = arith.constant 21 : index
    %c0_60 = arith.constant 0 : index
    %86 = vector.load %arg4[%c21_59, %c0_60] : memref<100x128xf32, #tpu.memory_space<vmem>>, vector<78x128xf32>
    %87 = vector.broadcast %56 : vector<1x128xf32> to vector<78x128xf32>
    %88 = arith.mulf %86, %87 : vector<78x128xf32>
    %89 = arith.addf %85, %88 : vector<78x128xf32>
    %c22 = arith.constant 22 : index
    %c0_61 = arith.constant 0 : index
    %90 = vector.load %arg4[%c22, %c0_61] : memref<100x128xf32, #tpu.memory_space<vmem>>, vector<78x128xf32>
    %91 = vector.broadcast %58 : vector<1x128xf32> to vector<78x128xf32>
    %92 = arith.mulf %90, %91 : vector<78x128xf32>
    %93 = arith.addf %89, %92 : vector<78x128xf32>
    %cst_62 = arith.constant 0.000000e+00 : f32
    %94 = vector.broadcast %cst_62 : f32 to vector<78x128xf32>
    %95 = arith.maximumf %93, %94 : vector<78x128xf32>
    %96 = vector.extract_strided_slice %95 {offsets = [0, 0], sizes = [8, 128], strides = [1, 1]} : vector<78x128xf32> to vector<8x128xf32>
    %97 = arith.truncf %96 : vector<8x128xf32> to vector<8x128xbf16>
    %c0_63 = arith.constant 0 : index
    %c0_64 = arith.constant 0 : index
    %c0_65 = arith.constant 0 : index
    %98 = vector.load %arg3[%c0_63, %c0_64, %c0_65] : memref<1x64x128xbf16, #tpu.memory_space<vmem>>, vector<1x8x128xbf16>
    %99 = vector.shape_cast %98 : vector<1x8x128xbf16> to vector<8x128xbf16>
    %100 = vector.shape_cast %97 : vector<8x128xbf16> to vector<1x8x128xbf16>
    tpu.vector_store %arg3[%c0_63, %c0_64, %c0_65], %100 {strides = array<i32>} : memref<1x64x128xbf16, #tpu.memory_space<vmem>>, vector<1x8x128xbf16>,
    %101 = vector.extract_strided_slice %95 {offsets = [10, 0], sizes = [8, 128], strides = [1, 1]} : vector<78x128xf32> to vector<8x128xf32>
    %102 = arith.truncf %101 : vector<8x128xf32> to vector<8x128xbf16>
    %c0_66 = arith.constant 0 : index
    %c8_67 = arith.constant 8 : index
    %c0_68 = arith.constant 0 : index
    %103 = vector.load %arg3[%c0_66, %c8_67, %c0_68] : memref<1x64x128xbf16, #tpu.memory_space<vmem>>, vector<1x8x128xbf16>
    %104 = vector.shape_cast %103 : vector<1x8x128xbf16> to vector<8x128xbf16>
    %105 = vector.shape_cast %102 : vector<8x128xbf16> to vector<1x8x128xbf16>
    tpu.vector_store %arg3[%c0_66, %c8_67, %c0_68], %105 {strides = array<i32>} : memref<1x64x128xbf16, #tpu.memory_space<vmem>>, vector<1x8x128xbf16>,
    %106 = vector.extract_strided_slice %95 {offsets = [20, 0], sizes = [8, 128], strides = [1, 1]} : vector<78x128xf32> to vector<8x128xf32>
    %107 = arith.truncf %106 : vector<8x128xf32> to vector<8x128xbf16>
    %c0_69 = arith.constant 0 : index
    %c16 = arith.constant 16 : index
    %c0_70 = arith.constant 0 : index
    %108 = vector.load %arg3[%c0_69, %c16, %c0_70] : memref<1x64x128xbf16, #tpu.memory_space<vmem>>, vector<1x8x128xbf16>
    %109 = vector.shape_cast %108 : vector<1x8x128xbf16> to vector<8x128xbf16>
    %110 = vector.shape_cast %107 : vector<8x128xbf16> to vector<1x8x128xbf16>
    tpu.vector_store %arg3[%c0_69, %c16, %c0_70], %110 {strides = array<i32>} : memref<1x64x128xbf16, #tpu.memory_space<vmem>>, vector<1x8x128xbf16>,
    %111 = vector.extract_strided_slice %95 {offsets = [30, 0], sizes = [8, 128], strides = [1, 1]} : vector<78x128xf32> to vector<8x128xf32>
    %112 = arith.truncf %111 : vector<8x128xf32> to vector<8x128xbf16>
    %c0_71 = arith.constant 0 : index
    %c24 = arith.constant 24 : index
    %c0_72 = arith.constant 0 : index
    %113 = vector.load %arg3[%c0_71, %c24, %c0_72] : memref<1x64x128xbf16, #tpu.memory_space<vmem>>, vector<1x8x128xbf16>
    %114 = vector.shape_cast %113 : vector<1x8x128xbf16> to vector<8x128xbf16>
    %115 = vector.shape_cast %112 : vector<8x128xbf16> to vector<1x8x128xbf16>
    tpu.vector_store %arg3[%c0_71, %c24, %c0_72], %115 {strides = array<i32>} : memref<1x64x128xbf16, #tpu.memory_space<vmem>>, vector<1x8x128xbf16>,
    %116 = vector.extract_strided_slice %95 {offsets = [40, 0], sizes = [8, 128], strides = [1, 1]} : vector<78x128xf32> to vector<8x128xf32>
    %117 = arith.truncf %116 : vector<8x128xf32> to vector<8x128xbf16>
    %c0_73 = arith.constant 0 : index
    %c32 = arith.constant 32 : index
    %c0_74 = arith.constant 0 : index
    %118 = vector.load %arg3[%c0_73, %c32, %c0_74] : memref<1x64x128xbf16, #tpu.memory_space<vmem>>, vector<1x8x128xbf16>
    %119 = vector.shape_cast %118 : vector<1x8x128xbf16> to vector<8x128xbf16>
    %120 = vector.shape_cast %117 : vector<8x128xbf16> to vector<1x8x128xbf16>
    tpu.vector_store %arg3[%c0_73, %c32, %c0_74], %120 {strides = array<i32>} : memref<1x64x128xbf16, #tpu.memory_space<vmem>>, vector<1x8x128xbf16>,
    %121 = vector.extract_strided_slice %95 {offsets = [50, 0], sizes = [8, 128], strides = [1, 1]} : vector<78x128xf32> to vector<8x128xf32>
    %122 = arith.truncf %121 : vector<8x128xf32> to vector<8x128xbf16>
    %c0_75 = arith.constant 0 : index
    %c40 = arith.constant 40 : index
    %c0_76 = arith.constant 0 : index
    %123 = vector.load %arg3[%c0_75, %c40, %c0_76] : memref<1x64x128xbf16, #tpu.memory_space<vmem>>, vector<1x8x128xbf16>
    %124 = vector.shape_cast %123 : vector<1x8x128xbf16> to vector<8x128xbf16>
    %125 = vector.shape_cast %122 : vector<8x128xbf16> to vector<1x8x128xbf16>
    tpu.vector_store %arg3[%c0_75, %c40, %c0_76], %125 {strides = array<i32>} : memref<1x64x128xbf16, #tpu.memory_space<vmem>>, vector<1x8x128xbf16>,
    %126 = vector.extract_strided_slice %95 {offsets = [60, 0], sizes = [8, 128], strides = [1, 1]} : vector<78x128xf32> to vector<8x128xf32>
    %127 = arith.truncf %126 : vector<8x128xf32> to vector<8x128xbf16>
    %c0_77 = arith.constant 0 : index
    %c48 = arith.constant 48 : index
    %c0_78 = arith.constant 0 : index
    %128 = vector.load %arg3[%c0_77, %c48, %c0_78] : memref<1x64x128xbf16, #tpu.memory_space<vmem>>, vector<1x8x128xbf16>
    %129 = vector.shape_cast %128 : vector<1x8x128xbf16> to vector<8x128xbf16>
    %130 = vector.shape_cast %127 : vector<8x128xbf16> to vector<1x8x128xbf16>
    tpu.vector_store %arg3[%c0_77, %c48, %c0_78], %130 {strides = array<i32>} : memref<1x64x128xbf16, #tpu.memory_space<vmem>>, vector<1x8x128xbf16>,
    %131 = vector.extract_strided_slice %95 {offsets = [70, 0], sizes = [8, 128], strides = [1, 1]} : vector<78x128xf32> to vector<8x128xf32>
    %132 = arith.truncf %131 : vector<8x128xf32> to vector<8x128xbf16>
    %c0_79 = arith.constant 0 : index
    %c56 = arith.constant 56 : index
    %c0_80 = arith.constant 0 : index
    %133 = vector.load %arg3[%c0_79, %c56, %c0_80] : memref<1x64x128xbf16, #tpu.memory_space<vmem>>, vector<1x8x128xbf16>
    %134 = vector.shape_cast %133 : vector<1x8x128xbf16> to vector<8x128xbf16>
    %135 = vector.shape_cast %132 : vector<8x128xbf16> to vector<1x8x128xbf16>
    tpu.vector_store %arg3[%c0_79, %c56, %c0_80], %135 {strides = array<i32>} : memref<1x64x128xbf16, #tpu.memory_space<vmem>>, vector<1x8x128xbf16>,
    return
  }
  func.func @transform_0(%arg0: i32) -> (i32, i32, i32) {
    %c0_i32 = arith.constant 0 : i32
    %c0_i32_0 = arith.constant 0 : i32
    %c0_i32_1 = arith.constant 0 : i32
    return %arg0, %c0_i32, %c0_i32_0 : i32, i32, i32
  }
  func.func @transform_1(%arg0: i32) -> (i32, i32, i32) {
    %c0_i32 = arith.constant 0 : i32
    %c0_i32_0 = arith.constant 0 : i32
    %c0_i32_1 = arith.constant 0 : i32
    %c0_i32_2 = arith.constant 0 : i32
    return %c0_i32, %c0_i32_0, %c0_i32_1 : i32, i32, i32
  }
  func.func @transform_2(%arg0: i32) -> (i32, i32, i32) {
    %c0_i32 = arith.constant 0 : i32
    %c0_i32_0 = arith.constant 0 : i32
    %c0_i32_1 = arith.constant 0 : i32
    return %arg0, %c0_i32, %c0_i32_0 : i32, i32, i32
  }
}

module attributes {stable_mosaic.version = 11 : i64} {
  func.func @_bottleneck_kernel(%arg0: i32, %arg1: memref<1x64x128xbf16, #tpu.memory_space<vmem>>, %arg2: memref<9x1x128xf32, #tpu.memory_space<vmem>>, %arg3: memref<128x128xbf16, #tpu.memory_space<vmem>>, %arg4: memref<1x64x128xbf16, #tpu.memory_space<vmem>>, %arg5: memref<100x128xf32, #tpu.memory_space<vmem>>) attributes {dimension_semantics = [#tpu.dimension_semantics<parallel>], iteration_bounds = array<i64: 2>, scalar_prefetch = 0 : i64, scratch_operands = 1 : i64, tpu.core_type = #tpu.core_type<tc>, window_params = [{transform_indices = @transform_0, window_bounds = array<i64: 1, 64, 128>}, {pipeline_mode = #tpu.pipeline_mode<synchronous>, transform_indices = @transform_1, window_bounds = array<i64: 9, 1, 128>}, {pipeline_mode = #tpu.pipeline_mode<synchronous>, transform_indices = @transform_2, window_bounds = array<i64: 128, 128>}, {transform_indices = @transform_3, window_bounds = array<i64: 1, 64, 128>}]} {
    %cst = arith.constant 0.000000e+00 : f32
    %0 = vector.broadcast %cst : f32 to vector<11x128xf32>
    %c0 = arith.constant 0 : index
    %c0_0 = arith.constant 0 : index
    %1 = vector.load %arg5[%c0, %c0_0] : memref<100x128xf32, #tpu.memory_space<vmem>>, vector<11x128xf32>
    tpu.vector_store %arg5[%c0, %c0_0], %0 {strides = array<i32>} : memref<100x128xf32, #tpu.memory_space<vmem>>, vector<11x128xf32>,
    %cst_1 = arith.constant 0.000000e+00 : f32
    %2 = vector.broadcast %cst_1 : f32 to vector<2x128xf32>
    %c19 = arith.constant 19 : index
    %c0_2 = arith.constant 0 : index
    %3 = vector.load %arg5[%c19, %c0_2] : memref<100x128xf32, #tpu.memory_space<vmem>>, vector<2x128xf32>
    tpu.vector_store %arg5[%c19, %c0_2], %2 {strides = array<i32>} : memref<100x128xf32, #tpu.memory_space<vmem>>, vector<2x128xf32>,
    %c29 = arith.constant 29 : index
    %c0_3 = arith.constant 0 : index
    %4 = vector.load %arg5[%c29, %c0_3] : memref<100x128xf32, #tpu.memory_space<vmem>>, vector<2x128xf32>
    tpu.vector_store %arg5[%c29, %c0_3], %2 {strides = array<i32>} : memref<100x128xf32, #tpu.memory_space<vmem>>, vector<2x128xf32>,
    %c39 = arith.constant 39 : index
    %c0_4 = arith.constant 0 : index
    %5 = vector.load %arg5[%c39, %c0_4] : memref<100x128xf32, #tpu.memory_space<vmem>>, vector<2x128xf32>
    tpu.vector_store %arg5[%c39, %c0_4], %2 {strides = array<i32>} : memref<100x128xf32, #tpu.memory_space<vmem>>, vector<2x128xf32>,
    %c49 = arith.constant 49 : index
    %c0_5 = arith.constant 0 : index
    %6 = vector.load %arg5[%c49, %c0_5] : memref<100x128xf32, #tpu.memory_space<vmem>>, vector<2x128xf32>
    tpu.vector_store %arg5[%c49, %c0_5], %2 {strides = array<i32>} : memref<100x128xf32, #tpu.memory_space<vmem>>, vector<2x128xf32>,
    %c59 = arith.constant 59 : index
    %c0_6 = arith.constant 0 : index
    %7 = vector.load %arg5[%c59, %c0_6] : memref<100x128xf32, #tpu.memory_space<vmem>>, vector<2x128xf32>
    tpu.vector_store %arg5[%c59, %c0_6], %2 {strides = array<i32>} : memref<100x128xf32, #tpu.memory_space<vmem>>, vector<2x128xf32>,
    %c69 = arith.constant 69 : index
    %c0_7 = arith.constant 0 : index
    %8 = vector.load %arg5[%c69, %c0_7] : memref<100x128xf32, #tpu.memory_space<vmem>>, vector<2x128xf32>
    tpu.vector_store %arg5[%c69, %c0_7], %2 {strides = array<i32>} : memref<100x128xf32, #tpu.memory_space<vmem>>, vector<2x128xf32>,
    %c79 = arith.constant 79 : index
    %c0_8 = arith.constant 0 : index
    %9 = vector.load %arg5[%c79, %c0_8] : memref<100x128xf32, #tpu.memory_space<vmem>>, vector<2x128xf32>
    tpu.vector_store %arg5[%c79, %c0_8], %2 {strides = array<i32>} : memref<100x128xf32, #tpu.memory_space<vmem>>, vector<2x128xf32>,
    %c89 = arith.constant 89 : index
    %c0_9 = arith.constant 0 : index
    %10 = vector.load %arg5[%c89, %c0_9] : memref<100x128xf32, #tpu.memory_space<vmem>>, vector<2x128xf32>
    tpu.vector_store %arg5[%c89, %c0_9], %2 {strides = array<i32>} : memref<100x128xf32, #tpu.memory_space<vmem>>, vector<2x128xf32>,
    %cst_10 = arith.constant 0.000000e+00 : f32
    %11 = vector.broadcast %cst_10 : f32 to vector<9x128xf32>
    %c91 = arith.constant 91 : index
    %c0_11 = arith.constant 0 : index
    %12 = vector.load %arg5[%c91, %c0_11] : memref<100x128xf32, #tpu.memory_space<vmem>>, vector<9x128xf32>
    tpu.vector_store %arg5[%c91, %c0_11], %11 {strides = array<i32>} : memref<100x128xf32, #tpu.memory_space<vmem>>, vector<9x128xf32>,
    %c0_12 = arith.constant 0 : index
    %c0_13 = arith.constant 0 : index
    %c0_14 = arith.constant 0 : index
    %13 = vector.load %arg1[%c0_12, %c0_13, %c0_14] : memref<1x64x128xbf16, #tpu.memory_space<vmem>>, vector<1x64x128xbf16>
    %14 = vector.shape_cast %13 : vector<1x64x128xbf16> to vector<64x128xbf16>
    %15 = arith.extf %14 : vector<64x128xbf16> to vector<64x128xf32>
    %16 = vector.extract_strided_slice %15 {offsets = [0, 0], sizes = [8, 128], strides = [1, 1]} : vector<64x128xf32> to vector<8x128xf32>
    %c11 = arith.constant 11 : index
    %c0_15 = arith.constant 0 : index
    %17 = vector.load %arg5[%c11, %c0_15] : memref<100x128xf32, #tpu.memory_space<vmem>>, vector<8x128xf32>
    tpu.vector_store %arg5[%c11, %c0_15], %16 {strides = array<i32>} : memref<100x128xf32, #tpu.memory_space<vmem>>, vector<8x128xf32>,
    %18 = vector.extract_strided_slice %15 {offsets = [8, 0], sizes = [8, 128], strides = [1, 1]} : vector<64x128xf32> to vector<8x128xf32>
    %c21 = arith.constant 21 : index
    %c0_16 = arith.constant 0 : index
    %19 = vector.load %arg5[%c21, %c0_16] : memref<100x128xf32, #tpu.memory_space<vmem>>, vector<8x128xf32>
    tpu.vector_store %arg5[%c21, %c0_16], %18 {strides = array<i32>} : memref<100x128xf32, #tpu.memory_space<vmem>>, vector<8x128xf32>,
    %20 = vector.extract_strided_slice %15 {offsets = [16, 0], sizes = [8, 128], strides = [1, 1]} : vector<64x128xf32> to vector<8x128xf32>
    %c31 = arith.constant 31 : index
    %c0_17 = arith.constant 0 : index
    %21 = vector.load %arg5[%c31, %c0_17] : memref<100x128xf32, #tpu.memory_space<vmem>>, vector<8x128xf32>
    tpu.vector_store %arg5[%c31, %c0_17], %20 {strides = array<i32>} : memref<100x128xf32, #tpu.memory_space<vmem>>, vector<8x128xf32>,
    %22 = vector.extract_strided_slice %15 {offsets = [24, 0], sizes = [8, 128], strides = [1, 1]} : vector<64x128xf32> to vector<8x128xf32>
    %c41 = arith.constant 41 : index
    %c0_18 = arith.constant 0 : index
    %23 = vector.load %arg5[%c41, %c0_18] : memref<100x128xf32, #tpu.memory_space<vmem>>, vector<8x128xf32>
    tpu.vector_store %arg5[%c41, %c0_18], %22 {strides = array<i32>} : memref<100x128xf32, #tpu.memory_space<vmem>>, vector<8x128xf32>,
    %24 = vector.extract_strided_slice %15 {offsets = [32, 0], sizes = [8, 128], strides = [1, 1]} : vector<64x128xf32> to vector<8x128xf32>
    %c51 = arith.constant 51 : index
    %c0_19 = arith.constant 0 : index
    %25 = vector.load %arg5[%c51, %c0_19] : memref<100x128xf32, #tpu.memory_space<vmem>>, vector<8x128xf32>
    tpu.vector_store %arg5[%c51, %c0_19], %24 {strides = array<i32>} : memref<100x128xf32, #tpu.memory_space<vmem>>, vector<8x128xf32>,
    %26 = vector.extract_strided_slice %15 {offsets = [40, 0], sizes = [8, 128], strides = [1, 1]} : vector<64x128xf32> to vector<8x128xf32>
    %c61 = arith.constant 61 : index
    %c0_20 = arith.constant 0 : index
    %27 = vector.load %arg5[%c61, %c0_20] : memref<100x128xf32, #tpu.memory_space<vmem>>, vector<8x128xf32>
    tpu.vector_store %arg5[%c61, %c0_20], %26 {strides = array<i32>} : memref<100x128xf32, #tpu.memory_space<vmem>>, vector<8x128xf32>,
    %28 = vector.extract_strided_slice %15 {offsets = [48, 0], sizes = [8, 128], strides = [1, 1]} : vector<64x128xf32> to vector<8x128xf32>
    %c71 = arith.constant 71 : index
    %c0_21 = arith.constant 0 : index
    %29 = vector.load %arg5[%c71, %c0_21] : memref<100x128xf32, #tpu.memory_space<vmem>>, vector<8x128xf32>
    tpu.vector_store %arg5[%c71, %c0_21], %28 {strides = array<i32>} : memref<100x128xf32, #tpu.memory_space<vmem>>, vector<8x128xf32>,
    %30 = vector.extract_strided_slice %15 {offsets = [56, 0], sizes = [8, 128], strides = [1, 1]} : vector<64x128xf32> to vector<8x128xf32>
    %c81 = arith.constant 81 : index
    %c0_22 = arith.constant 0 : index
    %31 = vector.load %arg5[%c81, %c0_22] : memref<100x128xf32, #tpu.memory_space<vmem>>, vector<8x128xf32>
    tpu.vector_store %arg5[%c81, %c0_22], %30 {strides = array<i32>} : memref<100x128xf32, #tpu.memory_space<vmem>>, vector<8x128xf32>,
    %c0_23 = arith.constant 0 : index
    %c0_24 = arith.constant 0 : index
    %c0_25 = arith.constant 0 : index
    %32 = vector.load %arg2[%c0_23, %c0_24, %c0_25] : memref<9x1x128xf32, #tpu.memory_space<vmem>>, vector<1x1x128xf32>
    %33 = vector.shape_cast %32 : vector<1x1x128xf32> to vector<1x128xf32>
    %c1 = arith.constant 1 : index
    %c0_26 = arith.constant 0 : index
    %c0_27 = arith.constant 0 : index
    %34 = vector.load %arg2[%c1, %c0_26, %c0_27] : memref<9x1x128xf32, #tpu.memory_space<vmem>>, vector<1x1x128xf32>
    %35 = vector.shape_cast %34 : vector<1x1x128xf32> to vector<1x128xf32>
    %c2 = arith.constant 2 : index
    %c0_28 = arith.constant 0 : index
    %c0_29 = arith.constant 0 : index
    %36 = vector.load %arg2[%c2, %c0_28, %c0_29] : memref<9x1x128xf32, #tpu.memory_space<vmem>>, vector<1x1x128xf32>
    %37 = vector.shape_cast %36 : vector<1x1x128xf32> to vector<1x128xf32>
    %c3 = arith.constant 3 : index
    %c0_30 = arith.constant 0 : index
    %c0_31 = arith.constant 0 : index
    %38 = vector.load %arg2[%c3, %c0_30, %c0_31] : memref<9x1x128xf32, #tpu.memory_space<vmem>>, vector<1x1x128xf32>
    %39 = vector.shape_cast %38 : vector<1x1x128xf32> to vector<1x128xf32>
    %c4 = arith.constant 4 : index
    %c0_32 = arith.constant 0 : index
    %c0_33 = arith.constant 0 : index
    %40 = vector.load %arg2[%c4, %c0_32, %c0_33] : memref<9x1x128xf32, #tpu.memory_space<vmem>>, vector<1x1x128xf32>
    %41 = vector.shape_cast %40 : vector<1x1x128xf32> to vector<1x128xf32>
    %c5 = arith.constant 5 : index
    %c0_34 = arith.constant 0 : index
    %c0_35 = arith.constant 0 : index
    %42 = vector.load %arg2[%c5, %c0_34, %c0_35] : memref<9x1x128xf32, #tpu.memory_space<vmem>>, vector<1x1x128xf32>
    %43 = vector.shape_cast %42 : vector<1x1x128xf32> to vector<1x128xf32>
    %c6 = arith.constant 6 : index
    %c0_36 = arith.constant 0 : index
    %c0_37 = arith.constant 0 : index
    %44 = vector.load %arg2[%c6, %c0_36, %c0_37] : memref<9x1x128xf32, #tpu.memory_space<vmem>>, vector<1x1x128xf32>
    %45 = vector.shape_cast %44 : vector<1x1x128xf32> to vector<1x128xf32>
    %c7 = arith.constant 7 : index
    %c0_38 = arith.constant 0 : index
    %c0_39 = arith.constant 0 : index
    %46 = vector.load %arg2[%c7, %c0_38, %c0_39] : memref<9x1x128xf32, #tpu.memory_space<vmem>>, vector<1x1x128xf32>
    %47 = vector.shape_cast %46 : vector<1x1x128xf32> to vector<1x128xf32>
    %c8 = arith.constant 8 : index
    %c0_40 = arith.constant 0 : index
    %c0_41 = arith.constant 0 : index
    %48 = vector.load %arg2[%c8, %c0_40, %c0_41] : memref<9x1x128xf32, #tpu.memory_space<vmem>>, vector<1x1x128xf32>
    %49 = vector.shape_cast %48 : vector<1x1x128xf32> to vector<1x128xf32>
    %c0_42 = arith.constant 0 : index
    %c0_43 = arith.constant 0 : index
    %50 = vector.load %arg5[%c0_42, %c0_43] : memref<100x128xf32, #tpu.memory_space<vmem>>, vector<78x128xf32>
    %51 = vector.broadcast %33 : vector<1x128xf32> to vector<78x128xf32>
    %52 = arith.mulf %50, %51 : vector<78x128xf32>
    %c1_44 = arith.constant 1 : index
    %c0_45 = arith.constant 0 : index
    %53 = vector.load %arg5[%c1_44, %c0_45] : memref<100x128xf32, #tpu.memory_space<vmem>>, vector<78x128xf32>
    %54 = vector.broadcast %35 : vector<1x128xf32> to vector<78x128xf32>
    %55 = arith.mulf %53, %54 : vector<78x128xf32>
    %56 = arith.addf %52, %55 : vector<78x128xf32>
    %c2_46 = arith.constant 2 : index
    %c0_47 = arith.constant 0 : index
    %57 = vector.load %arg5[%c2_46, %c0_47] : memref<100x128xf32, #tpu.memory_space<vmem>>, vector<78x128xf32>
    %58 = vector.broadcast %37 : vector<1x128xf32> to vector<78x128xf32>
    %59 = arith.mulf %57, %58 : vector<78x128xf32>
    %60 = arith.addf %56, %59 : vector<78x128xf32>
    %c10 = arith.constant 10 : index
    %c0_48 = arith.constant 0 : index
    %61 = vector.load %arg5[%c10, %c0_48] : memref<100x128xf32, #tpu.memory_space<vmem>>, vector<78x128xf32>
    %62 = vector.broadcast %39 : vector<1x128xf32> to vector<78x128xf32>
    %63 = arith.mulf %61, %62 : vector<78x128xf32>
    %64 = arith.addf %60, %63 : vector<78x128xf32>
    %c11_49 = arith.constant 11 : index
    %c0_50 = arith.constant 0 : index
    %65 = vector.load %arg5[%c11_49, %c0_50] : memref<100x128xf32, #tpu.memory_space<vmem>>, vector<78x128xf32>
    %66 = vector.broadcast %41 : vector<1x128xf32> to vector<78x128xf32>
    %67 = arith.mulf %65, %66 : vector<78x128xf32>
    %68 = arith.addf %64, %67 : vector<78x128xf32>
    %c12 = arith.constant 12 : index
    %c0_51 = arith.constant 0 : index
    %69 = vector.load %arg5[%c12, %c0_51] : memref<100x128xf32, #tpu.memory_space<vmem>>, vector<78x128xf32>
    %70 = vector.broadcast %43 : vector<1x128xf32> to vector<78x128xf32>
    %71 = arith.mulf %69, %70 : vector<78x128xf32>
    %72 = arith.addf %68, %71 : vector<78x128xf32>
    %c20 = arith.constant 20 : index
    %c0_52 = arith.constant 0 : index
    %73 = vector.load %arg5[%c20, %c0_52] : memref<100x128xf32, #tpu.memory_space<vmem>>, vector<78x128xf32>
    %74 = vector.broadcast %45 : vector<1x128xf32> to vector<78x128xf32>
    %75 = arith.mulf %73, %74 : vector<78x128xf32>
    %76 = arith.addf %72, %75 : vector<78x128xf32>
    %c21_53 = arith.constant 21 : index
    %c0_54 = arith.constant 0 : index
    %77 = vector.load %arg5[%c21_53, %c0_54] : memref<100x128xf32, #tpu.memory_space<vmem>>, vector<78x128xf32>
    %78 = vector.broadcast %47 : vector<1x128xf32> to vector<78x128xf32>
    %79 = arith.mulf %77, %78 : vector<78x128xf32>
    %80 = arith.addf %76, %79 : vector<78x128xf32>
    %c22 = arith.constant 22 : index
    %c0_55 = arith.constant 0 : index
    %81 = vector.load %arg5[%c22, %c0_55] : memref<100x128xf32, #tpu.memory_space<vmem>>, vector<78x128xf32>
    %82 = vector.broadcast %49 : vector<1x128xf32> to vector<78x128xf32>
    %83 = arith.mulf %81, %82 : vector<78x128xf32>
    %84 = arith.addf %80, %83 : vector<78x128xf32>
    %cst_56 = arith.constant 0.000000e+00 : f32
    %85 = vector.broadcast %cst_56 : f32 to vector<78x128xf32>
    %86 = arith.maximumf %84, %85 : vector<78x128xf32>
    %87 = arith.truncf %86 : vector<78x128xf32> to vector<78x128xbf16>
    %c0_57 = arith.constant 0 : index
    %c0_58 = arith.constant 0 : index
    %88 = vector.load %arg3[%c0_57, %c0_58] : memref<128x128xbf16, #tpu.memory_space<vmem>>, vector<128x128xbf16>
    %cst_59 = arith.constant dense<0.000000e+00> : vector<78x128xf32>
    %89 = tpu.matmul %87, %88, %cst_59 {dimension_numbers = #tpu.dot_dimension_numbers<[1], [0], [0], [1], [0, 0, 1, 1], [], []>} : vector<78x128xbf16>, vector<128x128xbf16>, vector<78x128xf32> -> vector<78x128xf32>
    %90 = vector.extract_strided_slice %89 {offsets = [0, 0], sizes = [8, 128], strides = [1, 1]} : vector<78x128xf32> to vector<8x128xf32>
    %c0_60 = arith.constant 0 : index
    %c0_61 = arith.constant 0 : index
    %c0_62 = arith.constant 0 : index
    %91 = vector.load %arg1[%c0_60, %c0_61, %c0_62] : memref<1x64x128xbf16, #tpu.memory_space<vmem>>, vector<1x8x128xbf16>
    %92 = vector.shape_cast %91 : vector<1x8x128xbf16> to vector<8x128xbf16>
    %93 = arith.extf %92 : vector<8x128xbf16> to vector<8x128xf32>
    %94 = arith.addf %90, %93 : vector<8x128xf32>
    %95 = arith.truncf %94 : vector<8x128xf32> to vector<8x128xbf16>
    %c0_63 = arith.constant 0 : index
    %c0_64 = arith.constant 0 : index
    %c0_65 = arith.constant 0 : index
    %96 = vector.load %arg4[%c0_63, %c0_64, %c0_65] : memref<1x64x128xbf16, #tpu.memory_space<vmem>>, vector<1x8x128xbf16>
    %97 = vector.shape_cast %96 : vector<1x8x128xbf16> to vector<8x128xbf16>
    %98 = vector.shape_cast %95 : vector<8x128xbf16> to vector<1x8x128xbf16>
    tpu.vector_store %arg4[%c0_63, %c0_64, %c0_65], %98 {strides = array<i32>} : memref<1x64x128xbf16, #tpu.memory_space<vmem>>, vector<1x8x128xbf16>,
    %99 = vector.extract_strided_slice %89 {offsets = [10, 0], sizes = [8, 128], strides = [1, 1]} : vector<78x128xf32> to vector<8x128xf32>
    %c0_66 = arith.constant 0 : index
    %c8_67 = arith.constant 8 : index
    %c0_68 = arith.constant 0 : index
    %100 = vector.load %arg1[%c0_66, %c8_67, %c0_68] : memref<1x64x128xbf16, #tpu.memory_space<vmem>>, vector<1x8x128xbf16>
    %101 = vector.shape_cast %100 : vector<1x8x128xbf16> to vector<8x128xbf16>
    %102 = arith.extf %101 : vector<8x128xbf16> to vector<8x128xf32>
    %103 = arith.addf %99, %102 : vector<8x128xf32>
    %104 = arith.truncf %103 : vector<8x128xf32> to vector<8x128xbf16>
    %c0_69 = arith.constant 0 : index
    %c8_70 = arith.constant 8 : index
    %c0_71 = arith.constant 0 : index
    %105 = vector.load %arg4[%c0_69, %c8_70, %c0_71] : memref<1x64x128xbf16, #tpu.memory_space<vmem>>, vector<1x8x128xbf16>
    %106 = vector.shape_cast %105 : vector<1x8x128xbf16> to vector<8x128xbf16>
    %107 = vector.shape_cast %104 : vector<8x128xbf16> to vector<1x8x128xbf16>
    tpu.vector_store %arg4[%c0_69, %c8_70, %c0_71], %107 {strides = array<i32>} : memref<1x64x128xbf16, #tpu.memory_space<vmem>>, vector<1x8x128xbf16>,
    %108 = vector.extract_strided_slice %89 {offsets = [20, 0], sizes = [8, 128], strides = [1, 1]} : vector<78x128xf32> to vector<8x128xf32>
    %c0_72 = arith.constant 0 : index
    %c16 = arith.constant 16 : index
    %c0_73 = arith.constant 0 : index
    %109 = vector.load %arg1[%c0_72, %c16, %c0_73] : memref<1x64x128xbf16, #tpu.memory_space<vmem>>, vector<1x8x128xbf16>
    %110 = vector.shape_cast %109 : vector<1x8x128xbf16> to vector<8x128xbf16>
    %111 = arith.extf %110 : vector<8x128xbf16> to vector<8x128xf32>
    %112 = arith.addf %108, %111 : vector<8x128xf32>
    %113 = arith.truncf %112 : vector<8x128xf32> to vector<8x128xbf16>
    %c0_74 = arith.constant 0 : index
    %c16_75 = arith.constant 16 : index
    %c0_76 = arith.constant 0 : index
    %114 = vector.load %arg4[%c0_74, %c16_75, %c0_76] : memref<1x64x128xbf16, #tpu.memory_space<vmem>>, vector<1x8x128xbf16>
    %115 = vector.shape_cast %114 : vector<1x8x128xbf16> to vector<8x128xbf16>
    %116 = vector.shape_cast %113 : vector<8x128xbf16> to vector<1x8x128xbf16>
    tpu.vector_store %arg4[%c0_74, %c16_75, %c0_76], %116 {strides = array<i32>} : memref<1x64x128xbf16, #tpu.memory_space<vmem>>, vector<1x8x128xbf16>,
    %117 = vector.extract_strided_slice %89 {offsets = [30, 0], sizes = [8, 128], strides = [1, 1]} : vector<78x128xf32> to vector<8x128xf32>
    %c0_77 = arith.constant 0 : index
    %c24 = arith.constant 24 : index
    %c0_78 = arith.constant 0 : index
    %118 = vector.load %arg1[%c0_77, %c24, %c0_78] : memref<1x64x128xbf16, #tpu.memory_space<vmem>>, vector<1x8x128xbf16>
    %119 = vector.shape_cast %118 : vector<1x8x128xbf16> to vector<8x128xbf16>
    %120 = arith.extf %119 : vector<8x128xbf16> to vector<8x128xf32>
    %121 = arith.addf %117, %120 : vector<8x128xf32>
    %122 = arith.truncf %121 : vector<8x128xf32> to vector<8x128xbf16>
    %c0_79 = arith.constant 0 : index
    %c24_80 = arith.constant 24 : index
    %c0_81 = arith.constant 0 : index
    %123 = vector.load %arg4[%c0_79, %c24_80, %c0_81] : memref<1x64x128xbf16, #tpu.memory_space<vmem>>, vector<1x8x128xbf16>
    %124 = vector.shape_cast %123 : vector<1x8x128xbf16> to vector<8x128xbf16>
    %125 = vector.shape_cast %122 : vector<8x128xbf16> to vector<1x8x128xbf16>
    tpu.vector_store %arg4[%c0_79, %c24_80, %c0_81], %125 {strides = array<i32>} : memref<1x64x128xbf16, #tpu.memory_space<vmem>>, vector<1x8x128xbf16>,
    %126 = vector.extract_strided_slice %89 {offsets = [40, 0], sizes = [8, 128], strides = [1, 1]} : vector<78x128xf32> to vector<8x128xf32>
    %c0_82 = arith.constant 0 : index
    %c32 = arith.constant 32 : index
    %c0_83 = arith.constant 0 : index
    %127 = vector.load %arg1[%c0_82, %c32, %c0_83] : memref<1x64x128xbf16, #tpu.memory_space<vmem>>, vector<1x8x128xbf16>
    %128 = vector.shape_cast %127 : vector<1x8x128xbf16> to vector<8x128xbf16>
    %129 = arith.extf %128 : vector<8x128xbf16> to vector<8x128xf32>
    %130 = arith.addf %126, %129 : vector<8x128xf32>
    %131 = arith.truncf %130 : vector<8x128xf32> to vector<8x128xbf16>
    %c0_84 = arith.constant 0 : index
    %c32_85 = arith.constant 32 : index
    %c0_86 = arith.constant 0 : index
    %132 = vector.load %arg4[%c0_84, %c32_85, %c0_86] : memref<1x64x128xbf16, #tpu.memory_space<vmem>>, vector<1x8x128xbf16>
    %133 = vector.shape_cast %132 : vector<1x8x128xbf16> to vector<8x128xbf16>
    %134 = vector.shape_cast %131 : vector<8x128xbf16> to vector<1x8x128xbf16>
    tpu.vector_store %arg4[%c0_84, %c32_85, %c0_86], %134 {strides = array<i32>} : memref<1x64x128xbf16, #tpu.memory_space<vmem>>, vector<1x8x128xbf16>,
    %135 = vector.extract_strided_slice %89 {offsets = [50, 0], sizes = [8, 128], strides = [1, 1]} : vector<78x128xf32> to vector<8x128xf32>
    %c0_87 = arith.constant 0 : index
    %c40 = arith.constant 40 : index
    %c0_88 = arith.constant 0 : index
    %136 = vector.load %arg1[%c0_87, %c40, %c0_88] : memref<1x64x128xbf16, #tpu.memory_space<vmem>>, vector<1x8x128xbf16>
    %137 = vector.shape_cast %136 : vector<1x8x128xbf16> to vector<8x128xbf16>
    %138 = arith.extf %137 : vector<8x128xbf16> to vector<8x128xf32>
    %139 = arith.addf %135, %138 : vector<8x128xf32>
    %140 = arith.truncf %139 : vector<8x128xf32> to vector<8x128xbf16>
    %c0_89 = arith.constant 0 : index
    %c40_90 = arith.constant 40 : index
    %c0_91 = arith.constant 0 : index
    %141 = vector.load %arg4[%c0_89, %c40_90, %c0_91] : memref<1x64x128xbf16, #tpu.memory_space<vmem>>, vector<1x8x128xbf16>
    %142 = vector.shape_cast %141 : vector<1x8x128xbf16> to vector<8x128xbf16>
    %143 = vector.shape_cast %140 : vector<8x128xbf16> to vector<1x8x128xbf16>
    tpu.vector_store %arg4[%c0_89, %c40_90, %c0_91], %143 {strides = array<i32>} : memref<1x64x128xbf16, #tpu.memory_space<vmem>>, vector<1x8x128xbf16>,
    %144 = vector.extract_strided_slice %89 {offsets = [60, 0], sizes = [8, 128], strides = [1, 1]} : vector<78x128xf32> to vector<8x128xf32>
    %c0_92 = arith.constant 0 : index
    %c48 = arith.constant 48 : index
    %c0_93 = arith.constant 0 : index
    %145 = vector.load %arg1[%c0_92, %c48, %c0_93] : memref<1x64x128xbf16, #tpu.memory_space<vmem>>, vector<1x8x128xbf16>
    %146 = vector.shape_cast %145 : vector<1x8x128xbf16> to vector<8x128xbf16>
    %147 = arith.extf %146 : vector<8x128xbf16> to vector<8x128xf32>
    %148 = arith.addf %144, %147 : vector<8x128xf32>
    %149 = arith.truncf %148 : vector<8x128xf32> to vector<8x128xbf16>
    %c0_94 = arith.constant 0 : index
    %c48_95 = arith.constant 48 : index
    %c0_96 = arith.constant 0 : index
    %150 = vector.load %arg4[%c0_94, %c48_95, %c0_96] : memref<1x64x128xbf16, #tpu.memory_space<vmem>>, vector<1x8x128xbf16>
    %151 = vector.shape_cast %150 : vector<1x8x128xbf16> to vector<8x128xbf16>
    %152 = vector.shape_cast %149 : vector<8x128xbf16> to vector<1x8x128xbf16>
    tpu.vector_store %arg4[%c0_94, %c48_95, %c0_96], %152 {strides = array<i32>} : memref<1x64x128xbf16, #tpu.memory_space<vmem>>, vector<1x8x128xbf16>,
    %153 = vector.extract_strided_slice %89 {offsets = [70, 0], sizes = [8, 128], strides = [1, 1]} : vector<78x128xf32> to vector<8x128xf32>
    %c0_97 = arith.constant 0 : index
    %c56 = arith.constant 56 : index
    %c0_98 = arith.constant 0 : index
    %154 = vector.load %arg1[%c0_97, %c56, %c0_98] : memref<1x64x128xbf16, #tpu.memory_space<vmem>>, vector<1x8x128xbf16>
    %155 = vector.shape_cast %154 : vector<1x8x128xbf16> to vector<8x128xbf16>
    %156 = arith.extf %155 : vector<8x128xbf16> to vector<8x128xf32>
    %157 = arith.addf %153, %156 : vector<8x128xf32>
    %158 = arith.truncf %157 : vector<8x128xf32> to vector<8x128xbf16>
    %c0_99 = arith.constant 0 : index
    %c56_100 = arith.constant 56 : index
    %c0_101 = arith.constant 0 : index
    %159 = vector.load %arg4[%c0_99, %c56_100, %c0_101] : memref<1x64x128xbf16, #tpu.memory_space<vmem>>, vector<1x8x128xbf16>
    %160 = vector.shape_cast %159 : vector<1x8x128xbf16> to vector<8x128xbf16>
    %161 = vector.shape_cast %158 : vector<8x128xbf16> to vector<1x8x128xbf16>
    tpu.vector_store %arg4[%c0_99, %c56_100, %c0_101], %161 {strides = array<i32>} : memref<1x64x128xbf16, #tpu.memory_space<vmem>>, vector<1x8x128xbf16>,
    return
  }
  func.func @transform_0(%arg0: i32) -> (i32, i32, i32) {
    %c0_i32 = arith.constant 0 : i32
    %c0_i32_0 = arith.constant 0 : i32
    %c0_i32_1 = arith.constant 0 : i32
    return %arg0, %c0_i32, %c0_i32_0 : i32, i32, i32
  }
  func.func @transform_1(%arg0: i32) -> (i32, i32, i32) {
    %c0_i32 = arith.constant 0 : i32
    %c0_i32_0 = arith.constant 0 : i32
    %c0_i32_1 = arith.constant 0 : i32
    %c0_i32_2 = arith.constant 0 : i32
    return %c0_i32, %c0_i32_0, %c0_i32_1 : i32, i32, i32
  }
  func.func @transform_2(%arg0: i32) -> (i32, i32) {
    %c0_i32 = arith.constant 0 : i32
    %c0_i32_0 = arith.constant 0 : i32
    %c0_i32_1 = arith.constant 0 : i32
    return %c0_i32, %c0_i32_0 : i32, i32
  }
  func.func @transform_3(%arg0: i32) -> (i32, i32, i32) {
    %c0_i32 = arith.constant 0 : i32
    %c0_i32_0 = arith.constant 0 : i32
    %c0_i32_1 = arith.constant 0 : i32
    return %arg0, %c0_i32, %c0_i32_0 : i32, i32, i32
  }
}

module attributes {stable_mosaic.version = 11 : i64} {
  func.func @_bottleneck_kernel(%arg0: i32, %arg1: memref<1x64x128xbf16, #tpu.memory_space<vmem>>, %arg2: memref<128x128xbf16, #tpu.memory_space<vmem>>, %arg3: memref<9x1x128xf32, #tpu.memory_space<vmem>>, %arg4: memref<128x128xbf16, #tpu.memory_space<vmem>>, %arg5: memref<1x64x128xbf16, #tpu.memory_space<vmem>>, %arg6: memref<100x128xf32, #tpu.memory_space<vmem>>) attributes {dimension_semantics = [#tpu.dimension_semantics<parallel>], iteration_bounds = array<i64: 2>, scalar_prefetch = 0 : i64, scratch_operands = 1 : i64, tpu.core_type = #tpu.core_type<tc>, window_params = [{transform_indices = @transform_0, window_bounds = array<i64: 1, 64, 128>}, {pipeline_mode = #tpu.pipeline_mode<synchronous>, transform_indices = @transform_1, window_bounds = array<i64: 128, 128>}, {pipeline_mode = #tpu.pipeline_mode<synchronous>, transform_indices = @transform_2, window_bounds = array<i64: 9, 1, 128>}, {pipeline_mode = #tpu.pipeline_mode<synchronous>, transform_indices = @transform_3, window_bounds = array<i64: 128, 128>}, {transform_indices = @transform_4, window_bounds = array<i64: 1, 64, 128>}]} {
    %cst = arith.constant 0.000000e+00 : f32
    %0 = vector.broadcast %cst : f32 to vector<11x128xf32>
    %c0 = arith.constant 0 : index
    %c0_0 = arith.constant 0 : index
    %1 = vector.load %arg6[%c0, %c0_0] : memref<100x128xf32, #tpu.memory_space<vmem>>, vector<11x128xf32>
    tpu.vector_store %arg6[%c0, %c0_0], %0 {strides = array<i32>} : memref<100x128xf32, #tpu.memory_space<vmem>>, vector<11x128xf32>,
    %cst_1 = arith.constant 0.000000e+00 : f32
    %2 = vector.broadcast %cst_1 : f32 to vector<2x128xf32>
    %c19 = arith.constant 19 : index
    %c0_2 = arith.constant 0 : index
    %3 = vector.load %arg6[%c19, %c0_2] : memref<100x128xf32, #tpu.memory_space<vmem>>, vector<2x128xf32>
    tpu.vector_store %arg6[%c19, %c0_2], %2 {strides = array<i32>} : memref<100x128xf32, #tpu.memory_space<vmem>>, vector<2x128xf32>,
    %c29 = arith.constant 29 : index
    %c0_3 = arith.constant 0 : index
    %4 = vector.load %arg6[%c29, %c0_3] : memref<100x128xf32, #tpu.memory_space<vmem>>, vector<2x128xf32>
    tpu.vector_store %arg6[%c29, %c0_3], %2 {strides = array<i32>} : memref<100x128xf32, #tpu.memory_space<vmem>>, vector<2x128xf32>,
    %c39 = arith.constant 39 : index
    %c0_4 = arith.constant 0 : index
    %5 = vector.load %arg6[%c39, %c0_4] : memref<100x128xf32, #tpu.memory_space<vmem>>, vector<2x128xf32>
    tpu.vector_store %arg6[%c39, %c0_4], %2 {strides = array<i32>} : memref<100x128xf32, #tpu.memory_space<vmem>>, vector<2x128xf32>,
    %c49 = arith.constant 49 : index
    %c0_5 = arith.constant 0 : index
    %6 = vector.load %arg6[%c49, %c0_5] : memref<100x128xf32, #tpu.memory_space<vmem>>, vector<2x128xf32>
    tpu.vector_store %arg6[%c49, %c0_5], %2 {strides = array<i32>} : memref<100x128xf32, #tpu.memory_space<vmem>>, vector<2x128xf32>,
    %c59 = arith.constant 59 : index
    %c0_6 = arith.constant 0 : index
    %7 = vector.load %arg6[%c59, %c0_6] : memref<100x128xf32, #tpu.memory_space<vmem>>, vector<2x128xf32>
    tpu.vector_store %arg6[%c59, %c0_6], %2 {strides = array<i32>} : memref<100x128xf32, #tpu.memory_space<vmem>>, vector<2x128xf32>,
    %c69 = arith.constant 69 : index
    %c0_7 = arith.constant 0 : index
    %8 = vector.load %arg6[%c69, %c0_7] : memref<100x128xf32, #tpu.memory_space<vmem>>, vector<2x128xf32>
    tpu.vector_store %arg6[%c69, %c0_7], %2 {strides = array<i32>} : memref<100x128xf32, #tpu.memory_space<vmem>>, vector<2x128xf32>,
    %c79 = arith.constant 79 : index
    %c0_8 = arith.constant 0 : index
    %9 = vector.load %arg6[%c79, %c0_8] : memref<100x128xf32, #tpu.memory_space<vmem>>, vector<2x128xf32>
    tpu.vector_store %arg6[%c79, %c0_8], %2 {strides = array<i32>} : memref<100x128xf32, #tpu.memory_space<vmem>>, vector<2x128xf32>,
    %c89 = arith.constant 89 : index
    %c0_9 = arith.constant 0 : index
    %10 = vector.load %arg6[%c89, %c0_9] : memref<100x128xf32, #tpu.memory_space<vmem>>, vector<2x128xf32>
    tpu.vector_store %arg6[%c89, %c0_9], %2 {strides = array<i32>} : memref<100x128xf32, #tpu.memory_space<vmem>>, vector<2x128xf32>,
    %cst_10 = arith.constant 0.000000e+00 : f32
    %11 = vector.broadcast %cst_10 : f32 to vector<9x128xf32>
    %c91 = arith.constant 91 : index
    %c0_11 = arith.constant 0 : index
    %12 = vector.load %arg6[%c91, %c0_11] : memref<100x128xf32, #tpu.memory_space<vmem>>, vector<9x128xf32>
    tpu.vector_store %arg6[%c91, %c0_11], %11 {strides = array<i32>} : memref<100x128xf32, #tpu.memory_space<vmem>>, vector<9x128xf32>,
    %c0_12 = arith.constant 0 : index
    %c0_13 = arith.constant 0 : index
    %c0_14 = arith.constant 0 : index
    %13 = vector.load %arg1[%c0_12, %c0_13, %c0_14] : memref<1x64x128xbf16, #tpu.memory_space<vmem>>, vector<1x64x128xbf16>
    %14 = vector.shape_cast %13 : vector<1x64x128xbf16> to vector<64x128xbf16>
    %c0_15 = arith.constant 0 : index
    %c0_16 = arith.constant 0 : index
    %15 = vector.load %arg2[%c0_15, %c0_16] : memref<128x128xbf16, #tpu.memory_space<vmem>>, vector<128x128xbf16>
    %cst_17 = arith.constant dense<0.000000e+00> : vector<64x128xf32>
    %16 = tpu.matmul %14, %15, %cst_17 {dimension_numbers = #tpu.dot_dimension_numbers<[1], [0], [0], [1], [0, 0, 1, 1], [], []>} : vector<64x128xbf16>, vector<128x128xbf16>, vector<64x128xf32> -> vector<64x128xf32>
    %cst_18 = arith.constant 0.000000e+00 : f32
    %17 = vector.broadcast %cst_18 : f32 to vector<64x128xf32>
    %18 = arith.maximumf %16, %17 : vector<64x128xf32>
    %19 = vector.extract_strided_slice %18 {offsets = [0, 0], sizes = [8, 128], strides = [1, 1]} : vector<64x128xf32> to vector<8x128xf32>
    %c11 = arith.constant 11 : index
    %c0_19 = arith.constant 0 : index
    %20 = vector.load %arg6[%c11, %c0_19] : memref<100x128xf32, #tpu.memory_space<vmem>>, vector<8x128xf32>
    tpu.vector_store %arg6[%c11, %c0_19], %19 {strides = array<i32>} : memref<100x128xf32, #tpu.memory_space<vmem>>, vector<8x128xf32>,
    %21 = vector.extract_strided_slice %18 {offsets = [8, 0], sizes = [8, 128], strides = [1, 1]} : vector<64x128xf32> to vector<8x128xf32>
    %c21 = arith.constant 21 : index
    %c0_20 = arith.constant 0 : index
    %22 = vector.load %arg6[%c21, %c0_20] : memref<100x128xf32, #tpu.memory_space<vmem>>, vector<8x128xf32>
    tpu.vector_store %arg6[%c21, %c0_20], %21 {strides = array<i32>} : memref<100x128xf32, #tpu.memory_space<vmem>>, vector<8x128xf32>,
    %23 = vector.extract_strided_slice %18 {offsets = [16, 0], sizes = [8, 128], strides = [1, 1]} : vector<64x128xf32> to vector<8x128xf32>
    %c31 = arith.constant 31 : index
    %c0_21 = arith.constant 0 : index
    %24 = vector.load %arg6[%c31, %c0_21] : memref<100x128xf32, #tpu.memory_space<vmem>>, vector<8x128xf32>
    tpu.vector_store %arg6[%c31, %c0_21], %23 {strides = array<i32>} : memref<100x128xf32, #tpu.memory_space<vmem>>, vector<8x128xf32>,
    %25 = vector.extract_strided_slice %18 {offsets = [24, 0], sizes = [8, 128], strides = [1, 1]} : vector<64x128xf32> to vector<8x128xf32>
    %c41 = arith.constant 41 : index
    %c0_22 = arith.constant 0 : index
    %26 = vector.load %arg6[%c41, %c0_22] : memref<100x128xf32, #tpu.memory_space<vmem>>, vector<8x128xf32>
    tpu.vector_store %arg6[%c41, %c0_22], %25 {strides = array<i32>} : memref<100x128xf32, #tpu.memory_space<vmem>>, vector<8x128xf32>,
    %27 = vector.extract_strided_slice %18 {offsets = [32, 0], sizes = [8, 128], strides = [1, 1]} : vector<64x128xf32> to vector<8x128xf32>
    %c51 = arith.constant 51 : index
    %c0_23 = arith.constant 0 : index
    %28 = vector.load %arg6[%c51, %c0_23] : memref<100x128xf32, #tpu.memory_space<vmem>>, vector<8x128xf32>
    tpu.vector_store %arg6[%c51, %c0_23], %27 {strides = array<i32>} : memref<100x128xf32, #tpu.memory_space<vmem>>, vector<8x128xf32>,
    %29 = vector.extract_strided_slice %18 {offsets = [40, 0], sizes = [8, 128], strides = [1, 1]} : vector<64x128xf32> to vector<8x128xf32>
    %c61 = arith.constant 61 : index
    %c0_24 = arith.constant 0 : index
    %30 = vector.load %arg6[%c61, %c0_24] : memref<100x128xf32, #tpu.memory_space<vmem>>, vector<8x128xf32>
    tpu.vector_store %arg6[%c61, %c0_24], %29 {strides = array<i32>} : memref<100x128xf32, #tpu.memory_space<vmem>>, vector<8x128xf32>,
    %31 = vector.extract_strided_slice %18 {offsets = [48, 0], sizes = [8, 128], strides = [1, 1]} : vector<64x128xf32> to vector<8x128xf32>
    %c71 = arith.constant 71 : index
    %c0_25 = arith.constant 0 : index
    %32 = vector.load %arg6[%c71, %c0_25] : memref<100x128xf32, #tpu.memory_space<vmem>>, vector<8x128xf32>
    tpu.vector_store %arg6[%c71, %c0_25], %31 {strides = array<i32>} : memref<100x128xf32, #tpu.memory_space<vmem>>, vector<8x128xf32>,
    %33 = vector.extract_strided_slice %18 {offsets = [56, 0], sizes = [8, 128], strides = [1, 1]} : vector<64x128xf32> to vector<8x128xf32>
    %c81 = arith.constant 81 : index
    %c0_26 = arith.constant 0 : index
    %34 = vector.load %arg6[%c81, %c0_26] : memref<100x128xf32, #tpu.memory_space<vmem>>, vector<8x128xf32>
    tpu.vector_store %arg6[%c81, %c0_26], %33 {strides = array<i32>} : memref<100x128xf32, #tpu.memory_space<vmem>>, vector<8x128xf32>,
    %c0_27 = arith.constant 0 : index
    %c0_28 = arith.constant 0 : index
    %c0_29 = arith.constant 0 : index
    %35 = vector.load %arg3[%c0_27, %c0_28, %c0_29] : memref<9x1x128xf32, #tpu.memory_space<vmem>>, vector<1x1x128xf32>
    %36 = vector.shape_cast %35 : vector<1x1x128xf32> to vector<1x128xf32>
    %c1 = arith.constant 1 : index
    %c0_30 = arith.constant 0 : index
    %c0_31 = arith.constant 0 : index
    %37 = vector.load %arg3[%c1, %c0_30, %c0_31] : memref<9x1x128xf32, #tpu.memory_space<vmem>>, vector<1x1x128xf32>
    %38 = vector.shape_cast %37 : vector<1x1x128xf32> to vector<1x128xf32>
    %c2 = arith.constant 2 : index
    %c0_32 = arith.constant 0 : index
    %c0_33 = arith.constant 0 : index
    %39 = vector.load %arg3[%c2, %c0_32, %c0_33] : memref<9x1x128xf32, #tpu.memory_space<vmem>>, vector<1x1x128xf32>
    %40 = vector.shape_cast %39 : vector<1x1x128xf32> to vector<1x128xf32>
    %c3 = arith.constant 3 : index
    %c0_34 = arith.constant 0 : index
    %c0_35 = arith.constant 0 : index
    %41 = vector.load %arg3[%c3, %c0_34, %c0_35] : memref<9x1x128xf32, #tpu.memory_space<vmem>>, vector<1x1x128xf32>
    %42 = vector.shape_cast %41 : vector<1x1x128xf32> to vector<1x128xf32>
    %c4 = arith.constant 4 : index
    %c0_36 = arith.constant 0 : index
    %c0_37 = arith.constant 0 : index
    %43 = vector.load %arg3[%c4, %c0_36, %c0_37] : memref<9x1x128xf32, #tpu.memory_space<vmem>>, vector<1x1x128xf32>
    %44 = vector.shape_cast %43 : vector<1x1x128xf32> to vector<1x128xf32>
    %c5 = arith.constant 5 : index
    %c0_38 = arith.constant 0 : index
    %c0_39 = arith.constant 0 : index
    %45 = vector.load %arg3[%c5, %c0_38, %c0_39] : memref<9x1x128xf32, #tpu.memory_space<vmem>>, vector<1x1x128xf32>
    %46 = vector.shape_cast %45 : vector<1x1x128xf32> to vector<1x128xf32>
    %c6 = arith.constant 6 : index
    %c0_40 = arith.constant 0 : index
    %c0_41 = arith.constant 0 : index
    %47 = vector.load %arg3[%c6, %c0_40, %c0_41] : memref<9x1x128xf32, #tpu.memory_space<vmem>>, vector<1x1x128xf32>
    %48 = vector.shape_cast %47 : vector<1x1x128xf32> to vector<1x128xf32>
    %c7 = arith.constant 7 : index
    %c0_42 = arith.constant 0 : index
    %c0_43 = arith.constant 0 : index
    %49 = vector.load %arg3[%c7, %c0_42, %c0_43] : memref<9x1x128xf32, #tpu.memory_space<vmem>>, vector<1x1x128xf32>
    %50 = vector.shape_cast %49 : vector<1x1x128xf32> to vector<1x128xf32>
    %c8 = arith.constant 8 : index
    %c0_44 = arith.constant 0 : index
    %c0_45 = arith.constant 0 : index
    %51 = vector.load %arg3[%c8, %c0_44, %c0_45] : memref<9x1x128xf32, #tpu.memory_space<vmem>>, vector<1x1x128xf32>
    %52 = vector.shape_cast %51 : vector<1x1x128xf32> to vector<1x128xf32>
    %c0_46 = arith.constant 0 : index
    %c0_47 = arith.constant 0 : index
    %53 = vector.load %arg6[%c0_46, %c0_47] : memref<100x128xf32, #tpu.memory_space<vmem>>, vector<78x128xf32>
    %54 = vector.broadcast %36 : vector<1x128xf32> to vector<78x128xf32>
    %55 = arith.mulf %53, %54 : vector<78x128xf32>
    %c1_48 = arith.constant 1 : index
    %c0_49 = arith.constant 0 : index
    %56 = vector.load %arg6[%c1_48, %c0_49] : memref<100x128xf32, #tpu.memory_space<vmem>>, vector<78x128xf32>
    %57 = vector.broadcast %38 : vector<1x128xf32> to vector<78x128xf32>
    %58 = arith.mulf %56, %57 : vector<78x128xf32>
    %59 = arith.addf %55, %58 : vector<78x128xf32>
    %c2_50 = arith.constant 2 : index
    %c0_51 = arith.constant 0 : index
    %60 = vector.load %arg6[%c2_50, %c0_51] : memref<100x128xf32, #tpu.memory_space<vmem>>, vector<78x128xf32>
    %61 = vector.broadcast %40 : vector<1x128xf32> to vector<78x128xf32>
    %62 = arith.mulf %60, %61 : vector<78x128xf32>
    %63 = arith.addf %59, %62 : vector<78x128xf32>
    %c10 = arith.constant 10 : index
    %c0_52 = arith.constant 0 : index
    %64 = vector.load %arg6[%c10, %c0_52] : memref<100x128xf32, #tpu.memory_space<vmem>>, vector<78x128xf32>
    %65 = vector.broadcast %42 : vector<1x128xf32> to vector<78x128xf32>
    %66 = arith.mulf %64, %65 : vector<78x128xf32>
    %67 = arith.addf %63, %66 : vector<78x128xf32>
    %c11_53 = arith.constant 11 : index
    %c0_54 = arith.constant 0 : index
    %68 = vector.load %arg6[%c11_53, %c0_54] : memref<100x128xf32, #tpu.memory_space<vmem>>, vector<78x128xf32>
    %69 = vector.broadcast %44 : vector<1x128xf32> to vector<78x128xf32>
    %70 = arith.mulf %68, %69 : vector<78x128xf32>
    %71 = arith.addf %67, %70 : vector<78x128xf32>
    %c12 = arith.constant 12 : index
    %c0_55 = arith.constant 0 : index
    %72 = vector.load %arg6[%c12, %c0_55] : memref<100x128xf32, #tpu.memory_space<vmem>>, vector<78x128xf32>
    %73 = vector.broadcast %46 : vector<1x128xf32> to vector<78x128xf32>
    %74 = arith.mulf %72, %73 : vector<78x128xf32>
    %75 = arith.addf %71, %74 : vector<78x128xf32>
    %c20 = arith.constant 20 : index
    %c0_56 = arith.constant 0 : index
    %76 = vector.load %arg6[%c20, %c0_56] : memref<100x128xf32, #tpu.memory_space<vmem>>, vector<78x128xf32>
    %77 = vector.broadcast %48 : vector<1x128xf32> to vector<78x128xf32>
    %78 = arith.mulf %76, %77 : vector<78x128xf32>
    %79 = arith.addf %75, %78 : vector<78x128xf32>
    %c21_57 = arith.constant 21 : index
    %c0_58 = arith.constant 0 : index
    %80 = vector.load %arg6[%c21_57, %c0_58] : memref<100x128xf32, #tpu.memory_space<vmem>>, vector<78x128xf32>
    %81 = vector.broadcast %50 : vector<1x128xf32> to vector<78x128xf32>
    %82 = arith.mulf %80, %81 : vector<78x128xf32>
    %83 = arith.addf %79, %82 : vector<78x128xf32>
    %c22 = arith.constant 22 : index
    %c0_59 = arith.constant 0 : index
    %84 = vector.load %arg6[%c22, %c0_59] : memref<100x128xf32, #tpu.memory_space<vmem>>, vector<78x128xf32>
    %85 = vector.broadcast %52 : vector<1x128xf32> to vector<78x128xf32>
    %86 = arith.mulf %84, %85 : vector<78x128xf32>
    %87 = arith.addf %83, %86 : vector<78x128xf32>
    %cst_60 = arith.constant 0.000000e+00 : f32
    %88 = vector.broadcast %cst_60 : f32 to vector<78x128xf32>
    %89 = arith.maximumf %87, %88 : vector<78x128xf32>
    %90 = arith.truncf %89 : vector<78x128xf32> to vector<78x128xbf16>
    %c0_61 = arith.constant 0 : index
    %c0_62 = arith.constant 0 : index
    %91 = vector.load %arg4[%c0_61, %c0_62] : memref<128x128xbf16, #tpu.memory_space<vmem>>, vector<128x128xbf16>
    %cst_63 = arith.constant dense<0.000000e+00> : vector<78x128xf32>
    %92 = tpu.matmul %90, %91, %cst_63 {dimension_numbers = #tpu.dot_dimension_numbers<[1], [0], [0], [1], [0, 0, 1, 1], [], []>} : vector<78x128xbf16>, vector<128x128xbf16>, vector<78x128xf32> -> vector<78x128xf32>
    %93 = vector.extract_strided_slice %92 {offsets = [0, 0], sizes = [8, 128], strides = [1, 1]} : vector<78x128xf32> to vector<8x128xf32>
    %c0_64 = arith.constant 0 : index
    %c0_65 = arith.constant 0 : index
    %c0_66 = arith.constant 0 : index
    %94 = vector.load %arg1[%c0_64, %c0_65, %c0_66] : memref<1x64x128xbf16, #tpu.memory_space<vmem>>, vector<1x8x128xbf16>
    %95 = vector.shape_cast %94 : vector<1x8x128xbf16> to vector<8x128xbf16>
    %96 = arith.extf %95 : vector<8x128xbf16> to vector<8x128xf32>
    %97 = arith.addf %93, %96 : vector<8x128xf32>
    %98 = arith.truncf %97 : vector<8x128xf32> to vector<8x128xbf16>
    %c0_67 = arith.constant 0 : index
    %c0_68 = arith.constant 0 : index
    %c0_69 = arith.constant 0 : index
    %99 = vector.load %arg5[%c0_67, %c0_68, %c0_69] : memref<1x64x128xbf16, #tpu.memory_space<vmem>>, vector<1x8x128xbf16>
    %100 = vector.shape_cast %99 : vector<1x8x128xbf16> to vector<8x128xbf16>
    %101 = vector.shape_cast %98 : vector<8x128xbf16> to vector<1x8x128xbf16>
    tpu.vector_store %arg5[%c0_67, %c0_68, %c0_69], %101 {strides = array<i32>} : memref<1x64x128xbf16, #tpu.memory_space<vmem>>, vector<1x8x128xbf16>,
    %102 = vector.extract_strided_slice %92 {offsets = [10, 0], sizes = [8, 128], strides = [1, 1]} : vector<78x128xf32> to vector<8x128xf32>
    %c0_70 = arith.constant 0 : index
    %c8_71 = arith.constant 8 : index
    %c0_72 = arith.constant 0 : index
    %103 = vector.load %arg1[%c0_70, %c8_71, %c0_72] : memref<1x64x128xbf16, #tpu.memory_space<vmem>>, vector<1x8x128xbf16>
    %104 = vector.shape_cast %103 : vector<1x8x128xbf16> to vector<8x128xbf16>
    %105 = arith.extf %104 : vector<8x128xbf16> to vector<8x128xf32>
    %106 = arith.addf %102, %105 : vector<8x128xf32>
    %107 = arith.truncf %106 : vector<8x128xf32> to vector<8x128xbf16>
    %c0_73 = arith.constant 0 : index
    %c8_74 = arith.constant 8 : index
    %c0_75 = arith.constant 0 : index
    %108 = vector.load %arg5[%c0_73, %c8_74, %c0_75] : memref<1x64x128xbf16, #tpu.memory_space<vmem>>, vector<1x8x128xbf16>
    %109 = vector.shape_cast %108 : vector<1x8x128xbf16> to vector<8x128xbf16>
    %110 = vector.shape_cast %107 : vector<8x128xbf16> to vector<1x8x128xbf16>
    tpu.vector_store %arg5[%c0_73, %c8_74, %c0_75], %110 {strides = array<i32>} : memref<1x64x128xbf16, #tpu.memory_space<vmem>>, vector<1x8x128xbf16>,
    %111 = vector.extract_strided_slice %92 {offsets = [20, 0], sizes = [8, 128], strides = [1, 1]} : vector<78x128xf32> to vector<8x128xf32>
    %c0_76 = arith.constant 0 : index
    %c16 = arith.constant 16 : index
    %c0_77 = arith.constant 0 : index
    %112 = vector.load %arg1[%c0_76, %c16, %c0_77] : memref<1x64x128xbf16, #tpu.memory_space<vmem>>, vector<1x8x128xbf16>
    %113 = vector.shape_cast %112 : vector<1x8x128xbf16> to vector<8x128xbf16>
    %114 = arith.extf %113 : vector<8x128xbf16> to vector<8x128xf32>
    %115 = arith.addf %111, %114 : vector<8x128xf32>
    %116 = arith.truncf %115 : vector<8x128xf32> to vector<8x128xbf16>
    %c0_78 = arith.constant 0 : index
    %c16_79 = arith.constant 16 : index
    %c0_80 = arith.constant 0 : index
    %117 = vector.load %arg5[%c0_78, %c16_79, %c0_80] : memref<1x64x128xbf16, #tpu.memory_space<vmem>>, vector<1x8x128xbf16>
    %118 = vector.shape_cast %117 : vector<1x8x128xbf16> to vector<8x128xbf16>
    %119 = vector.shape_cast %116 : vector<8x128xbf16> to vector<1x8x128xbf16>
    tpu.vector_store %arg5[%c0_78, %c16_79, %c0_80], %119 {strides = array<i32>} : memref<1x64x128xbf16, #tpu.memory_space<vmem>>, vector<1x8x128xbf16>,
    %120 = vector.extract_strided_slice %92 {offsets = [30, 0], sizes = [8, 128], strides = [1, 1]} : vector<78x128xf32> to vector<8x128xf32>
    %c0_81 = arith.constant 0 : index
    %c24 = arith.constant 24 : index
    %c0_82 = arith.constant 0 : index
    %121 = vector.load %arg1[%c0_81, %c24, %c0_82] : memref<1x64x128xbf16, #tpu.memory_space<vmem>>, vector<1x8x128xbf16>
    %122 = vector.shape_cast %121 : vector<1x8x128xbf16> to vector<8x128xbf16>
    %123 = arith.extf %122 : vector<8x128xbf16> to vector<8x128xf32>
    %124 = arith.addf %120, %123 : vector<8x128xf32>
    %125 = arith.truncf %124 : vector<8x128xf32> to vector<8x128xbf16>
    %c0_83 = arith.constant 0 : index
    %c24_84 = arith.constant 24 : index
    %c0_85 = arith.constant 0 : index
    %126 = vector.load %arg5[%c0_83, %c24_84, %c0_85] : memref<1x64x128xbf16, #tpu.memory_space<vmem>>, vector<1x8x128xbf16>
    %127 = vector.shape_cast %126 : vector<1x8x128xbf16> to vector<8x128xbf16>
    %128 = vector.shape_cast %125 : vector<8x128xbf16> to vector<1x8x128xbf16>
    tpu.vector_store %arg5[%c0_83, %c24_84, %c0_85], %128 {strides = array<i32>} : memref<1x64x128xbf16, #tpu.memory_space<vmem>>, vector<1x8x128xbf16>,
    %129 = vector.extract_strided_slice %92 {offsets = [40, 0], sizes = [8, 128], strides = [1, 1]} : vector<78x128xf32> to vector<8x128xf32>
    %c0_86 = arith.constant 0 : index
    %c32 = arith.constant 32 : index
    %c0_87 = arith.constant 0 : index
    %130 = vector.load %arg1[%c0_86, %c32, %c0_87] : memref<1x64x128xbf16, #tpu.memory_space<vmem>>, vector<1x8x128xbf16>
    %131 = vector.shape_cast %130 : vector<1x8x128xbf16> to vector<8x128xbf16>
    %132 = arith.extf %131 : vector<8x128xbf16> to vector<8x128xf32>
    %133 = arith.addf %129, %132 : vector<8x128xf32>
    %134 = arith.truncf %133 : vector<8x128xf32> to vector<8x128xbf16>
    %c0_88 = arith.constant 0 : index
    %c32_89 = arith.constant 32 : index
    %c0_90 = arith.constant 0 : index
    %135 = vector.load %arg5[%c0_88, %c32_89, %c0_90] : memref<1x64x128xbf16, #tpu.memory_space<vmem>>, vector<1x8x128xbf16>
    %136 = vector.shape_cast %135 : vector<1x8x128xbf16> to vector<8x128xbf16>
    %137 = vector.shape_cast %134 : vector<8x128xbf16> to vector<1x8x128xbf16>
    tpu.vector_store %arg5[%c0_88, %c32_89, %c0_90], %137 {strides = array<i32>} : memref<1x64x128xbf16, #tpu.memory_space<vmem>>, vector<1x8x128xbf16>,
    %138 = vector.extract_strided_slice %92 {offsets = [50, 0], sizes = [8, 128], strides = [1, 1]} : vector<78x128xf32> to vector<8x128xf32>
    %c0_91 = arith.constant 0 : index
    %c40 = arith.constant 40 : index
    %c0_92 = arith.constant 0 : index
    %139 = vector.load %arg1[%c0_91, %c40, %c0_92] : memref<1x64x128xbf16, #tpu.memory_space<vmem>>, vector<1x8x128xbf16>
    %140 = vector.shape_cast %139 : vector<1x8x128xbf16> to vector<8x128xbf16>
    %141 = arith.extf %140 : vector<8x128xbf16> to vector<8x128xf32>
    %142 = arith.addf %138, %141 : vector<8x128xf32>
    %143 = arith.truncf %142 : vector<8x128xf32> to vector<8x128xbf16>
    %c0_93 = arith.constant 0 : index
    %c40_94 = arith.constant 40 : index
    %c0_95 = arith.constant 0 : index
    %144 = vector.load %arg5[%c0_93, %c40_94, %c0_95] : memref<1x64x128xbf16, #tpu.memory_space<vmem>>, vector<1x8x128xbf16>
    %145 = vector.shape_cast %144 : vector<1x8x128xbf16> to vector<8x128xbf16>
    %146 = vector.shape_cast %143 : vector<8x128xbf16> to vector<1x8x128xbf16>
    tpu.vector_store %arg5[%c0_93, %c40_94, %c0_95], %146 {strides = array<i32>} : memref<1x64x128xbf16, #tpu.memory_space<vmem>>, vector<1x8x128xbf16>,
    %147 = vector.extract_strided_slice %92 {offsets = [60, 0], sizes = [8, 128], strides = [1, 1]} : vector<78x128xf32> to vector<8x128xf32>
    %c0_96 = arith.constant 0 : index
    %c48 = arith.constant 48 : index
    %c0_97 = arith.constant 0 : index
    %148 = vector.load %arg1[%c0_96, %c48, %c0_97] : memref<1x64x128xbf16, #tpu.memory_space<vmem>>, vector<1x8x128xbf16>
    %149 = vector.shape_cast %148 : vector<1x8x128xbf16> to vector<8x128xbf16>
    %150 = arith.extf %149 : vector<8x128xbf16> to vector<8x128xf32>
    %151 = arith.addf %147, %150 : vector<8x128xf32>
    %152 = arith.truncf %151 : vector<8x128xf32> to vector<8x128xbf16>
    %c0_98 = arith.constant 0 : index
    %c48_99 = arith.constant 48 : index
    %c0_100 = arith.constant 0 : index
    %153 = vector.load %arg5[%c0_98, %c48_99, %c0_100] : memref<1x64x128xbf16, #tpu.memory_space<vmem>>, vector<1x8x128xbf16>
    %154 = vector.shape_cast %153 : vector<1x8x128xbf16> to vector<8x128xbf16>
    %155 = vector.shape_cast %152 : vector<8x128xbf16> to vector<1x8x128xbf16>
    tpu.vector_store %arg5[%c0_98, %c48_99, %c0_100], %155 {strides = array<i32>} : memref<1x64x128xbf16, #tpu.memory_space<vmem>>, vector<1x8x128xbf16>,
    %156 = vector.extract_strided_slice %92 {offsets = [70, 0], sizes = [8, 128], strides = [1, 1]} : vector<78x128xf32> to vector<8x128xf32>
    %c0_101 = arith.constant 0 : index
    %c56 = arith.constant 56 : index
    %c0_102 = arith.constant 0 : index
    %157 = vector.load %arg1[%c0_101, %c56, %c0_102] : memref<1x64x128xbf16, #tpu.memory_space<vmem>>, vector<1x8x128xbf16>
    %158 = vector.shape_cast %157 : vector<1x8x128xbf16> to vector<8x128xbf16>
    %159 = arith.extf %158 : vector<8x128xbf16> to vector<8x128xf32>
    %160 = arith.addf %156, %159 : vector<8x128xf32>
    %161 = arith.truncf %160 : vector<8x128xf32> to vector<8x128xbf16>
    %c0_103 = arith.constant 0 : index
    %c56_104 = arith.constant 56 : index
    %c0_105 = arith.constant 0 : index
    %162 = vector.load %arg5[%c0_103, %c56_104, %c0_105] : memref<1x64x128xbf16, #tpu.memory_space<vmem>>, vector<1x8x128xbf16>
    %163 = vector.shape_cast %162 : vector<1x8x128xbf16> to vector<8x128xbf16>
    %164 = vector.shape_cast %161 : vector<8x128xbf16> to vector<1x8x128xbf16>
    tpu.vector_store %arg5[%c0_103, %c56_104, %c0_105], %164 {strides = array<i32>} : memref<1x64x128xbf16, #tpu.memory_space<vmem>>, vector<1x8x128xbf16>,
    return
  }
  func.func @transform_0(%arg0: i32) -> (i32, i32, i32) {
    %c0_i32 = arith.constant 0 : i32
    %c0_i32_0 = arith.constant 0 : i32
    %c0_i32_1 = arith.constant 0 : i32
    return %arg0, %c0_i32, %c0_i32_0 : i32, i32, i32
  }
  func.func @transform_1(%arg0: i32) -> (i32, i32) {
    %c0_i32 = arith.constant 0 : i32
    %c0_i32_0 = arith.constant 0 : i32
    %c0_i32_1 = arith.constant 0 : i32
    return %c0_i32, %c0_i32_0 : i32, i32
  }
  func.func @transform_2(%arg0: i32) -> (i32, i32, i32) {
    %c0_i32 = arith.constant 0 : i32
    %c0_i32_0 = arith.constant 0 : i32
    %c0_i32_1 = arith.constant 0 : i32
    %c0_i32_2 = arith.constant 0 : i32
    return %c0_i32, %c0_i32_0, %c0_i32_1 : i32, i32, i32
  }
  func.func @transform_3(%arg0: i32) -> (i32, i32) {
    %c0_i32 = arith.constant 0 : i32
    %c0_i32_0 = arith.constant 0 : i32
    %c0_i32_1 = arith.constant 0 : i32
    return %c0_i32, %c0_i32_0 : i32, i32
  }
  func.func @transform_4(%arg0: i32) -> (i32, i32, i32) {
    %c0_i32 = arith.constant 0 : i32
    %c0_i32_0 = arith.constant 0 : i32
    %c0_i32_1 = arith.constant 0 : i32
    return %arg0, %c0_i32, %c0_i32_0 : i32, i32, i32
  }
}

module attributes {stable_mosaic.version = 11 : i64} {
  func.func @_bottleneck_kernel(%arg0: i32, %arg1: memref<1x64x128xbf16, #tpu.memory_space<vmem>>, %arg2: memref<128x128xbf16, #tpu.memory_space<vmem>>, %arg3: memref<9x1x128xf32, #tpu.memory_space<vmem>>, %arg4: memref<128x128xbf16, #tpu.memory_space<vmem>>, %arg5: memref<1x16x128xbf16, #tpu.memory_space<vmem>>, %arg6: memref<36x128xf32, #tpu.memory_space<vmem>>) attributes {dimension_semantics = [#tpu.dimension_semantics<parallel>], iteration_bounds = array<i64: 2>, scalar_prefetch = 0 : i64, scratch_operands = 1 : i64, tpu.core_type = #tpu.core_type<tc>, window_params = [{transform_indices = @transform_0, window_bounds = array<i64: 1, 64, 128>}, {pipeline_mode = #tpu.pipeline_mode<synchronous>, transform_indices = @transform_1, window_bounds = array<i64: 128, 128>}, {pipeline_mode = #tpu.pipeline_mode<synchronous>, transform_indices = @transform_2, window_bounds = array<i64: 9, 1, 128>}, {pipeline_mode = #tpu.pipeline_mode<synchronous>, transform_indices = @transform_3, window_bounds = array<i64: 128, 128>}, {transform_indices = @transform_4, window_bounds = array<i64: 1, 16, 128>}]} {
    %cst = arith.constant 0.000000e+00 : f32
    %0 = vector.broadcast %cst : f32 to vector<7x128xf32>
    %c0 = arith.constant 0 : index
    %c0_0 = arith.constant 0 : index
    %1 = vector.load %arg6[%c0, %c0_0] : memref<36x128xf32, #tpu.memory_space<vmem>>, vector<7x128xf32>
    tpu.vector_store %arg6[%c0, %c0_0], %0 {strides = array<i32>} : memref<36x128xf32, #tpu.memory_space<vmem>>, vector<7x128xf32>,
    %cst_1 = arith.constant 0.000000e+00 : f32
    %2 = vector.broadcast %cst_1 : f32 to vector<2x128xf32>
    %c11 = arith.constant 11 : index
    %c0_2 = arith.constant 0 : index
    %3 = vector.load %arg6[%c11, %c0_2] : memref<36x128xf32, #tpu.memory_space<vmem>>, vector<2x128xf32>
    tpu.vector_store %arg6[%c11, %c0_2], %2 {strides = array<i32>} : memref<36x128xf32, #tpu.memory_space<vmem>>, vector<2x128xf32>,
    %c17 = arith.constant 17 : index
    %c0_3 = arith.constant 0 : index
    %4 = vector.load %arg6[%c17, %c0_3] : memref<36x128xf32, #tpu.memory_space<vmem>>, vector<2x128xf32>
    tpu.vector_store %arg6[%c17, %c0_3], %2 {strides = array<i32>} : memref<36x128xf32, #tpu.memory_space<vmem>>, vector<2x128xf32>,
    %c23 = arith.constant 23 : index
    %c0_4 = arith.constant 0 : index
    %5 = vector.load %arg6[%c23, %c0_4] : memref<36x128xf32, #tpu.memory_space<vmem>>, vector<2x128xf32>
    tpu.vector_store %arg6[%c23, %c0_4], %2 {strides = array<i32>} : memref<36x128xf32, #tpu.memory_space<vmem>>, vector<2x128xf32>,
    %c29 = arith.constant 29 : index
    %c0_5 = arith.constant 0 : index
    %6 = vector.load %arg6[%c29, %c0_5] : memref<36x128xf32, #tpu.memory_space<vmem>>, vector<2x128xf32>
    tpu.vector_store %arg6[%c29, %c0_5], %2 {strides = array<i32>} : memref<36x128xf32, #tpu.memory_space<vmem>>, vector<2x128xf32>,
    %cst_6 = arith.constant 0.000000e+00 : f32
    %7 = vector.broadcast %cst_6 : f32 to vector<5x128xf32>
    %c31 = arith.constant 31 : index
    %c0_7 = arith.constant 0 : index
    %8 = vector.load %arg6[%c31, %c0_7] : memref<36x128xf32, #tpu.memory_space<vmem>>, vector<5x128xf32>
    tpu.vector_store %arg6[%c31, %c0_7], %7 {strides = array<i32>} : memref<36x128xf32, #tpu.memory_space<vmem>>, vector<5x128xf32>,
    %c0_8 = arith.constant 0 : index
    %c0_9 = arith.constant 0 : index
    %c0_10 = arith.constant 0 : index
    %9 = vector.load %arg1[%c0_8, %c0_9, %c0_10] : memref<1x64x128xbf16, #tpu.memory_space<vmem>>, vector<1x64x128xbf16>
    %10 = vector.shape_cast %9 : vector<1x64x128xbf16> to vector<64x128xbf16>
    %c0_11 = arith.constant 0 : index
    %c0_12 = arith.constant 0 : index
    %11 = vector.load %arg2[%c0_11, %c0_12] : memref<128x128xbf16, #tpu.memory_space<vmem>>, vector<128x128xbf16>
    %cst_13 = arith.constant dense<0.000000e+00> : vector<64x128xf32>
    %12 = tpu.matmul %10, %11, %cst_13 {dimension_numbers = #tpu.dot_dimension_numbers<[1], [0], [0], [1], [0, 0, 1, 1], [], []>} : vector<64x128xbf16>, vector<128x128xbf16>, vector<64x128xf32> -> vector<64x128xf32>
    %cst_14 = arith.constant 0.000000e+00 : f32
    %13 = vector.broadcast %cst_14 : f32 to vector<64x128xf32>
    %14 = arith.maximumf %12, %13 : vector<64x128xf32>
    %15 = vector.extract_strided_slice %14 {offsets = [0, 0], sizes = [16, 128], strides = [1, 1]} : vector<64x128xf32> to vector<16x128xf32>
    %16 = vector.extract_strided_slice %14 {offsets = [16, 0], sizes = [16, 128], strides = [1, 1]} : vector<64x128xf32> to vector<16x128xf32>
    %17 = arith.maximumf %15, %16 : vector<16x128xf32>
    %18 = vector.extract_strided_slice %14 {offsets = [32, 0], sizes = [16, 128], strides = [1, 1]} : vector<64x128xf32> to vector<16x128xf32>
    %19 = vector.extract_strided_slice %14 {offsets = [48, 0], sizes = [16, 128], strides = [1, 1]} : vector<64x128xf32> to vector<16x128xf32>
    %20 = arith.maximumf %18, %19 : vector<16x128xf32>
    %21 = arith.maximumf %17, %20 : vector<16x128xf32>
    %22 = vector.extract_strided_slice %21 {offsets = [0, 0], sizes = [4, 128], strides = [1, 1]} : vector<16x128xf32> to vector<4x128xf32>
    %c7 = arith.constant 7 : index
    %c0_15 = arith.constant 0 : index
    %23 = vector.load %arg6[%c7, %c0_15] : memref<36x128xf32, #tpu.memory_space<vmem>>, vector<4x128xf32>
    tpu.vector_store %arg6[%c7, %c0_15], %22 {strides = array<i32>} : memref<36x128xf32, #tpu.memory_space<vmem>>, vector<4x128xf32>,
    %24 = vector.extract_strided_slice %21 {offsets = [4, 0], sizes = [4, 128], strides = [1, 1]} : vector<16x128xf32> to vector<4x128xf32>
    %c13 = arith.constant 13 : index
    %c0_16 = arith.constant 0 : index
    %25 = vector.load %arg6[%c13, %c0_16] : memref<36x128xf32, #tpu.memory_space<vmem>>, vector<4x128xf32>
    tpu.vector_store %arg6[%c13, %c0_16], %24 {strides = array<i32>} : memref<36x128xf32, #tpu.memory_space<vmem>>, vector<4x128xf32>,
    %26 = vector.extract_strided_slice %21 {offsets = [8, 0], sizes = [4, 128], strides = [1, 1]} : vector<16x128xf32> to vector<4x128xf32>
    %c19 = arith.constant 19 : index
    %c0_17 = arith.constant 0 : index
    %27 = vector.load %arg6[%c19, %c0_17] : memref<36x128xf32, #tpu.memory_space<vmem>>, vector<4x128xf32>
    tpu.vector_store %arg6[%c19, %c0_17], %26 {strides = array<i32>} : memref<36x128xf32, #tpu.memory_space<vmem>>, vector<4x128xf32>,
    %28 = vector.extract_strided_slice %21 {offsets = [12, 0], sizes = [4, 128], strides = [1, 1]} : vector<16x128xf32> to vector<4x128xf32>
    %c25 = arith.constant 25 : index
    %c0_18 = arith.constant 0 : index
    %29 = vector.load %arg6[%c25, %c0_18] : memref<36x128xf32, #tpu.memory_space<vmem>>, vector<4x128xf32>
    tpu.vector_store %arg6[%c25, %c0_18], %28 {strides = array<i32>} : memref<36x128xf32, #tpu.memory_space<vmem>>, vector<4x128xf32>,
    %c0_19 = arith.constant 0 : index
    %c0_20 = arith.constant 0 : index
    %c0_21 = arith.constant 0 : index
    %30 = vector.load %arg3[%c0_19, %c0_20, %c0_21] : memref<9x1x128xf32, #tpu.memory_space<vmem>>, vector<1x1x128xf32>
    %31 = vector.shape_cast %30 : vector<1x1x128xf32> to vector<1x128xf32>
    %c1 = arith.constant 1 : index
    %c0_22 = arith.constant 0 : index
    %c0_23 = arith.constant 0 : index
    %32 = vector.load %arg3[%c1, %c0_22, %c0_23] : memref<9x1x128xf32, #tpu.memory_space<vmem>>, vector<1x1x128xf32>
    %33 = vector.shape_cast %32 : vector<1x1x128xf32> to vector<1x128xf32>
    %c2 = arith.constant 2 : index
    %c0_24 = arith.constant 0 : index
    %c0_25 = arith.constant 0 : index
    %34 = vector.load %arg3[%c2, %c0_24, %c0_25] : memref<9x1x128xf32, #tpu.memory_space<vmem>>, vector<1x1x128xf32>
    %35 = vector.shape_cast %34 : vector<1x1x128xf32> to vector<1x128xf32>
    %c3 = arith.constant 3 : index
    %c0_26 = arith.constant 0 : index
    %c0_27 = arith.constant 0 : index
    %36 = vector.load %arg3[%c3, %c0_26, %c0_27] : memref<9x1x128xf32, #tpu.memory_space<vmem>>, vector<1x1x128xf32>
    %37 = vector.shape_cast %36 : vector<1x1x128xf32> to vector<1x128xf32>
    %c4 = arith.constant 4 : index
    %c0_28 = arith.constant 0 : index
    %c0_29 = arith.constant 0 : index
    %38 = vector.load %arg3[%c4, %c0_28, %c0_29] : memref<9x1x128xf32, #tpu.memory_space<vmem>>, vector<1x1x128xf32>
    %39 = vector.shape_cast %38 : vector<1x1x128xf32> to vector<1x128xf32>
    %c5 = arith.constant 5 : index
    %c0_30 = arith.constant 0 : index
    %c0_31 = arith.constant 0 : index
    %40 = vector.load %arg3[%c5, %c0_30, %c0_31] : memref<9x1x128xf32, #tpu.memory_space<vmem>>, vector<1x1x128xf32>
    %41 = vector.shape_cast %40 : vector<1x1x128xf32> to vector<1x128xf32>
    %c6 = arith.constant 6 : index
    %c0_32 = arith.constant 0 : index
    %c0_33 = arith.constant 0 : index
    %42 = vector.load %arg3[%c6, %c0_32, %c0_33] : memref<9x1x128xf32, #tpu.memory_space<vmem>>, vector<1x1x128xf32>
    %43 = vector.shape_cast %42 : vector<1x1x128xf32> to vector<1x128xf32>
    %c7_34 = arith.constant 7 : index
    %c0_35 = arith.constant 0 : index
    %c0_36 = arith.constant 0 : index
    %44 = vector.load %arg3[%c7_34, %c0_35, %c0_36] : memref<9x1x128xf32, #tpu.memory_space<vmem>>, vector<1x1x128xf32>
    %45 = vector.shape_cast %44 : vector<1x1x128xf32> to vector<1x128xf32>
    %c8 = arith.constant 8 : index
    %c0_37 = arith.constant 0 : index
    %c0_38 = arith.constant 0 : index
    %46 = vector.load %arg3[%c8, %c0_37, %c0_38] : memref<9x1x128xf32, #tpu.memory_space<vmem>>, vector<1x1x128xf32>
    %47 = vector.shape_cast %46 : vector<1x1x128xf32> to vector<1x128xf32>
    %c0_39 = arith.constant 0 : index
    %c0_40 = arith.constant 0 : index
    %48 = vector.load %arg6[%c0_39, %c0_40] : memref<36x128xf32, #tpu.memory_space<vmem>>, vector<22x128xf32>
    %49 = vector.broadcast %31 : vector<1x128xf32> to vector<22x128xf32>
    %50 = arith.mulf %48, %49 : vector<22x128xf32>
    %c1_41 = arith.constant 1 : index
    %c0_42 = arith.constant 0 : index
    %51 = vector.load %arg6[%c1_41, %c0_42] : memref<36x128xf32, #tpu.memory_space<vmem>>, vector<22x128xf32>
    %52 = vector.broadcast %33 : vector<1x128xf32> to vector<22x128xf32>
    %53 = arith.mulf %51, %52 : vector<22x128xf32>
    %54 = arith.addf %50, %53 : vector<22x128xf32>
    %c2_43 = arith.constant 2 : index
    %c0_44 = arith.constant 0 : index
    %55 = vector.load %arg6[%c2_43, %c0_44] : memref<36x128xf32, #tpu.memory_space<vmem>>, vector<22x128xf32>
    %56 = vector.broadcast %35 : vector<1x128xf32> to vector<22x128xf32>
    %57 = arith.mulf %55, %56 : vector<22x128xf32>
    %58 = arith.addf %54, %57 : vector<22x128xf32>
    %c6_45 = arith.constant 6 : index
    %c0_46 = arith.constant 0 : index
    %59 = vector.load %arg6[%c6_45, %c0_46] : memref<36x128xf32, #tpu.memory_space<vmem>>, vector<22x128xf32>
    %60 = vector.broadcast %37 : vector<1x128xf32> to vector<22x128xf32>
    %61 = arith.mulf %59, %60 : vector<22x128xf32>
    %62 = arith.addf %58, %61 : vector<22x128xf32>
    %c7_47 = arith.constant 7 : index
    %c0_48 = arith.constant 0 : index
    %63 = vector.load %arg6[%c7_47, %c0_48] : memref<36x128xf32, #tpu.memory_space<vmem>>, vector<22x128xf32>
    %64 = vector.broadcast %39 : vector<1x128xf32> to vector<22x128xf32>
    %65 = arith.mulf %63, %64 : vector<22x128xf32>
    %66 = arith.addf %62, %65 : vector<22x128xf32>
    %c8_49 = arith.constant 8 : index
    %c0_50 = arith.constant 0 : index
    %67 = vector.load %arg6[%c8_49, %c0_50] : memref<36x128xf32, #tpu.memory_space<vmem>>, vector<22x128xf32>
    %68 = vector.broadcast %41 : vector<1x128xf32> to vector<22x128xf32>
    %69 = arith.mulf %67, %68 : vector<22x128xf32>
    %70 = arith.addf %66, %69 : vector<22x128xf32>
    %c12 = arith.constant 12 : index
    %c0_51 = arith.constant 0 : index
    %71 = vector.load %arg6[%c12, %c0_51] : memref<36x128xf32, #tpu.memory_space<vmem>>, vector<22x128xf32>
    %72 = vector.broadcast %43 : vector<1x128xf32> to vector<22x128xf32>
    %73 = arith.mulf %71, %72 : vector<22x128xf32>
    %74 = arith.addf %70, %73 : vector<22x128xf32>
    %c13_52 = arith.constant 13 : index
    %c0_53 = arith.constant 0 : index
    %75 = vector.load %arg6[%c13_52, %c0_53] : memref<36x128xf32, #tpu.memory_space<vmem>>, vector<22x128xf32>
    %76 = vector.broadcast %45 : vector<1x128xf32> to vector<22x128xf32>
    %77 = arith.mulf %75, %76 : vector<22x128xf32>
    %78 = arith.addf %74, %77 : vector<22x128xf32>
    %c14 = arith.constant 14 : index
    %c0_54 = arith.constant 0 : index
    %79 = vector.load %arg6[%c14, %c0_54] : memref<36x128xf32, #tpu.memory_space<vmem>>, vector<22x128xf32>
    %80 = vector.broadcast %47 : vector<1x128xf32> to vector<22x128xf32>
    %81 = arith.mulf %79, %80 : vector<22x128xf32>
    %82 = arith.addf %78, %81 : vector<22x128xf32>
    %cst_55 = arith.constant 0.000000e+00 : f32
    %83 = vector.broadcast %cst_55 : f32 to vector<22x128xf32>
    %84 = arith.maximumf %82, %83 : vector<22x128xf32>
    %85 = arith.truncf %84 : vector<22x128xf32> to vector<22x128xbf16>
    %c0_56 = arith.constant 0 : index
    %c0_57 = arith.constant 0 : index
    %86 = vector.load %arg4[%c0_56, %c0_57] : memref<128x128xbf16, #tpu.memory_space<vmem>>, vector<128x128xbf16>
    %cst_58 = arith.constant dense<0.000000e+00> : vector<22x128xf32>
    %87 = tpu.matmul %85, %86, %cst_58 {dimension_numbers = #tpu.dot_dimension_numbers<[1], [0], [0], [1], [0, 0, 1, 1], [], []>} : vector<22x128xbf16>, vector<128x128xbf16>, vector<22x128xf32> -> vector<22x128xf32>
    %88 = vector.extract_strided_slice %87 {offsets = [0, 0], sizes = [4, 128], strides = [1, 1]} : vector<22x128xf32> to vector<4x128xf32>
    %89 = arith.truncf %88 : vector<4x128xf32> to vector<4x128xbf16>
    %c0_59 = arith.constant 0 : index
    %c0_60 = arith.constant 0 : index
    %c0_61 = arith.constant 0 : index
    %90 = vector.load %arg5[%c0_59, %c0_60, %c0_61] : memref<1x16x128xbf16, #tpu.memory_space<vmem>>, vector<1x4x128xbf16>
    %91 = vector.shape_cast %90 : vector<1x4x128xbf16> to vector<4x128xbf16>
    %92 = vector.shape_cast %89 : vector<4x128xbf16> to vector<1x4x128xbf16>
    tpu.vector_store %arg5[%c0_59, %c0_60, %c0_61], %92 {strides = array<i32>} : memref<1x16x128xbf16, #tpu.memory_space<vmem>>, vector<1x4x128xbf16>,
    %93 = vector.extract_strided_slice %87 {offsets = [6, 0], sizes = [4, 128], strides = [1, 1]} : vector<22x128xf32> to vector<4x128xf32>
    %94 = arith.truncf %93 : vector<4x128xf32> to vector<4x128xbf16>
    %c0_62 = arith.constant 0 : index
    %c4_63 = arith.constant 4 : index
    %c0_64 = arith.constant 0 : index
    %95 = vector.load %arg5[%c0_62, %c4_63, %c0_64] : memref<1x16x128xbf16, #tpu.memory_space<vmem>>, vector<1x4x128xbf16>
    %96 = vector.shape_cast %95 : vector<1x4x128xbf16> to vector<4x128xbf16>
    %97 = vector.shape_cast %94 : vector<4x128xbf16> to vector<1x4x128xbf16>
    tpu.vector_store %arg5[%c0_62, %c4_63, %c0_64], %97 {strides = array<i32>} : memref<1x16x128xbf16, #tpu.memory_space<vmem>>, vector<1x4x128xbf16>,
    %98 = vector.extract_strided_slice %87 {offsets = [12, 0], sizes = [4, 128], strides = [1, 1]} : vector<22x128xf32> to vector<4x128xf32>
    %99 = arith.truncf %98 : vector<4x128xf32> to vector<4x128xbf16>
    %c0_65 = arith.constant 0 : index
    %c8_66 = arith.constant 8 : index
    %c0_67 = arith.constant 0 : index
    %100 = vector.load %arg5[%c0_65, %c8_66, %c0_67] : memref<1x16x128xbf16, #tpu.memory_space<vmem>>, vector<1x4x128xbf16>
    %101 = vector.shape_cast %100 : vector<1x4x128xbf16> to vector<4x128xbf16>
    %102 = vector.shape_cast %99 : vector<4x128xbf16> to vector<1x4x128xbf16>
    tpu.vector_store %arg5[%c0_65, %c8_66, %c0_67], %102 {strides = array<i32>} : memref<1x16x128xbf16, #tpu.memory_space<vmem>>, vector<1x4x128xbf16>,
    %103 = vector.extract_strided_slice %87 {offsets = [18, 0], sizes = [4, 128], strides = [1, 1]} : vector<22x128xf32> to vector<4x128xf32>
    %104 = arith.truncf %103 : vector<4x128xf32> to vector<4x128xbf16>
    %c0_68 = arith.constant 0 : index
    %c12_69 = arith.constant 12 : index
    %c0_70 = arith.constant 0 : index
    %105 = vector.load %arg5[%c0_68, %c12_69, %c0_70] : memref<1x16x128xbf16, #tpu.memory_space<vmem>>, vector<1x4x128xbf16>
    %106 = vector.shape_cast %105 : vector<1x4x128xbf16> to vector<4x128xbf16>
    %107 = vector.shape_cast %104 : vector<4x128xbf16> to vector<1x4x128xbf16>
    tpu.vector_store %arg5[%c0_68, %c12_69, %c0_70], %107 {strides = array<i32>} : memref<1x16x128xbf16, #tpu.memory_space<vmem>>, vector<1x4x128xbf16>,
    return
  }
  func.func @transform_0(%arg0: i32) -> (i32, i32, i32) {
    %c0_i32 = arith.constant 0 : i32
    %c0_i32_0 = arith.constant 0 : i32
    %c0_i32_1 = arith.constant 0 : i32
    return %arg0, %c0_i32, %c0_i32_0 : i32, i32, i32
  }
  func.func @transform_1(%arg0: i32) -> (i32, i32) {
    %c0_i32 = arith.constant 0 : i32
    %c0_i32_0 = arith.constant 0 : i32
    %c0_i32_1 = arith.constant 0 : i32
    return %c0_i32, %c0_i32_0 : i32, i32
  }
  func.func @transform_2(%arg0: i32) -> (i32, i32, i32) {
    %c0_i32 = arith.constant 0 : i32
    %c0_i32_0 = arith.constant 0 : i32
    %c0_i32_1 = arith.constant 0 : i32
    %c0_i32_2 = arith.constant 0 : i32
    return %c0_i32, %c0_i32_0, %c0_i32_1 : i32, i32, i32
  }
  func.func @transform_3(%arg0: i32) -> (i32, i32) {
    %c0_i32 = arith.constant 0 : i32
    %c0_i32_0 = arith.constant 0 : i32
    %c0_i32_1 = arith.constant 0 : i32
    return %c0_i32, %c0_i32_0 : i32, i32
  }
  func.func @transform_4(%arg0: i32) -> (i32, i32, i32) {
    %c0_i32 = arith.constant 0 : i32
    %c0_i32_0 = arith.constant 0 : i32
    %c0_i32_1 = arith.constant 0 : i32
    return %arg0, %c0_i32, %c0_i32_0 : i32, i32, i32
  }
}

module attributes {stable_mosaic.version = 11 : i64} {
  func.func @_matmul_kernel(%arg0: i32, %arg1: memref<32x128xbf16, #tpu.memory_space<vmem>>, %arg2: memref<128x128xbf16, #tpu.memory_space<vmem>>, %arg3: memref<32x128xbf16, #tpu.memory_space<vmem>>) attributes {dimension_semantics = [#tpu.dimension_semantics<parallel>], iteration_bounds = array<i64: 1>, scalar_prefetch = 0 : i64, scratch_operands = 0 : i64, tpu.core_type = #tpu.core_type<tc>, window_params = [{transform_indices = @transform_0, window_bounds = array<i64: 32, 128>}, {pipeline_mode = #tpu.pipeline_mode<synchronous>, transform_indices = @transform_1, window_bounds = array<i64: 128, 128>}, {transform_indices = @transform_2, window_bounds = array<i64: 32, 128>}]} {
    %c0 = arith.constant 0 : index
    %c0_0 = arith.constant 0 : index
    %0 = vector.load %arg1[%c0, %c0_0] : memref<32x128xbf16, #tpu.memory_space<vmem>>, vector<32x128xbf16>
    %c0_1 = arith.constant 0 : index
    %c0_2 = arith.constant 0 : index
    %1 = vector.load %arg2[%c0_1, %c0_2] : memref<128x128xbf16, #tpu.memory_space<vmem>>, vector<128x128xbf16>
    %cst = arith.constant dense<0.000000e+00> : vector<32x128xf32>
    %2 = tpu.matmul %0, %1, %cst {dimension_numbers = #tpu.dot_dimension_numbers<[1], [0], [0], [1], [0, 0, 1, 1], [], []>} : vector<32x128xbf16>, vector<128x128xbf16>, vector<32x128xf32> -> vector<32x128xf32>
    %cst_3 = arith.constant 0.000000e+00 : f32
    %3 = vector.broadcast %cst_3 : f32 to vector<32x128xf32>
    %4 = arith.maximumf %2, %3 : vector<32x128xf32>
    %5 = arith.truncf %4 : vector<32x128xf32> to vector<32x128xbf16>
    %c0_4 = arith.constant 0 : index
    %c0_5 = arith.constant 0 : index
    %6 = vector.load %arg3[%c0_4, %c0_5] : memref<32x128xbf16, #tpu.memory_space<vmem>>, vector<32x128xbf16>
    tpu.vector_store %arg3[%c0_4, %c0_5], %5 {strides = array<i32>} : memref<32x128xbf16, #tpu.memory_space<vmem>>, vector<32x128xbf16>,
    return
  }
  func.func @transform_0(%arg0: i32) -> (i32, i32) {
    %c0_i32 = arith.constant 0 : i32
    %c0_i32_0 = arith.constant 0 : i32
    return %arg0, %c0_i32 : i32, i32
  }
  func.func @transform_1(%arg0: i32) -> (i32, i32) {
    %c0_i32 = arith.constant 0 : i32
    %c0_i32_0 = arith.constant 0 : i32
    %c0_i32_1 = arith.constant 0 : i32
    return %c0_i32, %c0_i32_0 : i32, i32
  }
  func.func @transform_2(%arg0: i32) -> (i32, i32) {
    %c0_i32 = arith.constant 0 : i32
    %c0_i32_0 = arith.constant 0 : i32
    return %arg0, %c0_i32 : i32, i32
  }
}

module attributes {stable_mosaic.version = 11 : i64} {
  func.func @_head_kernel(%arg0: i32, %arg1: memref<2x128xbf16, #tpu.memory_space<vmem>>, %arg2: memref<128x128xbf16, #tpu.memory_space<vmem>>, %arg3: memref<2x128xf32, #tpu.memory_space<vmem>>) attributes {dimension_semantics = [#tpu.dimension_semantics<parallel>], iteration_bounds = array<i64: 1>, scalar_prefetch = 0 : i64, scratch_operands = 0 : i64, tpu.core_type = #tpu.core_type<tc>, window_params = [{transform_indices = @transform_0, window_bounds = array<i64: 2, 128>}, {pipeline_mode = #tpu.pipeline_mode<synchronous>, transform_indices = @transform_1, window_bounds = array<i64: 128, 128>}, {transform_indices = @transform_2, window_bounds = array<i64: 2, 128>}]} {
    %c0 = arith.constant 0 : index
    %c0_0 = arith.constant 0 : index
    %0 = vector.load %arg1[%c0, %c0_0] : memref<2x128xbf16, #tpu.memory_space<vmem>>, vector<2x128xbf16>
    %c0_1 = arith.constant 0 : index
    %c0_2 = arith.constant 0 : index
    %1 = vector.load %arg2[%c0_1, %c0_2] : memref<128x128xbf16, #tpu.memory_space<vmem>>, vector<128x128xbf16>
    %cst = arith.constant dense<0.000000e+00> : vector<2x128xf32>
    %2 = tpu.matmul %0, %1, %cst {dimension_numbers = #tpu.dot_dimension_numbers<[1], [0], [0], [1], [0, 0, 1, 1], [], []>} : vector<2x128xbf16>, vector<128x128xbf16>, vector<2x128xf32> -> vector<2x128xf32>
    %3 = arith.mulf %2, %2 : vector<2x128xf32>
    %cst_3 = arith.constant dense<0.000000e+00> : vector<2xf32>
    %4 = vector.multi_reduction <add>, %3, %cst_3 [1] : vector<2x128xf32> to vector<2xf32>
    %5 = vector.shape_cast %4 : vector<2xf32> to vector<2x1xf32>
    %cst_4 = arith.constant 1.000000e-24 : f32
    %6 = vector.broadcast %cst_4 : f32 to vector<2x1xf32>
    %7 = arith.maximumf %5, %6 : vector<2x1xf32>
    %8 = math.rsqrt %7 : vector<2x1xf32>
    %9 = vector.broadcast %8 : vector<2x1xf32> to vector<2x128xf32>
    %10 = arith.mulf %2, %9 : vector<2x128xf32>
    %c0_5 = arith.constant 0 : index
    %c0_6 = arith.constant 0 : index
    %11 = vector.load %arg3[%c0_5, %c0_6] : memref<2x128xf32, #tpu.memory_space<vmem>>, vector<2x128xf32>
    tpu.vector_store %arg3[%c0_5, %c0_6], %10 {strides = array<i32>} : memref<2x128xf32, #tpu.memory_space<vmem>>, vector<2x128xf32>,
    return
  }
  func.func @transform_0(%arg0: i32) -> (i32, i32) {
    %c0_i32 = arith.constant 0 : i32
    %c0_i32_0 = arith.constant 0 : i32
    return %arg0, %c0_i32 : i32, i32
  }
  func.func @transform_1(%arg0: i32) -> (i32, i32) {
    %c0_i32 = arith.constant 0 : i32
    %c0_i32_0 = arith.constant 0 : i32
    %c0_i32_1 = arith.constant 0 : i32
    return %c0_i32, %c0_i32_0 : i32, i32
  }
  func.func @transform_2(%arg0: i32) -> (i32, i32) {
    %c0_i32 = arith.constant 0 : i32
    %c0_i32_0 = arith.constant 0 : i32
    return %arg0, %c0_i32 : i32, i32
  }
}

</mosaic_0001>

<llo_original>
// kernel: _lambda_.7
$region0: #{_lambda_.7}
  #allocation0 [shape = 'u32[]', space=smem, size = 0x4, offset = 0x4, fixed_abs, tag = 'smem constant byte address 0x4 - core index']
  #allocation1 [shape = 'u32[72,128]{1,0:T(1,128)}', space=vmem, size = 0x9000, scoped, tag = 'internal scratch']
  %s0 = inlined_call_operand.vmem [shape: bf16[512,27], index: 0, kind: input, shape index: {}]
  %s1 = inlined_call_operand.vmem [shape: bf16[27,128], index: 1, kind: input, shape index: {}]
  %s2 = inlined_call_operand.vmem [shape: bf16[512,128], index: 2, kind: output, shape index: {}]
  %s3 = sld [smem:[#allocation0]]
  $region41: #{_lambda_.7} parent=0
    _
  %s5 = ssub.s32 1, %s3
  %s6 = scalar_select 0, %s5, %s3
  loop: start=0, step=1, limit=4
  $region2: #{_lambda_.7} parent=0 // loop_pre_header
    _
  $region3: #{_lambda_.7} parent=0 // loop_header
    %s8 = sphi 0, %s12
    %p9 = scmp.ge.s32.totalorder %s8, 4
    %s18 = sphi 0, %s20
    %s21 = sphi 0, %s18
    %s22 = sphi 0, %s21
    %s38 = sphi 0, %s22
    %s42 = sphi 0, %s42
    %s44 = sphi 0, %s42
    %s45 = sphi 0, %s44
    %s59 = sphi 0, %s45
    %s65 = sphi 0, %s67
    %s68 = sphi 0, %s65
    %s69 = sphi 0, %s68
    %s85 = sphi 0, %s69
  $region4: #{_lambda_.7} parent=0 // loop_header_branch
    %11 = sbr.rel (%p9) target = $region8
  $region5: #{_lambda_.7} parent=0 // loop_body
    %s13 = ssub.s32 %s8, 1
    %s14 = ssub.s32 %s8, 2
    %s15 = sadd.s32 %s8, 1
    %s16 = ssub.s32 %s8, %s15
    %p17 = scmp.eq.s32.totalorder %s16, 0
    %s19 = sadd.s32 %s18, 1
    %s20 = scalar_select %p17, %s18, %s19
    %p23 = pneg %p17
    %p24 = scmp.eq.s32.totalorder %s8, 1
    %p25 = por %p23, %p24
    %p26 = scmp.ne.s32.totalorder %s18, %s21
    %p27 = scmp.eq.s32.totalorder %s8, 0
    %p28 = por %p26, %p27
    %p29 = scmp.ne.s32.totalorder %s18, %s21
    %p30 = scmp.eq.s32.totalorder %s13, 1
    %p31 = por %p29, %p30
    %p32 = scmp.ne.s32.totalorder %s21, %s22
    %p33 = scmp.eq.s32.totalorder %s13, 0
    %p34 = por %p32, %p33
    %p35 = scmp.ne.s32.totalorder %s21, %s22
    %p36 = scmp.eq.s32.totalorder %s14, 1
    %p37 = por %p35, %p36
    %p39 = scmp.ne.s32.totalorder %s22, %s38
    %p40 = scmp.eq.s32.totalorder %s14, 0
    %p41 = por %p39, %p40
    %s43 = sadd.s32 %s42, 1
    %p46 = scmp.eq.s32.totalorder %s8, 1
    %p47 = scmp.ne.s32.totalorder %s42, %s44
    %p48 = scmp.eq.s32.totalorder %s8, 0
    %p49 = por %p47, %p48
    %p50 = scmp.ne.s32.totalorder %s42, %s44
    %p51 = scmp.eq.s32.totalorder %s13, 1
    %p52 = por %p50, %p51
    %p53 = scmp.ne.s32.totalorder %s44, %s45
    %p54 = scmp.eq.s32.totalorder %s13, 0
    %p55 = por %p53, %p54
    %p56 = scmp.ne.s32.totalorder %s44, %s45
    %p57 = scmp.eq.s32.totalorder %s14, 1
    %p58 = por %p56, %p57
    %p60 = scmp.ne.s32.totalorder %s45, %s59
    %p61 = scmp.eq.s32.totalorder %s14, 0
    %p62 = por %p60, %p61
    %s63 = ssub.s32 %s8, %s15
    %p64 = scmp.eq.s32.totalorder %s63, 0
    %s66 = sadd.s32 %s65, 1
    %s67 = scalar_select %p64, %s65, %s66
    %p70 = pneg %p64
    %p71 = scmp.eq.s32.totalorder %s8, 1
    %p72 = por %p70, %p71
    %p73 = scmp.ne.s32.totalorder %s65, %s68
    %p74 = scmp.eq.s32.totalorder %s8, 0
    %p75 = por %p73, %p74
    %p76 = scmp.ne.s32.totalorder %s65, %s68
    %p77 = scmp.eq.s32.totalorder %s13, 1
    %p78 = por %p76, %p77
    %p79 = scmp.ne.s32.totalorder %s68, %s69
    %p80 = scmp.eq.s32.totalorder %s13, 0
    %p81 = por %p79, %p80
    %p82 = scmp.ne.s32.totalorder %s68, %s69
    %p83 = scmp.eq.s32.totalorder %s14, 1
    %p84 = por %p82, %p83
    %p86 = scmp.ne.s32.totalorder %s69, %s85
    %p87 = scmp.eq.s32.totalorder %s14, 0
    %p88 = por %p86, %p87
    %p89 = scmp.le.s32.totalorder 1, %s8
    %p90 = scmp.lt.s32.totalorder %s8, 3
    %p91 = pnand %p89, %p90
    %p92 = pneg %p91
    // Predicated region
    $region9: #{_lambda_.7} parent=5 // pred_check
      _
    $region10: #{_lambda_.7} parent=5 // pred_check_branch
      %94 = sbr.rel (%p91) target = $region12
    $region11: #{_lambda_.7} parent=5 // pred_region
      %s95 = ssub.s32 %s8, 1
      // Predicated region
      $region13: #{_lambda_.7} parent=11 // pred_check
        %p96 = pneg %p55
      $region14: #{_lambda_.7} parent=11 // pred_check_branch
        %98 = sbr.rel (%p96) target = $region16
      $region15: #{_lambda_.7} parent=11 // pred_region
        _
      $region16: #{_lambda_.7} parent=11 // pred_fallthru
        _
    $region12: #{_lambda_.7} parent=5 // pred_fallthru
      _
    %p99 = scmp.lt.s32.totalorder %s8, 2
    // Predicated region
    $region17: #{_lambda_.7} parent=5 // pred_check
      %p100 = pneg %p99
    $region18: #{_lambda_.7} parent=5 // pred_check_branch
      %102 = sbr.rel (%p100) target = $region20
    $region19: #{_lambda_.7} parent=5 // pred_region
      // Predicated region
      $region21: #{_lambda_.7} parent=19 // pred_check
        %p103 = pneg %p28
      $region22: #{_lambda_.7} parent=19 // pred_check_branch
        %105 = sbr.rel (%p103) target = $region24
      $region23: #{_lambda_.7} parent=19 // pred_region
        %s106 = smul.u32 32, %s8
        %p107 = scmp.lt.s32.totalorder %s106, 63
        %s108 = scalar_select %p107, %s106, 63
        %s109 = smul.addr %s108, 4
        %s110 = scalar_lea.vmem %s0, %s109
        %s111 = smul.u32 32, %s8
      $region24: #{_lambda_.7} parent=19 // pred_fallthru
        _
    $region20: #{_lambda_.7} parent=5 // pred_fallthru
      _
    %p112 = scmp.le.s32.totalorder 1, %s8
    %p113 = scmp.lt.s32.totalorder %s8, 3
    %p114 = pnand %p112, %p113
    %p115 = pneg %p114
    // Predicated region
    $region25: #{_lambda_.7} parent=5 // pred_check
      _
    $region26: #{_lambda_.7} parent=5 // pred_check_branch
      %117 = sbr.rel (%p114) target = $region28
    $region27: #{_lambda_.7} parent=5 // pred_region
      %s118 = ssub.s32 %s8, 1
      %s119 = smul.u32 32, %s13
      %p120 = scmp.lt.s32.totalorder %s119, 63
      %s121 = scalar_select %p120, %s119, 63
      %s122 = smul.addr %s121, 4
      %s123 = scalar_lea.vmem %s0, %s122
      %p124 = pneg %p34
      %p125 = pneg %p31
      %p126 = pneg %p55
      %p127 = pneg %p52
      %p128 = pneg %p81
      %p129 = pneg %p78
      %s130 = smul.u32 32, %s13
      %p131 = scmp.lt.s32.totalorder %s130, 63
      %s132 = scalar_select %p131, %s130, 63
      %s133 = smul.addr %s132, 4
      %s134 = scalar_lea.vmem %s2, %s133
      %s135 = smul.u32 32, %s13
      %p136 = scmp.lt.s32.totalorder %s135, 63
      %s137 = scalar_select %p136, %s135, 63
      %s138 = smul.addr %s137, 4
      %s139 = scalar_lea.vmem %s0, %s138
      %s140 = smul.u32 32, %s13
      %s141 = smul.u32 32, %s13
      %p142 = scmp.lt.s32.totalorder %s141, 63
      %s143 = scalar_select %p142, %s141, 63
      %s144 = smul.addr %s143, 4
      %s145 = scalar_lea.vmem %s2, %s144
      %s146 = smul.u32 32, %s13
      %v148 = vld [vmem:[%s139] sm:$0xf]
      %v149 = vld [vmem:[%s139 + $0x4] sm:$0xf]
      %v150 = vld [vmem:[%s139 + $0x8] sm:$0xf]
      %v151 = vld [vmem:[%s139 + $0xc] sm:$0xf]
      %v152 = vld [vmem:[%s139 + $0x10] sm:$0xf]
      %v153 = vld [vmem:[%s139 + $0x14] sm:$0xf]
      %v154 = vld [vmem:[%s139 + $0x18] sm:$0xf]
      %v155 = vld [vmem:[%s139 + $0x1c] sm:$0xf]
      %v156 = vld [vmem:[%s139 + $0x20] sm:$0xf]
      %v157 = vld [vmem:[%s139 + $0x24] sm:$0xf]
      %v158 = vld [vmem:[%s139 + $0x28] sm:$0xf]
      %v159 = vld [vmem:[%s139 + $0x2c] sm:$0xf]
      %v160 = vld [vmem:[%s139 + $0x30] sm:$0xf]
      %v161 = vld [vmem:[%s139 + $0x34] sm:$0xf]
      %v162 = vld [vmem:[%s139 + $0x38] sm:$0xf]
      %v163 = vld [vmem:[%s139 + $0x3c] sm:$0xf]
      %v164 = vld [vmem:[%s139 + $0x40] sm:$0xf]
      %v165 = vld [vmem:[%s139 + $0x44] sm:$0xf]
      %v166 = vld [vmem:[%s139 + $0x48] sm:$0xf]
      %v167 = vld [vmem:[%s139 + $0x4c] sm:$0xf]
      %v168 = vld [vmem:[%s139 + $0x50] sm:$0xf]
      %v169 = vld [vmem:[%s139 + $0x54] sm:$0xf]
      %v170 = vld [vmem:[%s139 + $0x58] sm:$0xf]
      %v171 = vld [vmem:[%s139 + $0x5c] sm:$0xf]
      %v172 = vld [vmem:[%s139 + $0x60] sm:$0xf]
      %v173 = vld [vmem:[%s139 + $0x64] sm:$0xf]
      %v174 = vld [vmem:[%s139 + $0x68] sm:$0xf]
      %v175 = vld [vmem:[%s139 + $0x6c] sm:$0xf]
      %v176 = vld [vmem:[%s139 + $0x70] sm:$0xf]
      %v177 = vld [vmem:[%s139 + $0x74] sm:$0xf]
      %v178 = vld [vmem:[%s139 + $0x78] sm:$0xf]
      %v179 = vld [vmem:[%s139 + $0x7c] sm:$0xf]
      %v180 = vld [vmem:[%s1] sm:$0xf]
      %v181 = vld [vmem:[%s1 + $0x4] sm:$0xf]
      %v182 = vld [vmem:[%s1 + $0x8] sm:$0xf]
      %v183 = vld [vmem:[%s1 + $0xc] sm:$0x3]
      %v216 = vunpack.c.l.b16 %v148
      %v217 = vunpack.c.l.b16 %v149
      %v218 = vunpack.c.l.b16 %v150
      %v219 = vunpack.c.l.b16 %v151
      %v220 = vunpack.c.l.b16 %v152
      %v221 = vunpack.c.l.b16 %v153
      %v222 = vunpack.c.l.b16 %v154
      %v223 = vunpack.c.l.b16 %v155
      %v224 = vunpack.c.l.b16 %v156
      %v225 = vunpack.c.l.b16 %v157
      %v226 = vunpack.c.l.b16 %v158
      %v227 = vunpack.c.l.b16 %v159
      %v228 = vunpack.c.l.b16 %v160
      %v229 = vunpack.c.l.b16 %v161
      %v230 = vunpack.c.l.b16 %v162
      %v231 = vunpack.c.l.b16 %v163
      %v232 = vunpack.c.l.b16 %v164
      %v233 = vunpack.c.l.b16 %v165
      %v234 = vunpack.c.l.b16 %v166
      %v235 = vunpack.c.l.b16 %v167
      %v236 = vunpack.c.l.b16 %v168
      %v237 = vunpack.c.l.b16 %v169
      %v238 = vunpack.c.l.b16 %v170
      %v239 = vunpack.c.l.b16 %v171
      %v240 = vunpack.c.l.b16 %v172
      %v241 = vunpack.c.l.b16 %v173
      %v242 = vunpack.c.l.b16 %v174
      %v243 = vunpack.c.l.b16 %v175
      %v244 = vunpack.c.l.b16 %v176
      %v245 = vunpack.c.l.b16 %v177
      %v246 = vunpack.c.l.b16 %v178
      %v247 = vunpack.c.l.b16 %v179
      %v248 = vpack.c.b16 %v217, %v216
      %v249 = vpack.c.b16 %v219, %v218
      %v250 = vpack.c.b16 %v221, %v220
      %v251 = vpack.c.b16 %v223, %v222
      %v252 = vpack.c.b16 %v225, %v224
      %v253 = vpack.c.b16 %v227, %v226
      %v254 = vpack.c.b16 %v229, %v228
      %v255 = vpack.c.b16 %v231, %v230
      %v256 = vpack.c.b16 %v233, %v232
      %v257 = vpack.c.b16 %v235, %v234
      %v258 = vpack.c.b16 %v237, %v236
      %v259 = vpack.c.b16 %v239, %v238
      %v260 = vpack.c.b16 %v241, %v240
      %v261 = vpack.c.b16 %v243, %v242
      %v262 = vpack.c.b16 %v245, %v244
      %v263 = vpack.c.b16 %v247, %v246
      %v268 = vunpack.c.l.b16 %v180
      %v269 = vunpack.c.l.b16 %v181
      %v270 = vunpack.c.l.b16 %v182
      %v271 = vunpack.c.l.b16 %v183
      %v272 = vpack.c.b16 %v269, %v268
      %v273 = vpack.c.b16 %v271, %v270
      %vm275 = vcmask 220160
      %v277 = vsel %vm275, %v248, 0
      %v280 = vsel %vm275, %v249, 0
      %v283 = vsel %vm275, %v250, 0
      %v286 = vsel %vm275, %v251, 0
      %v289 = vsel %vm275, %v252, 0
      %v292 = vsel %vm275, %v253, 0
      %v295 = vsel %vm275, %v254, 0
      %v298 = vsel %vm275, %v255, 0
      %v301 = vsel %vm275, %v256, 0
      %v304 = vsel %vm275, %v257, 0
      %v307 = vsel %vm275, %v258, 0
      %v310 = vsel %vm275, %v259, 0
      %v313 = vsel %vm275, %v260, 0
      %v316 = vsel %vm275, %v261, 0
      %v319 = vsel %vm275, %v262, 0
      %v322 = vsel %vm275, %v263, 0
      %vm324 = vcmask 1044480
      %vm325 = vcmask 1045504
      %v326 = vsel %vm324, 4294967295, 65535
      %v327 = vsel %vm325, %v326, 0
      %v329 = vand.u32 %v273, %v327
      %331 = vmatpush.bf16.msra.mxu0 0
      %332 = vmatpush.bf16.msra.mxu0 0
      %333 = vmatpush.bf16.msra.mxu0 0
      %334 = vmatpush.bf16.msra.mxu0 0
      %335 = vmatpush.bf16.msra.mxu0 0
      %336 = vmatpush.bf16.msra.mxu0 0
      %337 = vmatpush.bf16.msra.mxu0 %v329
      %338 = vmatpush.bf16.msra.mxu0 %v272
      %339 = vmatmul.bf16.gmra.mxu0 %v277
      %v340 = vpop.f32.mrf.mxu0
      %v341 = vadd.f32 0.0, %v340
      %v342 = vpop.f32.mrf.mxu0
      %v343 = vadd.f32 0.0, %v342
      %344 = vmatmul.bf16.gmra.mxu0 %v280
      %v345 = vpop.f32.mrf.mxu0
      %v346 = vadd.f32 0.0, %v345
      %v347 = vpop.f32.mrf.mxu0
      %v348 = vadd.f32 0.0, %v347
      %349 = vmatmul.bf16.gmra.mxu0 %v283
      %v350 = vpop.f32.mrf.mxu0
      %v351 = vadd.f32 0.0, %v350
      %v352 = vpop.f32.mrf.mxu0
      %v353 = vadd.f32 0.0, %v352
      %354 = vmatmul.bf16.gmra.mxu0 %v286
      %v355 = vpop.f32.mrf.mxu0
      %v356 = vadd.f32 0.0, %v355
      %v357 = vpop.f32.mrf.mxu0
      %v358 = vadd.f32 0.0, %v357
      %359 = vmatmul.bf16.gmra.mxu0 %v289
      %v360 = vpop.f32.mrf.mxu0
      %v361 = vadd.f32 0.0, %v360
      %v362 = vpop.f32.mrf.mxu0
      %v363 = vadd.f32 0.0, %v362
      %364 = vmatmul.bf16.gmra.mxu0 %v292
      %v365 = vpop.f32.mrf.mxu0
      %v366 = vadd.f32 0.0, %v365
      %v367 = vpop.f32.mrf.mxu0
      %v368 = vadd.f32 0.0, %v367
      %369 = vmatmul.bf16.gmra.mxu0 %v295
      %v370 = vpop.f32.mrf.mxu0
      %v371 = vadd.f32 0.0, %v370
      %v372 = vpop.f32.mrf.mxu0
      %v373 = vadd.f32 0.0, %v372
      %374 = vmatmul.bf16.gmra.mxu0 %v298
      %v375 = vpop.f32.mrf.mxu0
      %v376 = vadd.f32 0.0, %v375
      %v377 = vpop.f32.mrf.mxu0
      %v378 = vadd.f32 0.0, %v377
      %379 = vmatmul.bf16.gmra.mxu0 %v301
      %v380 = vpop.f32.mrf.mxu0
      %v381 = vadd.f32 0.0, %v380
      %v382 = vpop.f32.mrf.mxu0
      %v383 = vadd.f32 0.0, %v382
      %384 = vmatmul.bf16.gmra.mxu0 %v304
      %v385 = vpop.f32.mrf.mxu0
      %v386 = vadd.f32 0.0, %v385
      %v387 = vpop.f32.mrf.mxu0
      %v388 = vadd.f32 0.0, %v387
      %389 = vmatmul.bf16.gmra.mxu0 %v307
      %v390 = vpop.f32.mrf.mxu0
      %v391 = vadd.f32 0.0, %v390
      %v392 = vpop.f32.mrf.mxu0
      %v393 = vadd.f32 0.0, %v392
      %394 = vmatmul.bf16.gmra.mxu0 %v310
      %v395 = vpop.f32.mrf.mxu0
      %v396 = vadd.f32 0.0, %v395
      %v397 = vpop.f32.mrf.mxu0
      %v398 = vadd.f32 0.0, %v397
      %399 = vmatmul.bf16.gmra.mxu0 %v313
      %v400 = vpop.f32.mrf.mxu0
      %v401 = vadd.f32 0.0, %v400
      %v402 = vpop.f32.mrf.mxu0
      %v403 = vadd.f32 0.0, %v402
      %404 = vmatmul.bf16.gmra.mxu0 %v316
      %v405 = vpop.f32.mrf.mxu0
      %v406 = vadd.f32 0.0, %v405
      %v407 = vpop.f32.mrf.mxu0
      %v408 = vadd.f32 0.0, %v407
      %409 = vmatmul.bf16.gmra.mxu0 %v319
      %v410 = vpop.f32.mrf.mxu0
      %v411 = vadd.f32 0.0, %v410
      %v412 = vpop.f32.mrf.mxu0
      %v413 = vadd.f32 0.0, %v412
      %414 = vmatmul.bf16.gmra.mxu0 %v322
      %v415 = vpop.f32.mrf.mxu0
      %v416 = vadd.f32 0.0, %v415
      %v417 = vpop.f32.mrf.mxu0
      %v418 = vadd.f32 0.0, %v417
      %419 = vdwg.mxu0
      %v420 = vmax.f32 %v341, 0.0
      %v421 = vmax.f32 %v343, 0.0
      %v422 = vmax.f32 %v346, 0.0
      %v423 = vmax.f32 %v348, 0.0
      %v424 = vmax.f32 %v351, 0.0
      %v425 = vmax.f32 %v353, 0.0
      %v426 = vmax.f32 %v356, 0.0
      %v427 = vmax.f32 %v358, 0.0
      %v428 = vmax.f32 %v361, 0.0
      %v429 = vmax.f32 %v363, 0.0
      %v430 = vmax.f32 %v366, 0.0
      %v431 = vmax.f32 %v368, 0.0
      %v432 = vmax.f32 %v371, 0.0
      %v433 = vmax.f32 %v373, 0.0
      %v434 = vmax.f32 %v376, 0.0
      %v435 = vmax.f32 %v378, 0.0
      %v436 = vmax.f32 %v381, 0.0
      %v437 = vmax.f32 %v383, 0.0
      %v438 = vmax.f32 %v386, 0.0
      %v439 = vmax.f32 %v388, 0.0
      %v440 = vmax.f32 %v391, 0.0
      %v441 = vmax.f32 %v393, 0.0
      %v442 = vmax.f32 %v396, 0.0
      %v443 = vmax.f32 %v398, 0.0
      %v444 = vmax.f32 %v401, 0.0
      %v445 = vmax.f32 %v403, 0.0
      %v446 = vmax.f32 %v406, 0.0
      %v447 = vmax.f32 %v408, 0.0
      %v448 = vmax.f32 %v411, 0.0
      %v449 = vmax.f32 %v413, 0.0
      %v450 = vmax.f32 %v416, 0.0
      %v451 = vmax.f32 %v418, 0.0
      %v452 = vpack.c.bf16 %v420, %v420
      %v453 = vpack.c.bf16 %v421, %v421
      %v454 = vpack.c.bf16 %v422, %v422
      %v455 = vpack.c.bf16 %v423, %v423
      %v456 = vpack.c.bf16 %v424, %v424
      %v457 = vpack.c.bf16 %v425, %v425
      %v458 = vpack.c.bf16 %v426, %v426
      %v459 = vpack.c.bf16 %v427, %v427
      %v460 = vpack.c.bf16 %v428, %v428
      %v461 = vpack.c.bf16 %v429, %v429
      %v462 = vpack.c.bf16 %v430, %v430
      %v463 = vpack.c.bf16 %v431, %v431
      %v464 = vpack.c.bf16 %v432, %v432
      %v465 = vpack.c.bf16 %v433, %v433
      %v466 = vpack.c.bf16 %v434, %v434
      %v467 = vpack.c.bf16 %v435, %v435
      %v468 = vpack.c.bf16 %v436, %v436
      %v469 = vpack.c.bf16 %v437, %v437
      %v470 = vpack.c.bf16 %v438, %v438
      %v471 = vpack.c.bf16 %v439, %v439
      %v472 = vpack.c.bf16 %v440, %v440
      %v473 = vpack.c.bf16 %v441, %v441
      %v474 = vpack.c.bf16 %v442, %v442
      %v475 = vpack.c.bf16 %v443, %v443
      %v476 = vpack.c.bf16 %v444, %v444
      %v477 = vpack.c.bf16 %v445, %v445
      %v478 = vpack.c.bf16 %v446, %v446
      %v479 = vpack.c.bf16 %v447, %v447
      %v480 = vpack.c.bf16 %v448, %v448
      %v481 = vpack.c.bf16 %v449, %v449
      %v482 = vpack.c.bf16 %v450, %v450
      %v483 = vpack.c.bf16 %v451, %v451
      %484 = vst [vmem:[%s145] sm:$0xf] %v452
      %485 = vst [vmem:[%s145 + $0x4] sm:$0xf] %v453
      %486 = vst [vmem:[%s145 + $0x8] sm:$0xf] %v454
      %487 = vst [vmem:[%s145 + $0xc] sm:$0xf] %v455
      %488 = vst [vmem:[%s145 + $0x10] sm:$0xf] %v456
      %489 = vst [vmem:[%s145 + $0x14] sm:$0xf] %v457
      %490 = vst [vmem:[%s145 + $0x18] sm:$0xf] %v458
      %491 = vst [vmem:[%s145 + $0x1c] sm:$0xf] %v459
      %492 = vst [vmem:[%s145 + $0x20] sm:$0xf] %v460
      %493 = vst [vmem:[%s145 + $0x24] sm:$0xf] %v461
      %494 = vst [vmem:[%s145 + $0x28] sm:$0xf] %v462
      %495 = vst [vmem:[%s145 + $0x2c] sm:$0xf] %v463
      %496 = vst [vmem:[%s145 + $0x30] sm:$0xf] %v464
      %497 = vst [vmem:[%s145 + $0x34] sm:$0xf] %v465
      %498 = vst [vmem:[%s145 + $0x38] sm:$0xf] %v466
      %499 = vst [vmem:[%s145 + $0x3c] sm:$0xf] %v467
      %500 = vst [vmem:[%s145 + $0x40] sm:$0xf] %v468
      %501 = vst [vmem:[%s145 + $0x44] sm:$0xf] %v469
      %502 = vst [vmem:[%s145 + $0x48] sm:$0xf] %v470
      %503 = vst [vmem:[%s145 + $0x4c] sm:$0xf] %v471
      %504 = vst [vmem:[%s145 + $0x50] sm:$0xf] %v472
      %505 = vst [vmem:[%s145 + $0x54] sm:$0xf] %v473
      %506 = vst [vmem:[%s145 + $0x58] sm:$0xf] %v474
      %507 = vst [vmem:[%s145 + $0x5c] sm:$0xf] %v475
      %508 = vst [vmem:[%s145 + $0x60] sm:$0xf] %v476
      %509 = vst [vmem:[%s145 + $0x64] sm:$0xf] %v477
      %510 = vst [vmem:[%s145 + $0x68] sm:$0xf] %v478
      %511 = vst [vmem:[%s145 + $0x6c] sm:$0xf] %v479
      %512 = vst [vmem:[%s145 + $0x70] sm:$0xf] %v480
      %513 = vst [vmem:[%s145 + $0x74] sm:$0xf] %v481
      %514 = vst [vmem:[%s145 + $0x78] sm:$0xf] %v482
      %515 = vst [vmem:[%s145 + $0x7c] sm:$0xf] %v483
      %s516 = smul.u32 32, %s13
      %p517 = scmp.lt.s32.totalorder %s516, 63
      %s518 = scalar_select %p517, %s516, 63
      %s519 = smul.addr %s518, 4
      %s520 = scalar_lea.vmem %s2, %s519
      // Predicated region
      $region29: #{_lambda_.7} parent=27 // pred_check
        %p521 = pneg %p78
      $region30: #{_lambda_.7} parent=27 // pred_check_branch
        %523 = sbr.rel (%p521) target = $region32
      $region31: #{_lambda_.7} parent=27 // pred_region
        %s524 = smul.u32 32, %s13
      $region32: #{_lambda_.7} parent=27 // pred_fallthru
        _
    $region28: #{_lambda_.7} parent=5 // pred_fallthru
      _
    %p525 = scmp.le.s32.totalorder 2, %s8
    // Predicated region
    $region33: #{_lambda_.7} parent=5 // pred_check
      %p526 = pneg %p525
    $region34: #{_lambda_.7} parent=5 // pred_check_branch
      %528 = sbr.rel (%p526) target = $region36
    $region35: #{_lambda_.7} parent=5 // pred_region
      %s529 = ssub.s32 %s8, 2
      // Predicated region
      $region37: #{_lambda_.7} parent=35 // pred_check
        %p530 = pneg %p84
      $region38: #{_lambda_.7} parent=35 // pred_check_branch
        %532 = sbr.rel (%p530) target = $region40
      $region39: #{_lambda_.7} parent=35 // pred_region
        %s533 = smul.u32 32, %s14
        %p534 = scmp.lt.s32.totalorder %s533, 63
        %s535 = scalar_select %p534, %s533, 63
        %s536 = smul.addr %s535, 4
        %s537 = scalar_lea.vmem %s2, %s536
      $region40: #{_lambda_.7} parent=35 // pred_fallthru
        _
    $region36: #{_lambda_.7} parent=5 // pred_fallthru
      _
  $region6: #{_lambda_.7} parent=0 // loop_footer
    %s12 = sadd.s32 1, %s8
  $region7: #{_lambda_.7} parent=0 // loop_footer_branch
    %7 = sbr.rel target = $region3
  $region8: #{_lambda_.7} parent=0 // loop_exit
    _

// kernel: _lambda_.8
$region0: #{_lambda_.8}
  #allocation0 [shape = 'u32[]', space=smem, size = 0x4, offset = 0x4, fixed_abs, tag = 'smem constant byte address 0x4 - core index']
  #allocation1 [shape = 'u32[72,128]{1,0:T(1,128)}', space=vmem, size = 0x9000, scoped, tag = 'internal scratch']
  #allocation2 [shape = 'f32[100,128]{1,0:T(8,128)}', space=vmem, size = 0xd000, scoped, tag = 'scratch operand']
  %s0 = inlined_call_operand.vmem [shape: bf16[2,256,128], index: 0, kind: input, shape index: {}]
  %s1 = inlined_call_operand.vmem [shape: f32[9,1,128], index: 1, kind: input, shape index: {}]
  %s2 = inlined_call_operand.vmem [shape: bf16[2,64,128], index: 2, kind: output, shape index: {}]
  %s3 = sld [smem:[#allocation0]]
  $region41: #{_lambda_.8} parent=0
    _
  %s5 = ssub.s32 1, %s3
  %s6 = scalar_select 0, %s5, %s3
  loop: start=0, step=1, limit=4
  $region2: #{_lambda_.8} parent=0 // loop_pre_header
    _
  $region3: #{_lambda_.8} parent=0 // loop_header
    %s8 = sphi 0, %s12
    %p9 = scmp.ge.s32.totalorder %s8, 4
    %s18 = sphi 0, %s20
    %s21 = sphi 0, %s18
    %s22 = sphi 0, %s21
    %s38 = sphi 0, %s22
    %s42 = sphi 0, %s42
    %s44 = sphi 0, %s42
    %s45 = sphi 0, %s44
    %s59 = sphi 0, %s45
    %s65 = sphi 0, %s67
    %s68 = sphi 0, %s65
    %s69 = sphi 0, %s68
    %s85 = sphi 0, %s69
  $region4: #{_lambda_.8} parent=0 // loop_header_branch
    %11 = sbr.rel (%p9) target = $region8
  $region5: #{_lambda_.8} parent=0 // loop_body
    %s13 = ssub.s32 %s8, 1
    %s14 = ssub.s32 %s8, 2
    %s15 = sadd.s32 %s8, 1
    %s16 = ssub.s32 %s8, %s15
    %p17 = scmp.eq.s32.totalorder %s16, 0
    %s19 = sadd.s32 %s18, 1
    %s20 = scalar_select %p17, %s18, %s19
    %p23 = pneg %p17
    %p24 = scmp.eq.s32.totalorder %s8, 1
    %p25 = por %p23, %p24
    %p26 = scmp.ne.s32.totalorder %s18, %s21
    %p27 = scmp.eq.s32.totalorder %s8, 0
    %p28 = por %p26, %p27
    %p29 = scmp.ne.s32.totalorder %s18, %s21
    %p30 = scmp.eq.s32.totalorder %s13, 1
    %p31 = por %p29, %p30
    %p32 = scmp.ne.s32.totalorder %s21, %s22
    %p33 = scmp.eq.s32.totalorder %s13, 0
    %p34 = por %p32, %p33
    %p35 = scmp.ne.s32.totalorder %s21, %s22
    %p36 = scmp.eq.s32.totalorder %s14, 1
    %p37 = por %p35, %p36
    %p39 = scmp.ne.s32.totalorder %s22, %s38
    %p40 = scmp.eq.s32.totalorder %s14, 0
    %p41 = por %p39, %p40
    %s43 = sadd.s32 %s42, 1
    %p46 = scmp.eq.s32.totalorder %s8, 1
    %p47 = scmp.ne.s32.totalorder %s42, %s44
    %p48 = scmp.eq.s32.totalorder %s8, 0
    %p49 = por %p47, %p48
    %p50 = scmp.ne.s32.totalorder %s42, %s44
    %p51 = scmp.eq.s32.totalorder %s13, 1
    %p52 = por %p50, %p51
    %p53 = scmp.ne.s32.totalorder %s44, %s45
    %p54 = scmp.eq.s32.totalorder %s13, 0
    %p55 = por %p53, %p54
    %p56 = scmp.ne.s32.totalorder %s44, %s45
    %p57 = scmp.eq.s32.totalorder %s14, 1
    %p58 = por %p56, %p57
    %p60 = scmp.ne.s32.totalorder %s45, %s59
    %p61 = scmp.eq.s32.totalorder %s14, 0
    %p62 = por %p60, %p61
    %s63 = ssub.s32 %s8, %s15
    %p64 = scmp.eq.s32.totalorder %s63, 0
    %s66 = sadd.s32 %s65, 1
    %s67 = scalar_select %p64, %s65, %s66
    %p70 = pneg %p64
    %p71 = scmp.eq.s32.totalorder %s8, 1
    %p72 = por %p70, %p71
    %p73 = scmp.ne.s32.totalorder %s65, %s68
    %p74 = scmp.eq.s32.totalorder %s8, 0
    %p75 = por %p73, %p74
    %p76 = scmp.ne.s32.totalorder %s65, %s68
    %p77 = scmp.eq.s32.totalorder %s13, 1
    %p78 = por %p76, %p77
    %p79 = scmp.ne.s32.totalorder %s68, %s69
    %p80 = scmp.eq.s32.totalorder %s13, 0
    %p81 = por %p79, %p80
    %p82 = scmp.ne.s32.totalorder %s68, %s69
    %p83 = scmp.eq.s32.totalorder %s14, 1
    %p84 = por %p82, %p83
    %p86 = scmp.ne.s32.totalorder %s69, %s85
    %p87 = scmp.eq.s32.totalorder %s14, 0
    %p88 = por %p86, %p87
    %p89 = scmp.le.s32.totalorder 1, %s8
    %p90 = scmp.lt.s32.totalorder %s8, 3
    %p91 = pnand %p89, %p90
    %p92 = pneg %p91
    // Predicated region
    $region9: #{_lambda_.8} parent=5 // pred_check
      _
    $region10: #{_lambda_.8} parent=5 // pred_check_branch
      %94 = sbr.rel (%p91) target = $region12
    $region11: #{_lambda_.8} parent=5 // pred_region
      %s95 = ssub.s32 %s8, 1
      // Predicated region
      $region13: #{_lambda_.8} parent=11 // pred_check
        %p96 = pneg %p55
      $region14: #{_lambda_.8} parent=11 // pred_check_branch
        %98 = sbr.rel (%p96) target = $region16
      $region15: #{_lambda_.8} parent=11 // pred_region
        _
      $region16: #{_lambda_.8} parent=11 // pred_fallthru
        _
    $region12: #{_lambda_.8} parent=5 // pred_fallthru
      _
    %p99 = scmp.lt.s32.totalorder %s8, 2
    // Predicated region
    $region17: #{_lambda_.8} parent=5 // pred_check
      %p100 = pneg %p99
    $region18: #{_lambda_.8} parent=5 // pred_check_branch
      %102 = sbr.rel (%p100) target = $region20
    $region19: #{_lambda_.8} parent=5 // pred_region
      // Predicated region
      $region21: #{_lambda_.8} parent=19 // pred_check
        %p103 = pneg %p28
      $region22: #{_lambda_.8} parent=19 // pred_check_branch
        %105 = sbr.rel (%p103) target = $region24
      $region23: #{_lambda_.8} parent=19 // pred_region
        %p106 = scmp.lt.s32.totalorder %s8, 1
        %s107 = scalar_select %p106, %s8, 1
        %s108 = smul.addr %s107, 32
        %s109 = smul.addr %s108, 4
        %s110 = scalar_lea.vmem %s0, %s109
      $region24: #{_lambda_.8} parent=19 // pred_fallthru
        _
    $region20: #{_lambda_.8} parent=5 // pred_fallthru
      _
    %p111 = scmp.le.s32.totalorder 1, %s8
    %p112 = scmp.lt.s32.totalorder %s8, 3
    %p113 = pnand %p111, %p112
    %p114 = pneg %p113
    // Predicated region
    $region25: #{_lambda_.8} parent=5 // pred_check
      _
    $region26: #{_lambda_.8} parent=5 // pred_check_branch
      %116 = sbr.rel (%p113) target = $region28
    $region27: #{_lambda_.8} parent=5 // pred_region
      %s117 = ssub.s32 %s8, 1
      %p118 = scmp.lt.s32.totalorder %s13, 1
      %s119 = scalar_select %p118, %s13, 1
      %s120 = smul.addr %s119, 32
      %s121 = smul.addr %s120, 4
      %s122 = scalar_lea.vmem %s0, %s121
      %p123 = pneg %p34
      %p124 = pneg %p31
      %p125 = pneg %p55
      %p126 = pneg %p52
      %p127 = pneg %p81
      %p128 = pneg %p78
      %p129 = scmp.lt.s32.totalorder %s13, 1
      %s130 = scalar_select %p129, %s13, 1
      %s131 = smul.addr %s130, 8
      %s132 = smul.addr %s131, 4
      %s133 = scalar_lea.vmem %s2, %s132
      %p134 = scmp.lt.s32.totalorder %s13, 1
      %s135 = scalar_select %p134, %s13, 1
      %s136 = smul.addr %s135, 32
      %s137 = smul.addr %s136, 4
      %s138 = scalar_lea.vmem %s0, %s137
      %p139 = scmp.lt.s32.totalorder %s13, 1
      %s140 = scalar_select %p139, %s13, 1
      %s141 = smul.addr %s140, 8
      %s142 = smul.addr %s141, 4
      %s143 = scalar_lea.vmem %s2, %s142
      %144 = vst [vmem:[#allocation2] sm:$0xff] 0.0
      %145 = vst [vmem:[#allocation2 + $0x8] sm:$0x7] 0.0
      %146 = vst [vmem:[#allocation2 + $0x13] sm:$0x3] 0.0
      %147 = vst [vmem:[#allocation2 + $0x1d] sm:$0x3] 0.0
      %148 = vst [vmem:[#allocation2 + $0x27] sm:$0x3] 0.0
      %149 = vst [vmem:[#allocation2 + $0x31] sm:$0x3] 0.0
      %150 = vst [vmem:[#allocation2 + $0x3b] sm:$0x3] 0.0
      %151 = vst [vmem:[#allocation2 + $0x45] sm:$0x3] 0.0
      %152 = vst [vmem:[#allocation2 + $0x4f] sm:$0x3] 0.0
      %153 = vst [vmem:[#allocation2 + $0x59] sm:$0x3] 0.0
      %154 = vst [vmem:[#allocation2 + $0x5b] sm:$0xff] 0.0
      %155 = vst [vmem:[#allocation2 + $0x63] sm:$0x1] 0.0
      %v156 = vld [vmem:[%s138] sm:$0xf]
      %v157 = vld [vmem:[%s138 + $0x4] sm:$0xf]
      %v158 = vld [vmem:[%s138 + $0x8] sm:$0xf]
      %v159 = vld [vmem:[%s138 + $0xc] sm:$0xf]
      %v160 = vld [vmem:[%s138 + $0x10] sm:$0xf]
      %v161 = vld [vmem:[%s138 + $0x14] sm:$0xf]
      %v162 = vld [vmem:[%s138 + $0x18] sm:$0xf]
      %v163 = vld [vmem:[%s138 + $0x1c] sm:$0xf]
      %v164 = vld [vmem:[%s138 + $0x20] sm:$0xf]
      %v165 = vld [vmem:[%s138 + $0x24] sm:$0xf]
      %v166 = vld [vmem:[%s138 + $0x28] sm:$0xf]
      %v167 = vld [vmem:[%s138 + $0x2c] sm:$0xf]
      %v168 = vld [vmem:[%s138 + $0x30] sm:$0xf]
      %v169 = vld [vmem:[%s138 + $0x34] sm:$0xf]
      %v170 = vld [vmem:[%s138 + $0x38] sm:$0xf]
      %v171 = vld [vmem:[%s138 + $0x3c] sm:$0xf]
      %v172 = vunpack.c.l.bf16 %v156
      %v173 = vunpack.c.l.bf16 %v157
      %v174 = vunpack.c.l.bf16 %v158
      %v175 = vunpack.c.l.bf16 %v159
      %v176 = vunpack.c.l.bf16 %v160
      %v177 = vunpack.c.l.bf16 %v161
      %v178 = vunpack.c.l.bf16 %v162
      %v179 = vunpack.c.l.bf16 %v163
      %v180 = vunpack.c.l.bf16 %v164
      %v181 = vunpack.c.l.bf16 %v165
      %v182 = vunpack.c.l.bf16 %v166
      %v183 = vunpack.c.l.bf16 %v167
      %v184 = vunpack.c.l.bf16 %v168
      %v185 = vunpack.c.l.bf16 %v169
      %v186 = vunpack.c.l.bf16 %v170
      %v187 = vunpack.c.l.bf16 %v171
      %v188 = vmax.f32 %v172, %v180
      %v189 = vmax.f32 %v173, %v181
      %v190 = vmax.f32 %v174, %v182
      %v191 = vmax.f32 %v175, %v183
      %v192 = vmax.f32 %v176, %v184
      %v193 = vmax.f32 %v177, %v185
      %v194 = vmax.f32 %v178, %v186
      %v195 = vmax.f32 %v179, %v187
      %v196 = vpack.c.bf16 %v188, %v188
      %v197 = vpack.c.bf16 %v189, %v189
      %v198 = vpack.c.bf16 %v190, %v190
      %v199 = vpack.c.bf16 %v191, %v191
      %v200 = vpack.c.bf16 %v192, %v192
      %v201 = vpack.c.bf16 %v193, %v193
      %v202 = vpack.c.bf16 %v194, %v194
      %v203 = vpack.c.bf16 %v195, %v195
      %v204 = vld [vmem:[%s138 + $0x40] sm:$0xf]
      %v205 = vld [vmem:[%s138 + $0x44] sm:$0xf]
      %v206 = vld [vmem:[%s138 + $0x48] sm:$0xf]
      %v207 = vld [vmem:[%s138 + $0x4c] sm:$0xf]
      %v208 = vld [vmem:[%s138 + $0x50] sm:$0xf]
      %v209 = vld [vmem:[%s138 + $0x54] sm:$0xf]
      %v210 = vld [vmem:[%s138 + $0x58] sm:$0xf]
      %v211 = vld [vmem:[%s138 + $0x5c] sm:$0xf]
      %v212 = vld [vmem:[%s138 + $0x60] sm:$0xf]
      %v213 = vld [vmem:[%s138 + $0x64] sm:$0xf]
      %v214 = vld [vmem:[%s138 + $0x68] sm:$0xf]
      %v215 = vld [vmem:[%s138 + $0x6c] sm:$0xf]
      %v216 = vld [vmem:[%s138 + $0x70] sm:$0xf]
      %v217 = vld [vmem:[%s138 + $0x74] sm:$0xf]
      %v218 = vld [vmem:[%s138 + $0x78] sm:$0xf]
      %v219 = vld [vmem:[%s138 + $0x7c] sm:$0xf]
      %v220 = vunpack.c.l.bf16 %v204
      %v221 = vunpack.c.l.bf16 %v205
      %v222 = vunpack.c.l.bf16 %v206
      %v223 = vunpack.c.l.bf16 %v207
      %v224 = vunpack.c.l.bf16 %v208
      %v225 = vunpack.c.l.bf16 %v209
      %v226 = vunpack.c.l.bf16 %v210
      %v227 = vunpack.c.l.bf16 %v211
      %v228 = vunpack.c.l.bf16 %v212
      %v229 = vunpack.c.l.bf16 %v213
      %v230 = vunpack.c.l.bf16 %v214
      %v231 = vunpack.c.l.bf16 %v215
      %v232 = vunpack.c.l.bf16 %v216
      %v233 = vunpack.c.l.bf16 %v217
      %v234 = vunpack.c.l.bf16 %v218
      %v235 = vunpack.c.l.bf16 %v219
      %v236 = vmax.f32 %v220, %v228
      %v237 = vmax.f32 %v221, %v229
      %v238 = vmax.f32 %v222, %v230
      %v239 = vmax.f32 %v223, %v231
      %v240 = vmax.f32 %v224, %v232
      %v241 = vmax.f32 %v225, %v233
      %v242 = vmax.f32 %v226, %v234
      %v243 = vmax.f32 %v227, %v235
      %v244 = vpack.c.bf16 %v236, %v236
      %v245 = vpack.c.bf16 %v237, %v237
      %v246 = vpack.c.bf16 %v238, %v238
      %v247 = vpack.c.bf16 %v239, %v239
      %v248 = vpack.c.bf16 %v240, %v240
      %v249 = vpack.c.bf16 %v241, %v241
      %v250 = vpack.c.bf16 %v242, %v242
      %v251 = vpack.c.bf16 %v243, %v243
      %v252 = vunpack.c.l.bf16 %v196
      %v253 = vunpack.c.l.bf16 %v197
      %v254 = vunpack.c.l.bf16 %v198
      %v255 = vunpack.c.l.bf16 %v199
      %v256 = vunpack.c.l.bf16 %v200
      %v257 = vunpack.c.l.bf16 %v201
      %v258 = vunpack.c.l.bf16 %v202
      %v259 = vunpack.c.l.bf16 %v203
      %v260 = vunpack.c.l.bf16 %v244
      %v261 = vunpack.c.l.bf16 %v245
      %v262 = vunpack.c.l.bf16 %v246
      %v263 = vunpack.c.l.bf16 %v247
      %v264 = vunpack.c.l.bf16 %v248
      %v265 = vunpack.c.l.bf16 %v249
      %v266 = vunpack.c.l.bf16 %v250
      %v267 = vunpack.c.l.bf16 %v251
      %v268 = vmax.f32 %v252, %v260
      %v269 = vmax.f32 %v253, %v261
      %v270 = vmax.f32 %v254, %v262
      %v271 = vmax.f32 %v255, %v263
      %v272 = vmax.f32 %v256, %v264
      %v273 = vmax.f32 %v257, %v265
      %v274 = vmax.f32 %v258, %v266
      %v275 = vmax.f32 %v259, %v267
      %v276 = vpack.c.bf16 %v268, %v268
      %v277 = vpack.c.bf16 %v269, %v269
      %v278 = vpack.c.bf16 %v270, %v270
      %v279 = vpack.c.bf16 %v271, %v271
      %v280 = vpack.c.bf16 %v272, %v272
      %v281 = vpack.c.bf16 %v273, %v273
      %v282 = vpack.c.bf16 %v274, %v274
      %v283 = vpack.c.bf16 %v275, %v275
      %v284 = vunpack.c.l.bf16 %v276
      %v285 = vunpack.c.l.bf16 %v277
      %v286 = vunpack.c.l.bf16 %v278
      %v287 = vunpack.c.l.bf16 %v279
      %v288 = vunpack.c.l.bf16 %v280
      %v289 = vunpack.c.l.bf16 %v281
      %v290 = vunpack.c.l.bf16 %v282
      %v291 = vunpack.c.l.bf16 %v283
      %292 = vst [vmem:[#allocation2 + $0xb] sm:$0xff] %v284
      %293 = vst [vmem:[#allocation2 + $0x15] sm:$0xff] %v285
      %294 = vst [vmem:[#allocation2 + $0x1f] sm:$0xff] %v286
      %295 = vst [vmem:[#allocation2 + $0x29] sm:$0xff] %v287
      %296 = vst [vmem:[#allocation2 + $0x33] sm:$0xff] %v288
      %297 = vst [vmem:[#allocation2 + $0x3d] sm:$0xff] %v289
      %298 = vst [vmem:[#allocation2 + $0x47] sm:$0xff] %v290
      %299 = vst [vmem:[#allocation2 + $0x51] sm:$0xff] %v291
      %v300 = vld [vmem:[%s1] sm:$0x1]
      %s301 = scalar_lea.vmem %s1, 1
      %v302 = vld [vmem:[%s301] sm:$0x1]
      %s303 = scalar_lea.vmem %s1, 2
      %v304 = vld [vmem:[%s303] sm:$0x1]
      %s305 = scalar_lea.vmem %s1, 3
      %v306 = vld [vmem:[%s305] sm:$0x1]
      %s307 = scalar_lea.vmem %s1, 4
      %v308 = vld [vmem:[%s307] sm:$0x1]
      %s309 = scalar_lea.vmem %s1, 5
      %v310 = vld [vmem:[%s309] sm:$0x1]
      %s311 = scalar_lea.vmem %s1, 6
      %v312 = vld [vmem:[%s311] sm:$0x1]
      %s313 = scalar_lea.vmem %s1, 7
      %v314 = vld [vmem:[%s313] sm:$0x1]
      %s315 = scalar_lea.vmem %s1, 8
      %v316 = vld [vmem:[%s315] sm:$0x1]
      %v317 = vld [vmem:[#allocation2] sm:$0xff]
      %v318 = vld [vmem:[#allocation2 + $0x8] sm:$0xff]
      %v319 = vld [vmem:[#allocation2 + $0x10] sm:$0xff]
      %v320 = vld [vmem:[#allocation2 + $0x18] sm:$0xff]
      %v321 = vld [vmem:[#allocation2 + $0x20] sm:$0xff]
      %v322 = vld [vmem:[#allocation2 + $0x28] sm:$0xff]
      %v323 = vld [vmem:[#allocation2 + $0x30] sm:$0xff]
      %v324 = vld [vmem:[#allocation2 + $0x38] sm:$0xff]
      %v325 = vld [vmem:[#allocation2 + $0x40] sm:$0xff]
      %v326 = vld [vmem:[#allocation2 + $0x48] sm:$0x3f]
      %v328 = vperm.slane %v300, 0
      %v330 = vmul.f32 %v317, %v328
      %v331 = vmul.f32 %v318, %v328
      %v332 = vmul.f32 %v319, %v328
      %v333 = vmul.f32 %v320, %v328
      %v334 = vmul.f32 %v321, %v328
      %v335 = vmul.f32 %v322, %v328
      %v336 = vmul.f32 %v323, %v328
      %v337 = vmul.f32 %v324, %v328
      %v338 = vmul.f32 %v325, %v328
      %v339 = vmul.f32 %v326, %v328
      %v340 = vld [vmem:[#allocation2 + $0x1] sm:$0xff]
      %v341 = vld [vmem:[#allocation2 + $0x9] sm:$0xff]
      %v342 = vld [vmem:[#allocation2 + $0x11] sm:$0xff]
      %v343 = vld [vmem:[#allocation2 + $0x19] sm:$0xff]
      %v344 = vld [vmem:[#allocation2 + $0x21] sm:$0xff]
      %v345 = vld [vmem:[#allocation2 + $0x29] sm:$0xff]
      %v346 = vld [vmem:[#allocation2 + $0x31] sm:$0xff]
      %v347 = vld [vmem:[#allocation2 + $0x39] sm:$0xff]
      %v348 = vld [vmem:[#allocation2 + $0x41] sm:$0xff]
      %v349 = vld [vmem:[#allocation2 + $0x49] sm:$0x3f]
      %v351 = vperm.slane %v302, 0
      %v353 = vmul.f32 %v340, %v351
      %v354 = vmul.f32 %v341, %v351
      %v355 = vmul.f32 %v342, %v351
      %v356 = vmul.f32 %v343, %v351
      %v357 = vmul.f32 %v344, %v351
      %v358 = vmul.f32 %v345, %v351
      %v359 = vmul.f32 %v346, %v351
      %v360 = vmul.f32 %v347, %v351
      %v361 = vmul.f32 %v348, %v351
      %v362 = vmul.f32 %v349, %v351
      %v363 = vadd.f32 %v330, %v353
      %v364 = vadd.f32 %v331, %v354
      %v365 = vadd.f32 %v332, %v355
      %v366 = vadd.f32 %v333, %v356
      %v367 = vadd.f32 %v334, %v357
      %v368 = vadd.f32 %v335, %v358
      %v369 = vadd.f32 %v336, %v359
      %v370 = vadd.f32 %v337, %v360
      %v371 = vadd.f32 %v338, %v361
      %v372 = vadd.f32 %v339, %v362
      %v373 = vld [vmem:[#allocation2 + $0x2] sm:$0xff]
      %v374 = vld [vmem:[#allocation2 + $0xa] sm:$0xff]
      %v375 = vld [vmem:[#allocation2 + $0x12] sm:$0xff]
      %v376 = vld [vmem:[#allocation2 + $0x1a] sm:$0xff]
      %v377 = vld [vmem:[#allocation2 + $0x22] sm:$0xff]
      %v378 = vld [vmem:[#allocation2 + $0x2a] sm:$0xff]
      %v379 = vld [vmem:[#allocation2 + $0x32] sm:$0xff]
      %v380 = vld [vmem:[#allocation2 + $0x3a] sm:$0xff]
      %v381 = vld [vmem:[#allocation2 + $0x42] sm:$0xff]
      %v382 = vld [vmem:[#allocation2 + $0x4a] sm:$0x3f]
      %v384 = vperm.slane %v304, 0
      %v386 = vmul.f32 %v373, %v384
      %v387 = vmul.f32 %v374, %v384
      %v388 = vmul.f32 %v375, %v384
      %v389 = vmul.f32 %v376, %v384
      %v390 = vmul.f32 %v377, %v384
      %v391 = vmul.f32 %v378, %v384
      %v392 = vmul.f32 %v379, %v384
      %v393 = vmul.f32 %v380, %v384
      %v394 = vmul.f32 %v381, %v384
      %v395 = vmul.f32 %v382, %v384
      %v396 = vadd.f32 %v363, %v386
      %v397 = vadd.f32 %v364, %v387
      %v398 = vadd.f32 %v365, %v388
      %v399 = vadd.f32 %v366, %v389
      %v400 = vadd.f32 %v367, %v390
      %v401 = vadd.f32 %v368, %v391
      %v402 = vadd.f32 %v369, %v392
      %v403 = vadd.f32 %v370, %v393
      %v404 = vadd.f32 %v371, %v394
      %v405 = vadd.f32 %v372, %v395
      %v406 = vld [vmem:[#allocation2 + $0x4a] sm:$0xff]
      %v407 = vld [vmem:[#allocation2 + $0x52] sm:$0x3f]
      %v409 = vperm.slane %v306, 0
      %v411 = vmul.f32 %v374, %v409
      %v412 = vmul.f32 %v375, %v409
      %v413 = vmul.f32 %v376, %v409
      %v414 = vmul.f32 %v377, %v409
      %v415 = vmul.f32 %v378, %v409
      %v416 = vmul.f32 %v379, %v409
      %v417 = vmul.f32 %v380, %v409
      %v418 = vmul.f32 %v381, %v409
      %v419 = vmul.f32 %v406, %v409
      %v420 = vmul.f32 %v407, %v409
      %v421 = vadd.f32 %v396, %v411
      %v422 = vadd.f32 %v397, %v412
      %v423 = vadd.f32 %v398, %v413
      %v424 = vadd.f32 %v399, %v414
      %v425 = vadd.f32 %v400, %v415
      %v426 = vadd.f32 %v401, %v416
      %v427 = vadd.f32 %v402, %v417
      %v428 = vadd.f32 %v403, %v418
      %v429 = vadd.f32 %v404, %v419
      %v430 = vadd.f32 %v405, %v420
      %v431 = vld [vmem:[#allocation2 + $0xb] sm:$0xff]
      %v432 = vld [vmem:[#allocation2 + $0x13] sm:$0xff]
      %v433 = vld [vmem:[#allocation2 + $0x1b] sm:$0xff]
      %v434 = vld [vmem:[#allocation2 + $0x23] sm:$0xff]
      %v435 = vld [vmem:[#allocation2 + $0x2b] sm:$0xff]
      %v436 = vld [vmem:[#allocation2 + $0x33] sm:$0xff]
      %v437 = vld [vmem:[#allocation2 + $0x3b] sm:$0xff]
      %v438 = vld [vmem:[#allocation2 + $0x43] sm:$0xff]
      %v439 = vld [vmem:[#allocation2 + $0x4b] sm:$0xff]
      %v440 = vld [vmem:[#allocation2 + $0x53] sm:$0x3f]
      %v442 = vperm.slane %v308, 0
      %v444 = vmul.f32 %v431, %v442
      %v445 = vmul.f32 %v432, %v442
      %v446 = vmul.f32 %v433, %v442
      %v447 = vmul.f32 %v434, %v442
      %v448 = vmul.f32 %v435, %v442
      %v449 = vmul.f32 %v436, %v442
      %v450 = vmul.f32 %v437, %v442
      %v451 = vmul.f32 %v438, %v442
      %v452 = vmul.f32 %v439, %v442
      %v453 = vmul.f32 %v440, %v442
      %v454 = vadd.f32 %v421, %v444
      %v455 = vadd.f32 %v422, %v445
      %v456 = vadd.f32 %v423, %v446
      %v457 = vadd.f32 %v424, %v447
      %v458 = vadd.f32 %v425, %v448
      %v459 = vadd.f32 %v426, %v449
      %v460 = vadd.f32 %v427, %v450
      %v461 = vadd.f32 %v428, %v451
      %v462 = vadd.f32 %v429, %v452
      %v463 = vadd.f32 %v430, %v453
      %v464 = vld [vmem:[#allocation2 + $0xc] sm:$0xff]
      %v465 = vld [vmem:[#allocation2 + $0x14] sm:$0xff]
      %v466 = vld [vmem:[#allocation2 + $0x1c] sm:$0xff]
      %v467 = vld [vmem:[#allocation2 + $0x24] sm:$0xff]
      %v468 = vld [vmem:[#allocation2 + $0x2c] sm:$0xff]
      %v469 = vld [vmem:[#allocation2 + $0x34] sm:$0xff]
      %v470 = vld [vmem:[#allocation2 + $0x3c] sm:$0xff]
      %v471 = vld [vmem:[#allocation2 + $0x44] sm:$0xff]
      %v472 = vld [vmem:[#allocation2 + $0x4c] sm:$0xff]
      %v473 = vld [vmem:[#allocation2 + $0x54] sm:$0x3f]
      %v475 = vperm.slane %v310, 0
      %v477 = vmul.f32 %v464, %v475
      %v478 = vmul.f32 %v465, %v475
      %v479 = vmul.f32 %v466, %v475
      %v480 = vmul.f32 %v467, %v475
      %v481 = vmul.f32 %v468, %v475
      %v482 = vmul.f32 %v469, %v475
      %v483 = vmul.f32 %v470, %v475
      %v484 = vmul.f32 %v471, %v475
      %v485 = vmul.f32 %v472, %v475
      %v486 = vmul.f32 %v473, %v475
      %v487 = vadd.f32 %v454, %v477
      %v488 = vadd.f32 %v455, %v478
      %v489 = vadd.f32 %v456, %v479
      %v490 = vadd.f32 %v457, %v480
      %v491 = vadd.f32 %v458, %v481
      %v492 = vadd.f32 %v459, %v482
      %v493 = vadd.f32 %v460, %v483
      %v494 = vadd.f32 %v461, %v484
      %v495 = vadd.f32 %v462, %v485
      %v496 = vadd.f32 %v463, %v486
      %v497 = vld [vmem:[#allocation2 + $0x54] sm:$0xff]
      %v498 = vld [vmem:[#allocation2 + $0x5c] sm:$0x3f]
      %v500 = vperm.slane %v312, 0
      %v502 = vmul.f32 %v465, %v500
      %v503 = vmul.f32 %v466, %v500
      %v504 = vmul.f32 %v467, %v500
      %v505 = vmul.f32 %v468, %v500
      %v506 = vmul.f32 %v469, %v500
      %v507 = vmul.f32 %v470, %v500
      %v508 = vmul.f32 %v471, %v500
      %v509 = vmul.f32 %v472, %v500
      %v510 = vmul.f32 %v497, %v500
      %v511 = vmul.f32 %v498, %v500
      %v512 = vadd.f32 %v487, %v502
      %v513 = vadd.f32 %v488, %v503
      %v514 = vadd.f32 %v489, %v504
      %v515 = vadd.f32 %v490, %v505
      %v516 = vadd.f32 %v491, %v506
      %v517 = vadd.f32 %v492, %v507
      %v518 = vadd.f32 %v493, %v508
      %v519 = vadd.f32 %v494, %v509
      %v520 = vadd.f32 %v495, %v510
      %v521 = vadd.f32 %v496, %v511
      %v522 = vld [vmem:[#allocation2 + $0x15] sm:$0xff]
      %v523 = vld [vmem:[#allocation2 + $0x1d] sm:$0xff]
      %v524 = vld [vmem:[#allocation2 + $0x25] sm:$0xff]
      %v525 = vld [vmem:[#allocation2 + $0x2d] sm:$0xff]
      %v526 = vld [vmem:[#allocation2 + $0x35] sm:$0xff]
      %v527 = vld [vmem:[#allocation2 + $0x3d] sm:$0xff]
      %v528 = vld [vmem:[#allocation2 + $0x45] sm:$0xff]
      %v529 = vld [vmem:[#allocation2 + $0x4d] sm:$0xff]
      %v530 = vld [vmem:[#allocation2 + $0x55] sm:$0xff]
      %v531 = vld [vmem:[#allocation2 + $0x5d] sm:$0x3f]
      %v533 = vperm.slane %v314, 0
      %v535 = vmul.f32 %v522, %v533
      %v536 = vmul.f32 %v523, %v533
      %v537 = vmul.f32 %v524, %v533
      %v538 = vmul.f32 %v525, %v533
      %v539 = vmul.f32 %v526, %v533
      %v540 = vmul.f32 %v527, %v533
      %v541 = vmul.f32 %v528, %v533
      %v542 = vmul.f32 %v529, %v533
      %v543 = vmul.f32 %v530, %v533
      %v544 = vmul.f32 %v531, %v533
      %v545 = vadd.f32 %v512, %v535
      %v546 = vadd.f32 %v513, %v536
      %v547 = vadd.f32 %v514, %v537
      %v548 = vadd.f32 %v515, %v538
      %v549 = vadd.f32 %v516, %v539
      %v550 = vadd.f32 %v517, %v540
      %v551 = vadd.f32 %v518, %v541
      %v552 = vadd.f32 %v519, %v542
      %v553 = vadd.f32 %v520, %v543
      %v554 = vadd.f32 %v521, %v544
      %v555 = vld [vmem:[#allocation2 + $0x16] sm:$0xff]
      %v556 = vld [vmem:[#allocation2 + $0x1e] sm:$0xff]
      %v557 = vld [vmem:[#allocation2 + $0x26] sm:$0xff]
      %v558 = vld [vmem:[#allocation2 + $0x2e] sm:$0xff]
      %v559 = vld [vmem:[#allocation2 + $0x36] sm:$0xff]
      %v560 = vld [vmem:[#allocation2 + $0x3e] sm:$0xff]
      %v561 = vld [vmem:[#allocation2 + $0x46] sm:$0xff]
      %v562 = vld [vmem:[#allocation2 + $0x4e] sm:$0xff]
      %v563 = vld [vmem:[#allocation2 + $0x56] sm:$0xff]
      %v564 = vld [vmem:[#allocation2 + $0x5e] sm:$0x3f]
      %v566 = vperm.slane %v316, 0
      %v568 = vmul.f32 %v555, %v566
      %v569 = vmul.f32 %v556, %v566
      %v570 = vmul.f32 %v557, %v566
      %v571 = vmul.f32 %v558, %v566
      %v572 = vmul.f32 %v559, %v566
      %v573 = vmul.f32 %v560, %v566
      %v574 = vmul.f32 %v561, %v566
      %v575 = vmul.f32 %v562, %v566
      %v576 = vmul.f32 %v563, %v566
      %v577 = vmul.f32 %v564, %v566
      %v578 = vadd.f32 %v545, %v568
      %v579 = vadd.f32 %v546, %v569
      %v580 = vadd.f32 %v547, %v570
      %v581 = vadd.f32 %v548, %v571
      %v582 = vadd.f32 %v549, %v572
      %v583 = vadd.f32 %v550, %v573
      %v584 = vadd.f32 %v551, %v574
      %v585 = vadd.f32 %v552, %v575
      %v586 = vadd.f32 %v553, %v576
      %v587 = vadd.f32 %v554, %v577
      %v588 = vmax.f32 %v578, 0.0
      %v589 = vmax.f32 %v579, 0.0
      %v590 = vmax.f32 %v580, 0.0
      %v591 = vmax.f32 %v581, 0.0
      %v592 = vmax.f32 %v582, 0.0
      %v593 = vmax.f32 %v583, 0.0
      %v594 = vmax.f32 %v584, 0.0
      %v595 = vmax.f32 %v585, 0.0
      %v596 = vmax.f32 %v586, 0.0
      %v597 = vmax.f32 %v587, 0.0
      %v598 = vpack.c.bf16 %v588, %v588
      %599 = vst [vmem:[%s143] sm:$0xf] %v598
      %v600 = vpack.c.bf16 %v589, %v589
      %v601 = vpack.c.bf16 %v590, %v590
      %vm604 = vcmask 1042432
      %vm605 = vcmask 1046532
      %vm606 = vmor %vm604, %vm605
      %v607 = vrot.slane %v600, 5
      %v608 = vrot.slane %v607, 4
      %v609 = vrot.slane %v601, 5
      %v610 = vsel %vm606, %v608, %v609
      %612 = vst [vmem:[%s143 + $0x4] sm:$0xf] %v610
      %v613 = vpack.c.bf16 %v591, %v591
      %vm615 = vcmask 1041408
      %vm616 = vcmask 1045508
      %vm617 = vmor %vm615, %vm616
      %v618 = vrot.slane %v601, 6
      %v619 = vrot.slane %v618, 4
      %v620 = vrot.slane %v613, 6
      %v621 = vsel %vm617, %v619, %v620
      %623 = vst [vmem:[%s143 + $0x8] sm:$0xf] %v621
      %v624 = vpack.c.bf16 %v592, %v592
      %vm626 = vcmask 1040384
      %vm627 = vcmask 1044484
      %vm628 = vmor %vm626, %vm627
      %v629 = vrot.slane %v613, 7
      %v630 = vrot.slane %v629, 4
      %v631 = vrot.slane %v624, 7
      %v632 = vsel %vm628, %v630, %v631
      %634 = vst [vmem:[%s143 + $0xc] sm:$0xf] %v632
      %v635 = vpack.c.bf16 %v593, %v593
      %636 = vst [vmem:[%s143 + $0x10] sm:$0xf] %v635
      %v637 = vpack.c.bf16 %v594, %v594
      %v638 = vpack.c.bf16 %v595, %v595
      %v641 = vrot.slane %v637, 5
      %v642 = vrot.slane %v641, 4
      %v643 = vrot.slane %v638, 5
      %v644 = vsel %vm606, %v642, %v643
      %646 = vst [vmem:[%s143 + $0x14] sm:$0xf] %v644
      %v647 = vpack.c.bf16 %v596, %v596
      %v649 = vrot.slane %v638, 6
      %v650 = vrot.slane %v649, 4
      %v651 = vrot.slane %v647, 6
      %v652 = vsel %vm617, %v650, %v651
      %654 = vst [vmem:[%s143 + $0x18] sm:$0xf] %v652
      %v655 = vpack.c.bf16 %v597, %v597
      %v657 = vrot.slane %v647, 7
      %v658 = vrot.slane %v657, 4
      %v659 = vrot.slane %v655, 7
      %v660 = vsel %vm628, %v658, %v659
      %662 = vst [vmem:[%s143 + $0x1c] sm:$0xf] %v660
      %p663 = scmp.lt.s32.totalorder %s13, 1
      %s664 = scalar_select %p663, %s13, 1
      %s665 = smul.addr %s664, 8
      %s666 = smul.addr %s665, 4
      %s667 = scalar_lea.vmem %s2, %s666
      // Predicated region
      $region29: #{_lambda_.8} parent=27 // pred_check
        %p668 = pneg %p78
      $region30: #{_lambda_.8} parent=27 // pred_check_branch
        %670 = sbr.rel (%p668) target = $region32
      $region31: #{_lambda_.8} parent=27 // pred_region
        _
      $region32: #{_lambda_.8} parent=27 // pred_fallthru
        _
    $region28: #{_lambda_.8} parent=5 // pred_fallthru
      _
    %p671 = scmp.le.s32.totalorder 2, %s8
    // Predicated region
    $region33: #{_lambda_.8} parent=5 // pred_check
      %p672 = pneg %p671
    $region34: #{_lambda_.8} parent=5 // pred_check_branch
      %674 = sbr.rel (%p672) target = $region36
    $region35: #{_lambda_.8} parent=5 // pred_region
      %s675 = ssub.s32 %s8, 2
      // Predicated region
      $region37: #{_lambda_.8} parent=35 // pred_check
        %p676 = pneg %p84
      $region38: #{_lambda_.8} parent=35 // pred_check_branch
        %678 = sbr.rel (%p676) target = $region40
      $region39: #{_lambda_.8} parent=35 // pred_region
        %p679 = scmp.lt.s32.totalorder %s14, 1
        %s680 = scalar_select %p679, %s14, 1
        %s681 = smul.addr %s680, 8
        %s682 = smul.addr %s681, 4
        %s683 = scalar_lea.vmem %s2, %s682
      $region40: #{_lambda_.8} parent=35 // pred_fallthru
        _
    $region36: #{_lambda_.8} parent=5 // pred_fallthru
      _
  $region6: #{_lambda_.8} parent=0 // loop_footer
    %s12 = sadd.s32 1, %s8
  $region7: #{_lambda_.8} parent=0 // loop_footer_branch
    %7 = sbr.rel target = $region3
  $region8: #{_lambda_.8} parent=0 // loop_exit
    _

// kernel: _lambda_.9
$region0: #{_lambda_.9}
  #allocation0 [shape = 'u32[]', space=smem, size = 0x4, offset = 0x4, fixed_abs, tag = 'smem constant byte address 0x4 - core index']
  #allocation1 [shape = 'u32[72,128]{1,0:T(1,128)}', space=vmem, size = 0x9000, scoped, tag = 'internal scratch']
  #allocation2 [shape = 'f32[100,128]{1,0:T(8,128)}', space=vmem, size = 0xd000, scoped, tag = 'scratch operand']
  %s0 = inlined_call_operand.vmem [shape: bf16[2,64,128], index: 0, kind: input, shape index: {}]
  %s1 = inlined_call_operand.vmem [shape: f32[9,1,128], index: 1, kind: input, shape index: {}]
  %s2 = inlined_call_operand.vmem [shape: bf16[128,128], index: 2, kind: input, shape index: {}]
  %s3 = inlined_call_operand.vmem [shape: bf16[2,64,128], index: 3, kind: output, shape index: {}]
  %s4 = sld [smem:[#allocation0]]
  $region45: #{_lambda_.9} parent=0
    _
  %s6 = ssub.s32 1, %s4
  %s7 = scalar_select 0, %s6, %s4
  loop: start=0, step=1, limit=4
  $region2: #{_lambda_.9} parent=0 // loop_pre_header
    _
  $region3: #{_lambda_.9} parent=0 // loop_header
    %s9 = sphi 0, %s13
    %p10 = scmp.ge.s32.totalorder %s9, 4
    %s19 = sphi 0, %s21
    %s22 = sphi 0, %s19
    %s23 = sphi 0, %s22
    %s39 = sphi 0, %s23
    %s43 = sphi 0, %s43
    %s45 = sphi 0, %s43
    %s46 = sphi 0, %s45
    %s60 = sphi 0, %s46
    %s64 = sphi 0, %s64
    %s66 = sphi 0, %s64
    %s67 = sphi 0, %s66
    %s81 = sphi 0, %s67
    %s87 = sphi 0, %s89
    %s90 = sphi 0, %s87
    %s91 = sphi 0, %s90
    %s107 = sphi 0, %s91
  $region4: #{_lambda_.9} parent=0 // loop_header_branch
    %12 = sbr.rel (%p10) target = $region8
  $region5: #{_lambda_.9} parent=0 // loop_body
    %s14 = ssub.s32 %s9, 1
    %s15 = ssub.s32 %s9, 2
    %s16 = sadd.s32 %s9, 1
    %s17 = ssub.s32 %s9, %s16
    %p18 = scmp.eq.s32.totalorder %s17, 0
    %s20 = sadd.s32 %s19, 1
    %s21 = scalar_select %p18, %s19, %s20
    %p24 = pneg %p18
    %p25 = scmp.eq.s32.totalorder %s9, 1
    %p26 = por %p24, %p25
    %p27 = scmp.ne.s32.totalorder %s19, %s22
    %p28 = scmp.eq.s32.totalorder %s9, 0
    %p29 = por %p27, %p28
    %p30 = scmp.ne.s32.totalorder %s19, %s22
    %p31 = scmp.eq.s32.totalorder %s14, 1
    %p32 = por %p30, %p31
    %p33 = scmp.ne.s32.totalorder %s22, %s23
    %p34 = scmp.eq.s32.totalorder %s14, 0
    %p35 = por %p33, %p34
    %p36 = scmp.ne.s32.totalorder %s22, %s23
    %p37 = scmp.eq.s32.totalorder %s15, 1
    %p38 = por %p36, %p37
    %p40 = scmp.ne.s32.totalorder %s23, %s39
    %p41 = scmp.eq.s32.totalorder %s15, 0
    %p42 = por %p40, %p41
    %s44 = sadd.s32 %s43, 1
    %p47 = scmp.eq.s32.totalorder %s9, 1
    %p48 = scmp.ne.s32.totalorder %s43, %s45
    %p49 = scmp.eq.s32.totalorder %s9, 0
    %p50 = por %p48, %p49
    %p51 = scmp.ne.s32.totalorder %s43, %s45
    %p52 = scmp.eq.s32.totalorder %s14, 1
    %p53 = por %p51, %p52
    %p54 = scmp.ne.s32.totalorder %s45, %s46
    %p55 = scmp.eq.s32.totalorder %s14, 0
    %p56 = por %p54, %p55
    %p57 = scmp.ne.s32.totalorder %s45, %s46
    %p58 = scmp.eq.s32.totalorder %s15, 1
    %p59 = por %p57, %p58
    %p61 = scmp.ne.s32.totalorder %s46, %s60
    %p62 = scmp.eq.s32.totalorder %s15, 0
    %p63 = por %p61, %p62
    %s65 = sadd.s32 %s64, 1
    %p68 = scmp.eq.s32.totalorder %s9, 1
    %p69 = scmp.ne.s32.totalorder %s64, %s66
    %p70 = scmp.eq.s32.totalorder %s9, 0
    %p71 = por %p69, %p70
    %p72 = scmp.ne.s32.totalorder %s64, %s66
    %p73 = scmp.eq.s32.totalorder %s14, 1
    %p74 = por %p72, %p73
    %p75 = scmp.ne.s32.totalorder %s66, %s67
    %p76 = scmp.eq.s32.totalorder %s14, 0
    %p77 = por %p75, %p76
    %p78 = scmp.ne.s32.totalorder %s66, %s67
    %p79 = scmp.eq.s32.totalorder %s15, 1
    %p80 = por %p78, %p79
    %p82 = scmp.ne.s32.totalorder %s67, %s81
    %p83 = scmp.eq.s32.totalorder %s15, 0
    %p84 = por %p82, %p83
    %s85 = ssub.s32 %s9, %s16
    %p86 = scmp.eq.s32.totalorder %s85, 0
    %s88 = sadd.s32 %s87, 1
    %s89 = scalar_select %p86, %s87, %s88
    %p92 = pneg %p86
    %p93 = scmp.eq.s32.totalorder %s9, 1
    %p94 = por %p92, %p93
    %p95 = scmp.ne.s32.totalorder %s87, %s90
    %p96 = scmp.eq.s32.totalorder %s9, 0
    %p97 = por %p95, %p96
    %p98 = scmp.ne.s32.totalorder %s87, %s90
    %p99 = scmp.eq.s32.totalorder %s14, 1
    %p100 = por %p98, %p99
    %p101 = scmp.ne.s32.totalorder %s90, %s91
    %p102 = scmp.eq.s32.totalorder %s14, 0
    %p103 = por %p101, %p102
    %p104 = scmp.ne.s32.totalorder %s90, %s91
    %p105 = scmp.eq.s32.totalorder %s15, 1
    %p106 = por %p104, %p105
    %p108 = scmp.ne.s32.totalorder %s91, %s107
    %p109 = scmp.eq.s32.totalorder %s15, 0
    %p110 = por %p108, %p109
    %p111 = scmp.le.s32.totalorder 1, %s9
    %p112 = scmp.lt.s32.totalorder %s9, 3
    %p113 = pnand %p111, %p112
    %p114 = pneg %p113
    // Predicated region
    $region9: #{_lambda_.9} parent=5 // pred_check
      _
    $region10: #{_lambda_.9} parent=5 // pred_check_branch
      %116 = sbr.rel (%p113) target = $region12
    $region11: #{_lambda_.9} parent=5 // pred_region
      %s117 = ssub.s32 %s9, 1
      // Predicated region
      $region13: #{_lambda_.9} parent=11 // pred_check
        %p118 = pneg %p56
      $region14: #{_lambda_.9} parent=11 // pred_check_branch
        %120 = sbr.rel (%p118) target = $region16
      $region15: #{_lambda_.9} parent=11 // pred_region
        _
      $region16: #{_lambda_.9} parent=11 // pred_fallthru
        _
      // Predicated region
      $region17: #{_lambda_.9} parent=11 // pred_check
        %p121 = pneg %p77
      $region18: #{_lambda_.9} parent=11 // pred_check_branch
        %123 = sbr.rel (%p121) target = $region20
      $region19: #{_lambda_.9} parent=11 // pred_region
        _
      $region20: #{_lambda_.9} parent=11 // pred_fallthru
        _
    $region12: #{_lambda_.9} parent=5 // pred_fallthru
      _
    %p124 = scmp.lt.s32.totalorder %s9, 2
    // Predicated region
    $region21: #{_lambda_.9} parent=5 // pred_check
      %p125 = pneg %p124
    $region22: #{_lambda_.9} parent=5 // pred_check_branch
      %127 = sbr.rel (%p125) target = $region24
    $region23: #{_lambda_.9} parent=5 // pred_region
      // Predicated region
      $region25: #{_lambda_.9} parent=23 // pred_check
        %p128 = pneg %p29
      $region26: #{_lambda_.9} parent=23 // pred_check_branch
        %130 = sbr.rel (%p128) target = $region28
      $region27: #{_lambda_.9} parent=23 // pred_region
        %p131 = scmp.lt.s32.totalorder %s9, 1
        %s132 = scalar_select %p131, %s9, 1
        %s133 = smul.addr %s132, 8
        %s134 = smul.addr %s133, 4
        %s135 = scalar_lea.vmem %s0, %s134
      $region28: #{_lambda_.9} parent=23 // pred_fallthru
        _
    $region24: #{_lambda_.9} parent=5 // pred_fallthru
      _
    %p136 = scmp.le.s32.totalorder 1, %s9
    %p137 = scmp.lt.s32.totalorder %s9, 3
    %p138 = pnand %p136, %p137
    %p139 = pneg %p138
    // Predicated region
    $region29: #{_lambda_.9} parent=5 // pred_check
      _
    $region30: #{_lambda_.9} parent=5 // pred_check_branch
      %141 = sbr.rel (%p138) target = $region32
    $region31: #{_lambda_.9} parent=5 // pred_region
      %s142 = ssub.s32 %s9, 1
      %p143 = scmp.lt.s32.totalorder %s14, 1
      %s144 = scalar_select %p143, %s14, 1
      %s145 = smul.addr %s144, 8
      %s146 = smul.addr %s145, 4
      %s147 = scalar_lea.vmem %s0, %s146
      %p148 = pneg %p35
      %p149 = pneg %p32
      %p150 = pneg %p56
      %p151 = pneg %p53
      %p152 = pneg %p77
      %p153 = pneg %p74
      %p154 = pneg %p103
      %p155 = pneg %p100
      %p156 = scmp.lt.s32.totalorder %s14, 1
      %s157 = scalar_select %p156, %s14, 1
      %s158 = smul.addr %s157, 8
      %s159 = smul.addr %s158, 4
      %s160 = scalar_lea.vmem %s3, %s159
      %p161 = scmp.lt.s32.totalorder %s14, 1
      %s162 = scalar_select %p161, %s14, 1
      %s163 = smul.addr %s162, 8
      %s164 = smul.addr %s163, 4
      %s165 = scalar_lea.vmem %s0, %s164
      %p166 = scmp.lt.s32.totalorder %s14, 1
      %s167 = scalar_select %p166, %s14, 1
      %s168 = smul.addr %s167, 8
      %s169 = smul.addr %s168, 4
      %s170 = scalar_lea.vmem %s3, %s169
      %171 = vst [vmem:[#allocation2] sm:$0xff] 0.0
      %172 = vst [vmem:[#allocation2 + $0x8] sm:$0x7] 0.0
      %173 = vst [vmem:[#allocation2 + $0x13] sm:$0x3] 0.0
      %174 = vst [vmem:[#allocation2 + $0x1d] sm:$0x3] 0.0
      %175 = vst [vmem:[#allocation2 + $0x27] sm:$0x3] 0.0
      %176 = vst [vmem:[#allocation2 + $0x31] sm:$0x3] 0.0
      %177 = vst [vmem:[#allocation2 + $0x3b] sm:$0x3] 0.0
      %178 = vst [vmem:[#allocation2 + $0x45] sm:$0x3] 0.0
      %179 = vst [vmem:[#allocation2 + $0x4f] sm:$0x3] 0.0
      %180 = vst [vmem:[#allocation2 + $0x59] sm:$0x3] 0.0
      %181 = vst [vmem:[#allocation2 + $0x5b] sm:$0xff] 0.0
      %182 = vst [vmem:[#allocation2 + $0x63] sm:$0x1] 0.0
      %v183 = vld [vmem:[%s165] sm:$0xf]
      %v184 = vld [vmem:[%s165 + $0x4] sm:$0xf]
      %v185 = vld [vmem:[%s165 + $0x8] sm:$0xf]
      %v186 = vld [vmem:[%s165 + $0xc] sm:$0xf]
      %v187 = vld [vmem:[%s165 + $0x10] sm:$0xf]
      %v188 = vld [vmem:[%s165 + $0x14] sm:$0xf]
      %v189 = vld [vmem:[%s165 + $0x18] sm:$0xf]
      %v190 = vld [vmem:[%s165 + $0x1c] sm:$0xf]
      %v191 = vunpack.c.l.bf16 %v183
      %v192 = vunpack.c.l.bf16 %v184
      %v193 = vunpack.c.l.bf16 %v185
      %v194 = vunpack.c.l.bf16 %v186
      %v195 = vunpack.c.l.bf16 %v187
      %v196 = vunpack.c.l.bf16 %v188
      %v197 = vunpack.c.l.bf16 %v189
      %v198 = vunpack.c.l.bf16 %v190
      %199 = vst [vmem:[#allocation2 + $0xb] sm:$0xff] %v191
      %200 = vst [vmem:[#allocation2 + $0x15] sm:$0xff] %v192
      %201 = vst [vmem:[#allocation2 + $0x1f] sm:$0xff] %v193
      %202 = vst [vmem:[#allocation2 + $0x29] sm:$0xff] %v194
      %203 = vst [vmem:[#allocation2 + $0x33] sm:$0xff] %v195
      %204 = vst [vmem:[#allocation2 + $0x3d] sm:$0xff] %v196
      %205 = vst [vmem:[#allocation2 + $0x47] sm:$0xff] %v197
      %206 = vst [vmem:[#allocation2 + $0x51] sm:$0xff] %v198
      %v207 = vld [vmem:[%s1] sm:$0x1]
      %s208 = scalar_lea.vmem %s1, 1
      %v209 = vld [vmem:[%s208] sm:$0x1]
      %s210 = scalar_lea.vmem %s1, 2
      %v211 = vld [vmem:[%s210] sm:$0x1]
      %s212 = scalar_lea.vmem %s1, 3
      %v213 = vld [vmem:[%s212] sm:$0x1]
      %s214 = scalar_lea.vmem %s1, 4
      %v215 = vld [vmem:[%s214] sm:$0x1]
      %s216 = scalar_lea.vmem %s1, 5
      %v217 = vld [vmem:[%s216] sm:$0x1]
      %s218 = scalar_lea.vmem %s1, 6
      %v219 = vld [vmem:[%s218] sm:$0x1]
      %s220 = scalar_lea.vmem %s1, 7
      %v221 = vld [vmem:[%s220] sm:$0x1]
      %s222 = scalar_lea.vmem %s1, 8
      %v223 = vld [vmem:[%s222] sm:$0x1]
      %v224 = vld [vmem:[#allocation2] sm:$0xff]
      %v225 = vld [vmem:[#allocation2 + $0x8] sm:$0xff]
      %v226 = vld [vmem:[#allocation2 + $0x10] sm:$0xff]
      %v227 = vld [vmem:[#allocation2 + $0x18] sm:$0xff]
      %v228 = vld [vmem:[#allocation2 + $0x20] sm:$0xff]
      %v229 = vld [vmem:[#allocation2 + $0x28] sm:$0xff]
      %v230 = vld [vmem:[#allocation2 + $0x30] sm:$0xff]
      %v231 = vld [vmem:[#allocation2 + $0x38] sm:$0xff]
      %v232 = vld [vmem:[#allocation2 + $0x40] sm:$0xff]
      %v233 = vld [vmem:[#allocation2 + $0x48] sm:$0x3f]
      %v235 = vperm.slane %v207, 0
      %v237 = vmul.f32 %v224, %v235
      %v238 = vmul.f32 %v225, %v235
      %v239 = vmul.f32 %v226, %v235
      %v240 = vmul.f32 %v227, %v235
      %v241 = vmul.f32 %v228, %v235
      %v242 = vmul.f32 %v229, %v235
      %v243 = vmul.f32 %v230, %v235
      %v244 = vmul.f32 %v231, %v235
      %v245 = vmul.f32 %v232, %v235
      %v246 = vmul.f32 %v233, %v235
      %v247 = vld [vmem:[#allocation2 + $0x1] sm:$0xff]
      %v248 = vld [vmem:[#allocation2 + $0x9] sm:$0xff]
      %v249 = vld [vmem:[#allocation2 + $0x11] sm:$0xff]
      %v250 = vld [vmem:[#allocation2 + $0x19] sm:$0xff]
      %v251 = vld [vmem:[#allocation2 + $0x21] sm:$0xff]
      %v252 = vld [vmem:[#allocation2 + $0x29] sm:$0xff]
      %v253 = vld [vmem:[#allocation2 + $0x31] sm:$0xff]
      %v254 = vld [vmem:[#allocation2 + $0x39] sm:$0xff]
      %v255 = vld [vmem:[#allocation2 + $0x41] sm:$0xff]
      %v256 = vld [vmem:[#allocation2 + $0x49] sm:$0x3f]
      %v258 = vperm.slane %v209, 0
      %v260 = vmul.f32 %v247, %v258
      %v261 = vmul.f32 %v248, %v258
      %v262 = vmul.f32 %v249, %v258
      %v263 = vmul.f32 %v250, %v258
      %v264 = vmul.f32 %v251, %v258
      %v265 = vmul.f32 %v252, %v258
      %v266 = vmul.f32 %v253, %v258
      %v267 = vmul.f32 %v254, %v258
      %v268 = vmul.f32 %v255, %v258
      %v269 = vmul.f32 %v256, %v258
      %v270 = vadd.f32 %v237, %v260
      %v271 = vadd.f32 %v238, %v261
      %v272 = vadd.f32 %v239, %v262
      %v273 = vadd.f32 %v240, %v263
      %v274 = vadd.f32 %v241, %v264
      %v275 = vadd.f32 %v242, %v265
      %v276 = vadd.f32 %v243, %v266
      %v277 = vadd.f32 %v244, %v267
      %v278 = vadd.f32 %v245, %v268
      %v279 = vadd.f32 %v246, %v269
      %v280 = vld [vmem:[#allocation2 + $0x2] sm:$0xff]
      %v281 = vld [vmem:[#allocation2 + $0xa] sm:$0xff]
      %v282 = vld [vmem:[#allocation2 + $0x12] sm:$0xff]
      %v283 = vld [vmem:[#allocation2 + $0x1a] sm:$0xff]
      %v284 = vld [vmem:[#allocation2 + $0x22] sm:$0xff]
      %v285 = vld [vmem:[#allocation2 + $0x2a] sm:$0xff]
      %v286 = vld [vmem:[#allocation2 + $0x32] sm:$0xff]
      %v287 = vld [vmem:[#allocation2 + $0x3a] sm:$0xff]
      %v288 = vld [vmem:[#allocation2 + $0x42] sm:$0xff]
      %v289 = vld [vmem:[#allocation2 + $0x4a] sm:$0x3f]
      %v291 = vperm.slane %v211, 0
      %v293 = vmul.f32 %v280, %v291
      %v294 = vmul.f32 %v281, %v291
      %v295 = vmul.f32 %v282, %v291
      %v296 = vmul.f32 %v283, %v291
      %v297 = vmul.f32 %v284, %v291
      %v298 = vmul.f32 %v285, %v291
      %v299 = vmul.f32 %v286, %v291
      %v300 = vmul.f32 %v287, %v291
      %v301 = vmul.f32 %v288, %v291
      %v302 = vmul.f32 %v289, %v291
      %v303 = vadd.f32 %v270, %v293
      %v304 = vadd.f32 %v271, %v294
      %v305 = vadd.f32 %v272, %v295
      %v306 = vadd.f32 %v273, %v296
      %v307 = vadd.f32 %v274, %v297
      %v308 = vadd.f32 %v275, %v298
      %v309 = vadd.f32 %v276, %v299
      %v310 = vadd.f32 %v277, %v300
      %v311 = vadd.f32 %v278, %v301
      %v312 = vadd.f32 %v279, %v302
      %v313 = vld [vmem:[#allocation2 + $0x4a] sm:$0xff]
      %v314 = vld [vmem:[#allocation2 + $0x52] sm:$0x3f]
      %v316 = vperm.slane %v213, 0
      %v318 = vmul.f32 %v281, %v316
      %v319 = vmul.f32 %v282, %v316
      %v320 = vmul.f32 %v283, %v316
      %v321 = vmul.f32 %v284, %v316
      %v322 = vmul.f32 %v285, %v316
      %v323 = vmul.f32 %v286, %v316
      %v324 = vmul.f32 %v287, %v316
      %v325 = vmul.f32 %v288, %v316
      %v326 = vmul.f32 %v313, %v316
      %v327 = vmul.f32 %v314, %v316
      %v328 = vadd.f32 %v303, %v318
      %v329 = vadd.f32 %v304, %v319
      %v330 = vadd.f32 %v305, %v320
      %v331 = vadd.f32 %v306, %v321
      %v332 = vadd.f32 %v307, %v322
      %v333 = vadd.f32 %v308, %v323
      %v334 = vadd.f32 %v309, %v324
      %v335 = vadd.f32 %v310, %v325
      %v336 = vadd.f32 %v311, %v326
      %v337 = vadd.f32 %v312, %v327
      %v338 = vld [vmem:[#allocation2 + $0xb] sm:$0xff]
      %v339 = vld [vmem:[#allocation2 + $0x13] sm:$0xff]
      %v340 = vld [vmem:[#allocation2 + $0x1b] sm:$0xff]
      %v341 = vld [vmem:[#allocation2 + $0x23] sm:$0xff]
      %v342 = vld [vmem:[#allocation2 + $0x2b] sm:$0xff]
      %v343 = vld [vmem:[#allocation2 + $0x33] sm:$0xff]
      %v344 = vld [vmem:[#allocation2 + $0x3b] sm:$0xff]
      %v345 = vld [vmem:[#allocation2 + $0x43] sm:$0xff]
      %v346 = vld [vmem:[#allocation2 + $0x4b] sm:$0xff]
      %v347 = vld [vmem:[#allocation2 + $0x53] sm:$0x3f]
      %v349 = vperm.slane %v215, 0
      %v351 = vmul.f32 %v338, %v349
      %v352 = vmul.f32 %v339, %v349
      %v353 = vmul.f32 %v340, %v349
      %v354 = vmul.f32 %v341, %v349
      %v355 = vmul.f32 %v342, %v349
      %v356 = vmul.f32 %v343, %v349
      %v357 = vmul.f32 %v344, %v349
      %v358 = vmul.f32 %v345, %v349
      %v359 = vmul.f32 %v346, %v349
      %v360 = vmul.f32 %v347, %v349
      %v361 = vadd.f32 %v328, %v351
      %v362 = vadd.f32 %v329, %v352
      %v363 = vadd.f32 %v330, %v353
      %v364 = vadd.f32 %v331, %v354
      %v365 = vadd.f32 %v332, %v355
      %v366 = vadd.f32 %v333, %v356
      %v367 = vadd.f32 %v334, %v357
      %v368 = vadd.f32 %v335, %v358
      %v369 = vadd.f32 %v336, %v359
      %v370 = vadd.f32 %v337, %v360
      %v371 = vld [vmem:[#allocation2 + $0xc] sm:$0xff]
      %v372 = vld [vmem:[#allocation2 + $0x14] sm:$0xff]
      %v373 = vld [vmem:[#allocation2 + $0x1c] sm:$0xff]
      %v374 = vld [vmem:[#allocation2 + $0x24] sm:$0xff]
      %v375 = vld [vmem:[#allocation2 + $0x2c] sm:$0xff]
      %v376 = vld [vmem:[#allocation2 + $0x34] sm:$0xff]
      %v377 = vld [vmem:[#allocation2 + $0x3c] sm:$0xff]
      %v378 = vld [vmem:[#allocation2 + $0x44] sm:$0xff]
      %v379 = vld [vmem:[#allocation2 + $0x4c] sm:$0xff]
      %v380 = vld [vmem:[#allocation2 + $0x54] sm:$0x3f]
      %v382 = vperm.slane %v217, 0
      %v384 = vmul.f32 %v371, %v382
      %v385 = vmul.f32 %v372, %v382
      %v386 = vmul.f32 %v373, %v382
      %v387 = vmul.f32 %v374, %v382
      %v388 = vmul.f32 %v375, %v382
      %v389 = vmul.f32 %v376, %v382
      %v390 = vmul.f32 %v377, %v382
      %v391 = vmul.f32 %v378, %v382
      %v392 = vmul.f32 %v379, %v382
      %v393 = vmul.f32 %v380, %v382
      %v394 = vadd.f32 %v361, %v384
      %v395 = vadd.f32 %v362, %v385
      %v396 = vadd.f32 %v363, %v386
      %v397 = vadd.f32 %v364, %v387
      %v398 = vadd.f32 %v365, %v388
      %v399 = vadd.f32 %v366, %v389
      %v400 = vadd.f32 %v367, %v390
      %v401 = vadd.f32 %v368, %v391
      %v402 = vadd.f32 %v369, %v392
      %v403 = vadd.f32 %v370, %v393
      %v404 = vld [vmem:[#allocation2 + $0x54] sm:$0xff]
      %v405 = vld [vmem:[#allocation2 + $0x5c] sm:$0x3f]
      %v407 = vperm.slane %v219, 0
      %v409 = vmul.f32 %v372, %v407
      %v410 = vmul.f32 %v373, %v407
      %v411 = vmul.f32 %v374, %v407
      %v412 = vmul.f32 %v375, %v407
      %v413 = vmul.f32 %v376, %v407
      %v414 = vmul.f32 %v377, %v407
      %v415 = vmul.f32 %v378, %v407
      %v416 = vmul.f32 %v379, %v407
      %v417 = vmul.f32 %v404, %v407
      %v418 = vmul.f32 %v405, %v407
      %v419 = vadd.f32 %v394, %v409
      %v420 = vadd.f32 %v395, %v410
      %v421 = vadd.f32 %v396, %v411
      %v422 = vadd.f32 %v397, %v412
      %v423 = vadd.f32 %v398, %v413
      %v424 = vadd.f32 %v399, %v414
      %v425 = vadd.f32 %v400, %v415
      %v426 = vadd.f32 %v401, %v416
      %v427 = vadd.f32 %v402, %v417
      %v428 = vadd.f32 %v403, %v418
      %v429 = vld [vmem:[#allocation2 + $0x15] sm:$0xff]
      %v430 = vld [vmem:[#allocation2 + $0x1d] sm:$0xff]
      %v431 = vld [vmem:[#allocation2 + $0x25] sm:$0xff]
      %v432 = vld [vmem:[#allocation2 + $0x2d] sm:$0xff]
      %v433 = vld [vmem:[#allocation2 + $0x35] sm:$0xff]
      %v434 = vld [vmem:[#allocation2 + $0x3d] sm:$0xff]
      %v435 = vld [vmem:[#allocation2 + $0x45] sm:$0xff]
      %v436 = vld [vmem:[#allocation2 + $0x4d] sm:$0xff]
      %v437 = vld [vmem:[#allocation2 + $0x55] sm:$0xff]
      %v438 = vld [vmem:[#allocation2 + $0x5d] sm:$0x3f]
      %v440 = vperm.slane %v221, 0
      %v442 = vmul.f32 %v429, %v440
      %v443 = vmul.f32 %v430, %v440
      %v444 = vmul.f32 %v431, %v440
      %v445 = vmul.f32 %v432, %v440
      %v446 = vmul.f32 %v433, %v440
      %v447 = vmul.f32 %v434, %v440
      %v448 = vmul.f32 %v435, %v440
      %v449 = vmul.f32 %v436, %v440
      %v450 = vmul.f32 %v437, %v440
      %v451 = vmul.f32 %v438, %v440
      %v452 = vadd.f32 %v419, %v442
      %v453 = vadd.f32 %v420, %v443
      %v454 = vadd.f32 %v421, %v444
      %v455 = vadd.f32 %v422, %v445
      %v456 = vadd.f32 %v423, %v446
      %v457 = vadd.f32 %v424, %v447
      %v458 = vadd.f32 %v425, %v448
      %v459 = vadd.f32 %v426, %v449
      %v460 = vadd.f32 %v427, %v450
      %v461 = vadd.f32 %v428, %v451
      %v462 = vld [vmem:[#allocation2 + $0x16] sm:$0xff]
      %v463 = vld [vmem:[#allocation2 + $0x1e] sm:$0xff]
      %v464 = vld [vmem:[#allocation2 + $0x26] sm:$0xff]
      %v465 = vld [vmem:[#allocation2 + $0x2e] sm:$0xff]
      %v466 = vld [vmem:[#allocation2 + $0x36] sm:$0xff]
      %v467 = vld [vmem:[#allocation2 + $0x3e] sm:$0xff]
      %v468 = vld [vmem:[#allocation2 + $0x46] sm:$0xff]
      %v469 = vld [vmem:[#allocation2 + $0x4e] sm:$0xff]
      %v470 = vld [vmem:[#allocation2 + $0x56] sm:$0xff]
      %v471 = vld [vmem:[#allocation2 + $0x5e] sm:$0x3f]
      %v473 = vperm.slane %v223, 0
      %v475 = vmul.f32 %v462, %v473
      %v476 = vmul.f32 %v463, %v473
      %v477 = vmul.f32 %v464, %v473
      %v478 = vmul.f32 %v465, %v473
      %v479 = vmul.f32 %v466, %v473
      %v480 = vmul.f32 %v467, %v473
      %v481 = vmul.f32 %v468, %v473
      %v482 = vmul.f32 %v469, %v473
      %v483 = vmul.f32 %v470, %v473
      %v484 = vmul.f32 %v471, %v473
      %v485 = vadd.f32 %v452, %v475
      %v486 = vadd.f32 %v453, %v476
      %v487 = vadd.f32 %v454, %v477
      %v488 = vadd.f32 %v455, %v478
      %v489 = vadd.f32 %v456, %v479
      %v490 = vadd.f32 %v457, %v480
      %v491 = vadd.f32 %v458, %v481
      %v492 = vadd.f32 %v459, %v482
      %v493 = vadd.f32 %v460, %v483
      %v494 = vadd.f32 %v461, %v484
      %v495 = vmax.f32 %v485, 0.0
      %v496 = vmax.f32 %v486, 0.0
      %v497 = vmax.f32 %v487, 0.0
      %v498 = vmax.f32 %v488, 0.0
      %v499 = vmax.f32 %v489, 0.0
      %v500 = vmax.f32 %v490, 0.0
      %v501 = vmax.f32 %v491, 0.0
      %v502 = vmax.f32 %v492, 0.0
      %v503 = vmax.f32 %v493, 0.0
      %v504 = vmax.f32 %v494, 0.0
      %v505 = vpack.c.bf16 %v496, %v495
      %v506 = vpack.c.bf16 %v498, %v497
      %v507 = vpack.c.bf16 %v500, %v499
      %v508 = vpack.c.bf16 %v502, %v501
      %v509 = vpack.c.bf16 %v504, %v503
      %v510 = vld [vmem:[%s2] sm:$0xf]
      %v511 = vld [vmem:[%s2 + $0x4] sm:$0xf]
      %v512 = vld [vmem:[%s2 + $0x8] sm:$0xf]
      %v513 = vld [vmem:[%s2 + $0xc] sm:$0xf]
      %v514 = vld [vmem:[%s2 + $0x10] sm:$0xf]
      %v515 = vld [vmem:[%s2 + $0x14] sm:$0xf]
      %v516 = vld [vmem:[%s2 + $0x18] sm:$0xf]
      %v517 = vld [vmem:[%s2 + $0x1c] sm:$0xf]
      %v518 = vld [vmem:[%s2 + $0x20] sm:$0xf]
      %v519 = vld [vmem:[%s2 + $0x24] sm:$0xf]
      %v520 = vld [vmem:[%s2 + $0x28] sm:$0xf]
      %v521 = vld [vmem:[%s2 + $0x2c] sm:$0xf]
      %v522 = vld [vmem:[%s2 + $0x30] sm:$0xf]
      %v523 = vld [vmem:[%s2 + $0x34] sm:$0xf]
      %v524 = vld [vmem:[%s2 + $0x38] sm:$0xf]
      %v525 = vld [vmem:[%s2 + $0x3c] sm:$0xf]
      %v542 = vunpack.c.l.b16 %v510
      %v543 = vunpack.c.l.b16 %v511
      %v544 = vunpack.c.l.b16 %v512
      %v545 = vunpack.c.l.b16 %v513
      %v546 = vunpack.c.l.b16 %v514
      %v547 = vunpack.c.l.b16 %v515
      %v548 = vunpack.c.l.b16 %v516
      %v549 = vunpack.c.l.b16 %v517
      %v550 = vunpack.c.l.b16 %v518
      %v551 = vunpack.c.l.b16 %v519
      %v552 = vunpack.c.l.b16 %v520
      %v553 = vunpack.c.l.b16 %v521
      %v554 = vunpack.c.l.b16 %v522
      %v555 = vunpack.c.l.b16 %v523
      %v556 = vunpack.c.l.b16 %v524
      %v557 = vunpack.c.l.b16 %v525
      %v558 = vpack.c.b16 %v543, %v542
      %v559 = vpack.c.b16 %v545, %v544
      %v560 = vpack.c.b16 %v547, %v546
      %v561 = vpack.c.b16 %v549, %v548
      %v562 = vpack.c.b16 %v551, %v550
      %v563 = vpack.c.b16 %v553, %v552
      %v564 = vpack.c.b16 %v555, %v554
      %v565 = vpack.c.b16 %v557, %v556
      %574 = vmatpush.bf16.msra.mxu0 %v565
      %575 = vmatpush.bf16.msra.mxu0 %v564
      %576 = vmatpush.bf16.msra.mxu0 %v563
      %577 = vmatpush.bf16.msra.mxu0 %v562
      %578 = vmatpush.bf16.msra.mxu0 %v561
      %579 = vmatpush.bf16.msra.mxu0 %v560
      %580 = vmatpush.bf16.msra.mxu0 %v559
      %581 = vmatpush.bf16.msra.mxu0 %v558
      %582 = vmatmul.bf16.gmra.mxu0 %v505
      %v583 = vpop.f32.mrf.mxu0
      %v584 = vadd.f32 0.0, %v583
      %v585 = vpop.f32.mrf.mxu0
      %v586 = vadd.f32 0.0, %v585
      %587 = vmatmul.bf16.gmra.mxu0 %v506
      %v588 = vpop.f32.mrf.mxu0
      %v589 = vadd.f32 0.0, %v588
      %v590 = vpop.f32.mrf.mxu0
      %v591 = vadd.f32 0.0, %v590
      %592 = vmatmul.bf16.gmra.mxu0 %v507
      %v593 = vpop.f32.mrf.mxu0
      %v594 = vadd.f32 0.0, %v593
      %v595 = vpop.f32.mrf.mxu0
      %v596 = vadd.f32 0.0, %v595
      %597 = vmatmul.bf16.gmra.mxu0 %v508
      %v598 = vpop.f32.mrf.mxu0
      %v599 = vadd.f32 0.0, %v598
      %v600 = vpop.f32.mrf.mxu0
      %v601 = vadd.f32 0.0, %v600
      %602 = vmatmul.bf16.gmra.mxu0 %v509
      %v603 = vpop.f32.mrf.mxu0
      %v604 = vadd.f32 0.0, %v603
      %v605 = vpop.f32.mrf.mxu0
      %v606 = vadd.f32 0.0, %v605
      %607 = vdwg.mxu0
      %v608 = vld [vmem:[%s165] sm:$0xf]
      %v609 = vunpack.c.l.bf16 %v608
      %v610 = vadd.f32 %v584, %v609
      %v611 = vpack.c.bf16 %v610, %v610
      %612 = vst [vmem:[%s170] sm:$0xf] %v611
      %v613 = vld [vmem:[%s165 + $0x4] sm:$0xf]
      %v614 = vunpack.c.l.bf16 %v613
      %v616 = vrot.slane %v614, 6
      %v618 = vadd.f32 %v586, %v616
      %v619 = vadd.f32 %v589, %v616
      %v620 = vpack.c.bf16 %v618, %v618
      %v621 = vpack.c.bf16 %v619, %v619
      %vm624 = vcmask 1042432
      %vm625 = vcmask 1046532
      %vm626 = vmor %vm624, %vm625
      %v627 = vrot.slane %v620, 5
      %v628 = vrot.slane %v627, 4
      %v629 = vrot.slane %v621, 5
      %v630 = vsel %vm626, %v628, %v629
      %632 = vst [vmem:[%s170 + $0x4] sm:$0xf] %v630
      %v633 = vld [vmem:[%s165 + $0x8] sm:$0xf]
      %v634 = vunpack.c.l.bf16 %v633
      %v636 = vrot.slane %v634, 4
      %v638 = vadd.f32 %v589, %v636
      %v639 = vadd.f32 %v591, %v636
      %v640 = vpack.c.bf16 %v638, %v638
      %v641 = vpack.c.bf16 %v639, %v639
      %vm644 = vcmask 1041408
      %vm645 = vcmask 1045508
      %vm646 = vmor %vm644, %vm645
      %v647 = vrot.slane %v640, 6
      %v648 = vrot.slane %v647, 4
      %v649 = vrot.slane %v641, 6
      %v650 = vsel %vm646, %v648, %v649
      %652 = vst [vmem:[%s170 + $0x8] sm:$0xf] %v650
      %v653 = vld [vmem:[%s165 + $0xc] sm:$0xf]
      %v654 = vunpack.c.l.bf16 %v653
      %v656 = vrot.slane %v654, 2
      %v658 = vadd.f32 %v591, %v656
      %v659 = vadd.f32 %v594, %v656
      %v660 = vpack.c.bf16 %v658, %v658
      %v661 = vpack.c.bf16 %v659, %v659
      %vm664 = vcmask 1040384
      %vm665 = vcmask 1044484
      %vm666 = vmor %vm664, %vm665
      %v667 = vrot.slane %v660, 7
      %v668 = vrot.slane %v667, 4
      %v669 = vrot.slane %v661, 7
      %v670 = vsel %vm666, %v668, %v669
      %672 = vst [vmem:[%s170 + $0xc] sm:$0xf] %v670
      %v673 = vld [vmem:[%s165 + $0x10] sm:$0xf]
      %v674 = vunpack.c.l.bf16 %v673
      %v675 = vadd.f32 %v596, %v674
      %v676 = vpack.c.bf16 %v675, %v675
      %677 = vst [vmem:[%s170 + $0x10] sm:$0xf] %v676
      %v678 = vld [vmem:[%s165 + $0x14] sm:$0xf]
      %v679 = vunpack.c.l.bf16 %v678
      %v681 = vrot.slane %v679, 6
      %v683 = vadd.f32 %v599, %v681
      %v684 = vadd.f32 %v601, %v681
      %v685 = vpack.c.bf16 %v683, %v683
      %v686 = vpack.c.bf16 %v684, %v684
      %v689 = vrot.slane %v685, 5
      %v690 = vrot.slane %v689, 4
      %v691 = vrot.slane %v686, 5
      %v692 = vsel %vm626, %v690, %v691
      %694 = vst [vmem:[%s170 + $0x14] sm:$0xf] %v692
      %v695 = vld [vmem:[%s165 + $0x18] sm:$0xf]
      %v696 = vunpack.c.l.bf16 %v695
      %v698 = vrot.slane %v696, 4
      %v700 = vadd.f32 %v601, %v698
      %v701 = vadd.f32 %v604, %v698
      %v702 = vpack.c.bf16 %v700, %v700
      %v703 = vpack.c.bf16 %v701, %v701
      %v706 = vrot.slane %v702, 6
      %v707 = vrot.slane %v706, 4
      %v708 = vrot.slane %v703, 6
      %v709 = vsel %vm646, %v707, %v708
      %711 = vst [vmem:[%s170 + $0x18] sm:$0xf] %v709
      %v712 = vld [vmem:[%s165 + $0x1c] sm:$0xf]
      %v713 = vunpack.c.l.bf16 %v712
      %v715 = vrot.slane %v713, 2
      %v717 = vadd.f32 %v604, %v715
      %v718 = vadd.f32 %v606, %v715
      %v719 = vpack.c.bf16 %v717, %v717
      %v720 = vpack.c.bf16 %v718, %v718
      %v723 = vrot.slane %v719, 7
      %v724 = vrot.slane %v723, 4
      %v725 = vrot.slane %v720, 7
      %v726 = vsel %vm666, %v724, %v725
      %728 = vst [vmem:[%s170 + $0x1c] sm:$0xf] %v726
      %p729 = scmp.lt.s32.totalorder %s14, 1
      %s730 = scalar_select %p729, %s14, 1
      %s731 = smul.addr %s730, 8
      %s732 = smul.addr %s731, 4
      %s733 = scalar_lea.vmem %s3, %s732
      // Predicated region
      $region33: #{_lambda_.9} parent=31 // pred_check
        %p734 = pneg %p100
      $region34: #{_lambda_.9} parent=31 // pred_check_branch
        %736 = sbr.rel (%p734) target = $region36
      $region35: #{_lambda_.9} parent=31 // pred_region
        _
      $region36: #{_lambda_.9} parent=31 // pred_fallthru
        _
    $region32: #{_lambda_.9} parent=5 // pred_fallthru
      _
    %p737 = scmp.le.s32.totalorder 2, %s9
    // Predicated region
    $region37: #{_lambda_.9} parent=5 // pred_check
      %p738 = pneg %p737
    $region38: #{_lambda_.9} parent=5 // pred_check_branch
      %740 = sbr.rel (%p738) target = $region40
    $region39: #{_lambda_.9} parent=5 // pred_region
      %s741 = ssub.s32 %s9, 2
      // Predicated region
      $region41: #{_lambda_.9} parent=39 // pred_check
        %p742 = pneg %p106
      $region42: #{_lambda_.9} parent=39 // pred_check_branch
        %744 = sbr.rel (%p742) target = $region44
      $region43: #{_lambda_.9} parent=39 // pred_region
        %p745 = scmp.lt.s32.totalorder %s15, 1
        %s746 = scalar_select %p745, %s15, 1
        %s747 = smul.addr %s746, 8
        %s748 = smul.addr %s747, 4
        %s749 = scalar_lea.vmem %s3, %s748
      $region44: #{_lambda_.9} parent=39 // pred_fallthru
        _
    $region40: #{_lambda_.9} parent=5 // pred_fallthru
      _
  $region6: #{_lambda_.9} parent=0 // loop_footer
    %s13 = sadd.s32 1, %s9
  $region7: #{_lambda_.9} parent=0 // loop_footer_branch
    %8 = sbr.rel target = $region3
  $region8: #{_lambda_.9} parent=0 // loop_exit
    _

// kernel: _lambda_.12
$region0: #{_lambda_.12}
  #allocation0 [shape = 'u32[]', space=smem, size = 0x4, offset = 0x4, fixed_abs, tag = 'smem constant byte address 0x4 - core index']
  #allocation1 [shape = 'u32[72,128]{1,0:T(1,128)}', space=vmem, size = 0x9000, scoped, tag = 'internal scratch']
  %s0 = inlined_call_operand.vmem [shape: bf16[32,128], index: 0, kind: input, shape index: {}]
  %s1 = inlined_call_operand.vmem [shape: bf16[128,128], index: 1, kind: input, shape index: {}]
  %s2 = inlined_call_operand.vmem [shape: bf16[32,128], index: 2, kind: output, shape index: {}]
  %s3 = sld [smem:[#allocation0]]
  $region18: #{_lambda_.12} parent=0
    _
  %s5 = ssub.s32 1, %s3
  %s6 = scalar_select 0, %s5, %s3
  // Predicated region
  $region2: #{_lambda_.12} parent=0 // pred_check
    _
  $region3: #{_lambda_.12} parent=0 // pred_check_branch
    %8 = sbr.rel (0) target = $region5
  $region4: #{_lambda_.12} parent=0 // pred_region
    _
  $region5: #{_lambda_.12} parent=0 // pred_fallthru
    _
  // Predicated region
  $region6: #{_lambda_.12} parent=0 // pred_check
    _
  $region7: #{_lambda_.12} parent=0 // pred_check_branch
    %10 = sbr.rel (0) target = $region9
  $region8: #{_lambda_.12} parent=0 // pred_region
    _
  $region9: #{_lambda_.12} parent=0 // pred_fallthru
    _
  %v11 = vld [vmem:[%s0] sm:$0xf]
  %v12 = vld [vmem:[%s0 + $0x4] sm:$0xf]
  %v13 = vld [vmem:[%s0 + $0x8] sm:$0xf]
  %v14 = vld [vmem:[%s0 + $0xc] sm:$0xf]
  %v15 = vld [vmem:[%s1] sm:$0xf]
  %v16 = vld [vmem:[%s1 + $0x4] sm:$0xf]
  %v17 = vld [vmem:[%s1 + $0x8] sm:$0xf]
  %v18 = vld [vmem:[%s1 + $0xc] sm:$0xf]
  %v19 = vld [vmem:[%s1 + $0x10] sm:$0xf]
  %v20 = vld [vmem:[%s1 + $0x14] sm:$0xf]
  %v21 = vld [vmem:[%s1 + $0x18] sm:$0xf]
  %v22 = vld [vmem:[%s1 + $0x1c] sm:$0xf]
  %v23 = vld [vmem:[%s1 + $0x20] sm:$0xf]
  %v24 = vld [vmem:[%s1 + $0x24] sm:$0xf]
  %v25 = vld [vmem:[%s1 + $0x28] sm:$0xf]
  %v26 = vld [vmem:[%s1 + $0x2c] sm:$0xf]
  %v27 = vld [vmem:[%s1 + $0x30] sm:$0xf]
  %v28 = vld [vmem:[%s1 + $0x34] sm:$0xf]
  %v29 = vld [vmem:[%s1 + $0x38] sm:$0xf]
  %v30 = vld [vmem:[%s1 + $0x3c] sm:$0xf]
  %v35 = vunpack.c.l.b16 %v11
  %v36 = vunpack.c.l.b16 %v12
  %v37 = vunpack.c.l.b16 %v13
  %v38 = vunpack.c.l.b16 %v14
  %v39 = vpack.c.b16 %v36, %v35
  %v40 = vpack.c.b16 %v38, %v37
  %v59 = vunpack.c.l.b16 %v15
  %v60 = vunpack.c.l.b16 %v16
  %v61 = vunpack.c.l.b16 %v17
  %v62 = vunpack.c.l.b16 %v18
  %v63 = vunpack.c.l.b16 %v19
  %v64 = vunpack.c.l.b16 %v20
  %v65 = vunpack.c.l.b16 %v21
  %v66 = vunpack.c.l.b16 %v22
  %v67 = vunpack.c.l.b16 %v23
  %v68 = vunpack.c.l.b16 %v24
  %v69 = vunpack.c.l.b16 %v25
  %v70 = vunpack.c.l.b16 %v26
  %v71 = vunpack.c.l.b16 %v27
  %v72 = vunpack.c.l.b16 %v28
  %v73 = vunpack.c.l.b16 %v29
  %v74 = vunpack.c.l.b16 %v30
  %v75 = vpack.c.b16 %v60, %v59
  %v76 = vpack.c.b16 %v62, %v61
  %v77 = vpack.c.b16 %v64, %v63
  %v78 = vpack.c.b16 %v66, %v65
  %v79 = vpack.c.b16 %v68, %v67
  %v80 = vpack.c.b16 %v70, %v69
  %v81 = vpack.c.b16 %v72, %v71
  %v82 = vpack.c.b16 %v74, %v73
  %91 = vmatpush.bf16.msra.mxu0 %v82
  %92 = vmatpush.bf16.msra.mxu0 %v81
  %93 = vmatpush.bf16.msra.mxu0 %v80
  %94 = vmatpush.bf16.msra.mxu0 %v79
  %95 = vmatpush.bf16.msra.mxu0 %v78
  %96 = vmatpush.bf16.msra.mxu0 %v77
  %97 = vmatpush.bf16.msra.mxu0 %v76
  %98 = vmatpush.bf16.msra.mxu0 %v75
  %99 = vmatmul.bf16.gmra.mxu0 %v39
  %v100 = vpop.f32.mrf.mxu0
  %v101 = vadd.f32 0.0, %v100
  %v102 = vpop.f32.mrf.mxu0
  %v103 = vadd.f32 0.0, %v102
  %104 = vmatmul.bf16.gmra.mxu0 %v40
  %v105 = vpop.f32.mrf.mxu0
  %v106 = vadd.f32 0.0, %v105
  %v107 = vpop.f32.mrf.mxu0
  %v108 = vadd.f32 0.0, %v107
  %109 = vdwg.mxu0
  %v110 = vmax.f32 %v101, 0.0
  %v111 = vmax.f32 %v103, 0.0
  %v112 = vmax.f32 %v106, 0.0
  %v113 = vmax.f32 %v108, 0.0
  %v114 = vpack.c.bf16 %v110, %v110
  %v115 = vpack.c.bf16 %v111, %v111
  %v116 = vpack.c.bf16 %v112, %v112
  %v117 = vpack.c.bf16 %v113, %v113
  %118 = vst [vmem:[%s2] sm:$0xf] %v114
  %119 = vst [vmem:[%s2 + $0x4] sm:$0xf] %v115
  %120 = vst [vmem:[%s2 + $0x8] sm:$0xf] %v116
  %121 = vst [vmem:[%s2 + $0xc] sm:$0xf] %v117
  // Predicated region
  $region10: #{_lambda_.12} parent=0 // pred_check
    _
  $region11: #{_lambda_.12} parent=0 // pred_check_branch
    %123 = sbr.rel (0) target = $region13
  $region12: #{_lambda_.12} parent=0 // pred_region
    _
  $region13: #{_lambda_.12} parent=0 // pred_fallthru
    _
  // Predicated region
  $region14: #{_lambda_.12} parent=0 // pred_check
    _
  $region15: #{_lambda_.12} parent=0 // pred_check_branch
    %125 = sbr.rel (0) target = $region17
  $region16: #{_lambda_.12} parent=0 // pred_region
    _
  $region17: #{_lambda_.12} parent=0 // pred_fallthru
    _

// kernel: _lambda_.10
$region0: #{_lambda_.10}
  #allocation0 [shape = 'u32[]', space=smem, size = 0x4, offset = 0x4, fixed_abs, tag = 'smem constant byte address 0x4 - core index']
  #allocation1 [shape = 'u32[72,128]{1,0:T(1,128)}', space=vmem, size = 0x9000, scoped, tag = 'internal scratch']
  #allocation2 [shape = 'f32[100,128]{1,0:T(8,128)}', space=vmem, size = 0xd000, scoped, tag = 'scratch operand']
  %s0 = inlined_call_operand.vmem [shape: bf16[2,64,128], index: 0, kind: input, shape index: {}]
  %s1 = inlined_call_operand.vmem [shape: bf16[128,128], index: 1, kind: input, shape index: {}]
  %s2 = inlined_call_operand.vmem [shape: f32[9,1,128], index: 2, kind: input, shape index: {}]
  %s3 = inlined_call_operand.vmem [shape: bf16[128,128], index: 3, kind: input, shape index: {}]
  %s4 = inlined_call_operand.vmem [shape: bf16[2,64,128], index: 4, kind: output, shape index: {}]
  %s5 = sld [smem:[#allocation0]]
  $region49: #{_lambda_.10} parent=0
    _
  %s7 = ssub.s32 1, %s5
  %s8 = scalar_select 0, %s7, %s5
  loop: start=0, step=1, limit=4
  $region2: #{_lambda_.10} parent=0 // loop_pre_header
    _
  $region3: #{_lambda_.10} parent=0 // loop_header
    %s10 = sphi 0, %s14
    %p11 = scmp.ge.s32.totalorder %s10, 4
    %s20 = sphi 0, %s22
    %s23 = sphi 0, %s20
    %s24 = sphi 0, %s23
    %s40 = sphi 0, %s24
    %s44 = sphi 0, %s44
    %s46 = sphi 0, %s44
    %s47 = sphi 0, %s46
    %s61 = sphi 0, %s47
    %s65 = sphi 0, %s65
    %s67 = sphi 0, %s65
    %s68 = sphi 0, %s67
    %s82 = sphi 0, %s68
    %s86 = sphi 0, %s86
    %s88 = sphi 0, %s86
    %s89 = sphi 0, %s88
    %s103 = sphi 0, %s89
    %s109 = sphi 0, %s111
    %s112 = sphi 0, %s109
    %s113 = sphi 0, %s112
    %s129 = sphi 0, %s113
  $region4: #{_lambda_.10} parent=0 // loop_header_branch
    %13 = sbr.rel (%p11) target = $region8
  $region5: #{_lambda_.10} parent=0 // loop_body
    %s15 = ssub.s32 %s10, 1
    %s16 = ssub.s32 %s10, 2
    %s17 = sadd.s32 %s10, 1
    %s18 = ssub.s32 %s10, %s17
    %p19 = scmp.eq.s32.totalorder %s18, 0
    %s21 = sadd.s32 %s20, 1
    %s22 = scalar_select %p19, %s20, %s21
    %p25 = pneg %p19
    %p26 = scmp.eq.s32.totalorder %s10, 1
    %p27 = por %p25, %p26
    %p28 = scmp.ne.s32.totalorder %s20, %s23
    %p29 = scmp.eq.s32.totalorder %s10, 0
    %p30 = por %p28, %p29
    %p31 = scmp.ne.s32.totalorder %s20, %s23
    %p32 = scmp.eq.s32.totalorder %s15, 1
    %p33 = por %p31, %p32
    %p34 = scmp.ne.s32.totalorder %s23, %s24
    %p35 = scmp.eq.s32.totalorder %s15, 0
    %p36 = por %p34, %p35
    %p37 = scmp.ne.s32.totalorder %s23, %s24
    %p38 = scmp.eq.s32.totalorder %s16, 1
    %p39 = por %p37, %p38
    %p41 = scmp.ne.s32.totalorder %s24, %s40
    %p42 = scmp.eq.s32.totalorder %s16, 0
    %p43 = por %p41, %p42
    %s45 = sadd.s32 %s44, 1
    %p48 = scmp.eq.s32.totalorder %s10, 1
    %p49 = scmp.ne.s32.totalorder %s44, %s46
    %p50 = scmp.eq.s32.totalorder %s10, 0
    %p51 = por %p49, %p50
    %p52 = scmp.ne.s32.totalorder %s44, %s46
    %p53 = scmp.eq.s32.totalorder %s15, 1
    %p54 = por %p52, %p53
    %p55 = scmp.ne.s32.totalorder %s46, %s47
    %p56 = scmp.eq.s32.totalorder %s15, 0
    %p57 = por %p55, %p56
    %p58 = scmp.ne.s32.totalorder %s46, %s47
    %p59 = scmp.eq.s32.totalorder %s16, 1
    %p60 = por %p58, %p59
    %p62 = scmp.ne.s32.totalorder %s47, %s61
    %p63 = scmp.eq.s32.totalorder %s16, 0
    %p64 = por %p62, %p63
    %s66 = sadd.s32 %s65, 1
    %p69 = scmp.eq.s32.totalorder %s10, 1
    %p70 = scmp.ne.s32.totalorder %s65, %s67
    %p71 = scmp.eq.s32.totalorder %s10, 0
    %p72 = por %p70, %p71
    %p73 = scmp.ne.s32.totalorder %s65, %s67
    %p74 = scmp.eq.s32.totalorder %s15, 1
    %p75 = por %p73, %p74
    %p76 = scmp.ne.s32.totalorder %s67, %s68
    %p77 = scmp.eq.s32.totalorder %s15, 0
    %p78 = por %p76, %p77
    %p79 = scmp.ne.s32.totalorder %s67, %s68
    %p80 = scmp.eq.s32.totalorder %s16, 1
    %p81 = por %p79, %p80
    %p83 = scmp.ne.s32.totalorder %s68, %s82
    %p84 = scmp.eq.s32.totalorder %s16, 0
    %p85 = por %p83, %p84
    %s87 = sadd.s32 %s86, 1
    %p90 = scmp.eq.s32.totalorder %s10, 1
    %p91 = scmp.ne.s32.totalorder %s86, %s88
    %p92 = scmp.eq.s32.totalorder %s10, 0
    %p93 = por %p91, %p92
    %p94 = scmp.ne.s32.totalorder %s86, %s88
    %p95 = scmp.eq.s32.totalorder %s15, 1
    %p96 = por %p94, %p95
    %p97 = scmp.ne.s32.totalorder %s88, %s89
    %p98 = scmp.eq.s32.totalorder %s15, 0
    %p99 = por %p97, %p98
    %p100 = scmp.ne.s32.totalorder %s88, %s89
    %p101 = scmp.eq.s32.totalorder %s16, 1
    %p102 = por %p100, %p101
    %p104 = scmp.ne.s32.totalorder %s89, %s103
    %p105 = scmp.eq.s32.totalorder %s16, 0
    %p106 = por %p104, %p105
    %s107 = ssub.s32 %s10, %s17
    %p108 = scmp.eq.s32.totalorder %s107, 0
    %s110 = sadd.s32 %s109, 1
    %s111 = scalar_select %p108, %s109, %s110
    %p114 = pneg %p108
    %p115 = scmp.eq.s32.totalorder %s10, 1
    %p116 = por %p114, %p115
    %p117 = scmp.ne.s32.totalorder %s109, %s112
    %p118 = scmp.eq.s32.totalorder %s10, 0
    %p119 = por %p117, %p118
    %p120 = scmp.ne.s32.totalorder %s109, %s112
    %p121 = scmp.eq.s32.totalorder %s15, 1
    %p122 = por %p120, %p121
    %p123 = scmp.ne.s32.totalorder %s112, %s113
    %p124 = scmp.eq.s32.totalorder %s15, 0
    %p125 = por %p123, %p124
    %p126 = scmp.ne.s32.totalorder %s112, %s113
    %p127 = scmp.eq.s32.totalorder %s16, 1
    %p128 = por %p126, %p127
    %p130 = scmp.ne.s32.totalorder %s113, %s129
    %p131 = scmp.eq.s32.totalorder %s16, 0
    %p132 = por %p130, %p131
    %p133 = scmp.le.s32.totalorder 1, %s10
    %p134 = scmp.lt.s32.totalorder %s10, 3
    %p135 = pnand %p133, %p134
    %p136 = pneg %p135
    // Predicated region
    $region9: #{_lambda_.10} parent=5 // pred_check
      _
    $region10: #{_lambda_.10} parent=5 // pred_check_branch
      %138 = sbr.rel (%p135) target = $region12
    $region11: #{_lambda_.10} parent=5 // pred_region
      %s139 = ssub.s32 %s10, 1
      // Predicated region
      $region13: #{_lambda_.10} parent=11 // pred_check
        %p140 = pneg %p57
      $region14: #{_lambda_.10} parent=11 // pred_check_branch
        %142 = sbr.rel (%p140) target = $region16
      $region15: #{_lambda_.10} parent=11 // pred_region
        _
      $region16: #{_lambda_.10} parent=11 // pred_fallthru
        _
      // Predicated region
      $region17: #{_lambda_.10} parent=11 // pred_check
        %p143 = pneg %p78
      $region18: #{_lambda_.10} parent=11 // pred_check_branch
        %145 = sbr.rel (%p143) target = $region20
      $region19: #{_lambda_.10} parent=11 // pred_region
        _
      $region20: #{_lambda_.10} parent=11 // pred_fallthru
        _
      // Predicated region
      $region21: #{_lambda_.10} parent=11 // pred_check
        %p146 = pneg %p99
      $region22: #{_lambda_.10} parent=11 // pred_check_branch
        %148 = sbr.rel (%p146) target = $region24
      $region23: #{_lambda_.10} parent=11 // pred_region
        _
      $region24: #{_lambda_.10} parent=11 // pred_fallthru
        _
    $region12: #{_lambda_.10} parent=5 // pred_fallthru
      _
    %p149 = scmp.lt.s32.totalorder %s10, 2
    // Predicated region
    $region25: #{_lambda_.10} parent=5 // pred_check
      %p150 = pneg %p149
    $region26: #{_lambda_.10} parent=5 // pred_check_branch
      %152 = sbr.rel (%p150) target = $region28
    $region27: #{_lambda_.10} parent=5 // pred_region
      // Predicated region
      $region29: #{_lambda_.10} parent=27 // pred_check
        %p153 = pneg %p30
      $region30: #{_lambda_.10} parent=27 // pred_check_branch
        %155 = sbr.rel (%p153) target = $region32
      $region31: #{_lambda_.10} parent=27 // pred_region
        %p156 = scmp.lt.s32.totalorder %s10, 1
        %s157 = scalar_select %p156, %s10, 1
        %s158 = smul.addr %s157, 8
        %s159 = smul.addr %s158, 4
        %s160 = scalar_lea.vmem %s0, %s159
      $region32: #{_lambda_.10} parent=27 // pred_fallthru
        _
    $region28: #{_lambda_.10} parent=5 // pred_fallthru
      _
    %p161 = scmp.le.s32.totalorder 1, %s10
    %p162 = scmp.lt.s32.totalorder %s10, 3
    %p163 = pnand %p161, %p162
    %p164 = pneg %p163
    // Predicated region
    $region33: #{_lambda_.10} parent=5 // pred_check
      _
    $region34: #{_lambda_.10} parent=5 // pred_check_branch
      %166 = sbr.rel (%p163) target = $region36
    $region35: #{_lambda_.10} parent=5 // pred_region
      %s167 = ssub.s32 %s10, 1
      %p168 = scmp.lt.s32.totalorder %s15, 1
      %s169 = scalar_select %p168, %s15, 1
      %s170 = smul.addr %s169, 8
      %s171 = smul.addr %s170, 4
      %s172 = scalar_lea.vmem %s0, %s171
      %p173 = pneg %p36
      %p174 = pneg %p33
      %p175 = pneg %p57
      %p176 = pneg %p54
      %p177 = pneg %p78
      %p178 = pneg %p75
      %p179 = pneg %p99
      %p180 = pneg %p96
      %p181 = pneg %p125
      %p182 = pneg %p122
      %p183 = scmp.lt.s32.totalorder %s15, 1
      %s184 = scalar_select %p183, %s15, 1
      %s185 = smul.addr %s184, 8
      %s186 = smul.addr %s185, 4
      %s187 = scalar_lea.vmem %s4, %s186
      %p188 = scmp.lt.s32.totalorder %s15, 1
      %s189 = scalar_select %p188, %s15, 1
      %s190 = smul.addr %s189, 8
      %s191 = smul.addr %s190, 4
      %s192 = scalar_lea.vmem %s0, %s191
      %p193 = scmp.lt.s32.totalorder %s15, 1
      %s194 = scalar_select %p193, %s15, 1
      %s195 = smul.addr %s194, 8
      %s196 = smul.addr %s195, 4
      %s197 = scalar_lea.vmem %s4, %s196
      %198 = vst [vmem:[#allocation2] sm:$0xff] 0.0
      %199 = vst [vmem:[#allocation2 + $0x8] sm:$0x7] 0.0
      %200 = vst [vmem:[#allocation2 + $0x13] sm:$0x3] 0.0
      %201 = vst [vmem:[#allocation2 + $0x1d] sm:$0x3] 0.0
      %202 = vst [vmem:[#allocation2 + $0x27] sm:$0x3] 0.0
      %203 = vst [vmem:[#allocation2 + $0x31] sm:$0x3] 0.0
      %204 = vst [vmem:[#allocation2 + $0x3b] sm:$0x3] 0.0
      %205 = vst [vmem:[#allocation2 + $0x45] sm:$0x3] 0.0
      %206 = vst [vmem:[#allocation2 + $0x4f] sm:$0x3] 0.0
      %207 = vst [vmem:[#allocation2 + $0x59] sm:$0x3] 0.0
      %208 = vst [vmem:[#allocation2 + $0x5b] sm:$0xff] 0.0
      %209 = vst [vmem:[#allocation2 + $0x63] sm:$0x1] 0.0
      %v210 = vld [vmem:[%s192] sm:$0xf]
      %v211 = vld [vmem:[%s192 + $0x4] sm:$0xf]
      %v212 = vld [vmem:[%s192 + $0x8] sm:$0xf]
      %v213 = vld [vmem:[%s192 + $0xc] sm:$0xf]
      %v214 = vld [vmem:[%s192 + $0x10] sm:$0xf]
      %v215 = vld [vmem:[%s192 + $0x14] sm:$0xf]
      %v216 = vld [vmem:[%s192 + $0x18] sm:$0xf]
      %v217 = vld [vmem:[%s192 + $0x1c] sm:$0xf]
      %v218 = vld [vmem:[%s1] sm:$0xf]
      %v219 = vld [vmem:[%s1 + $0x4] sm:$0xf]
      %v220 = vld [vmem:[%s1 + $0x8] sm:$0xf]
      %v221 = vld [vmem:[%s1 + $0xc] sm:$0xf]
      %v222 = vld [vmem:[%s1 + $0x10] sm:$0xf]
      %v223 = vld [vmem:[%s1 + $0x14] sm:$0xf]
      %v224 = vld [vmem:[%s1 + $0x18] sm:$0xf]
      %v225 = vld [vmem:[%s1 + $0x1c] sm:$0xf]
      %v226 = vld [vmem:[%s1 + $0x20] sm:$0xf]
      %v227 = vld [vmem:[%s1 + $0x24] sm:$0xf]
      %v228 = vld [vmem:[%s1 + $0x28] sm:$0xf]
      %v229 = vld [vmem:[%s1 + $0x2c] sm:$0xf]
      %v230 = vld [vmem:[%s1 + $0x30] sm:$0xf]
      %v231 = vld [vmem:[%s1 + $0x34] sm:$0xf]
      %v232 = vld [vmem:[%s1 + $0x38] sm:$0xf]
      %v233 = vld [vmem:[%s1 + $0x3c] sm:$0xf]
      %v242 = vunpack.c.l.b16 %v210
      %v243 = vunpack.c.l.b16 %v211
      %v244 = vunpack.c.l.b16 %v212
      %v245 = vunpack.c.l.b16 %v213
      %v246 = vunpack.c.l.b16 %v214
      %v247 = vunpack.c.l.b16 %v215
      %v248 = vunpack.c.l.b16 %v216
      %v249 = vunpack.c.l.b16 %v217
      %v250 = vpack.c.b16 %v243, %v242
      %v251 = vpack.c.b16 %v245, %v244
      %v252 = vpack.c.b16 %v247, %v246
      %v253 = vpack.c.b16 %v249, %v248
      %v274 = vunpack.c.l.b16 %v218
      %v275 = vunpack.c.l.b16 %v219
      %v276 = vunpack.c.l.b16 %v220
      %v277 = vunpack.c.l.b16 %v221
      %v278 = vunpack.c.l.b16 %v222
      %v279 = vunpack.c.l.b16 %v223
      %v280 = vunpack.c.l.b16 %v224
      %v281 = vunpack.c.l.b16 %v225
      %v282 = vunpack.c.l.b16 %v226
      %v283 = vunpack.c.l.b16 %v227
      %v284 = vunpack.c.l.b16 %v228
      %v285 = vunpack.c.l.b16 %v229
      %v286 = vunpack.c.l.b16 %v230
      %v287 = vunpack.c.l.b16 %v231
      %v288 = vunpack.c.l.b16 %v232
      %v289 = vunpack.c.l.b16 %v233
      %v290 = vpack.c.b16 %v275, %v274
      %v291 = vpack.c.b16 %v277, %v276
      %v292 = vpack.c.b16 %v279, %v278
      %v293 = vpack.c.b16 %v281, %v280
      %v294 = vpack.c.b16 %v283, %v282
      %v295 = vpack.c.b16 %v285, %v284
      %v296 = vpack.c.b16 %v287, %v286
      %v297 = vpack.c.b16 %v289, %v288
      %306 = vmatpush.bf16.msra.mxu0 %v297
      %307 = vmatpush.bf16.msra.mxu0 %v296
      %308 = vmatpush.bf16.msra.mxu0 %v295
      %309 = vmatpush.bf16.msra.mxu0 %v294
      %310 = vmatpush.bf16.msra.mxu0 %v293
      %311 = vmatpush.bf16.msra.mxu0 %v292
      %312 = vmatpush.bf16.msra.mxu0 %v291
      %313 = vmatpush.bf16.msra.mxu0 %v290
      %314 = vmatmul.bf16.gmra.mxu0 %v250
      %v315 = vpop.f32.mrf.mxu0
      %v316 = vadd.f32 0.0, %v315
      %v317 = vpop.f32.mrf.mxu0
      %v318 = vadd.f32 0.0, %v317
      %319 = vmatmul.bf16.gmra.mxu0 %v251
      %v320 = vpop.f32.mrf.mxu0
      %v321 = vadd.f32 0.0, %v320
      %v322 = vpop.f32.mrf.mxu0
      %v323 = vadd.f32 0.0, %v322
      %324 = vmatmul.bf16.gmra.mxu0 %v252
      %v325 = vpop.f32.mrf.mxu0
      %v326 = vadd.f32 0.0, %v325
      %v327 = vpop.f32.mrf.mxu0
      %v328 = vadd.f32 0.0, %v327
      %329 = vmatmul.bf16.gmra.mxu0 %v253
      %v330 = vpop.f32.mrf.mxu0
      %v331 = vadd.f32 0.0, %v330
      %v332 = vpop.f32.mrf.mxu0
      %v333 = vadd.f32 0.0, %v332
      %334 = vdwg.mxu0
      %v335 = vmax.f32 %v316, 0.0
      %v336 = vmax.f32 %v318, 0.0
      %v337 = vmax.f32 %v321, 0.0
      %v338 = vmax.f32 %v323, 0.0
      %v339 = vmax.f32 %v326, 0.0
      %v340 = vmax.f32 %v328, 0.0
      %v341 = vmax.f32 %v331, 0.0
      %v342 = vmax.f32 %v333, 0.0
      %343 = vst [vmem:[#allocation2 + $0xb] sm:$0xff] %v335
      %344 = vst [vmem:[#allocation2 + $0x15] sm:$0xff] %v336
      %345 = vst [vmem:[#allocation2 + $0x1f] sm:$0xff] %v337
      %346 = vst [vmem:[#allocation2 + $0x29] sm:$0xff] %v338
      %347 = vst [vmem:[#allocation2 + $0x33] sm:$0xff] %v339
      %348 = vst [vmem:[#allocation2 + $0x3d] sm:$0xff] %v340
      %349 = vst [vmem:[#allocation2 + $0x47] sm:$0xff] %v341
      %350 = vst [vmem:[#allocation2 + $0x51] sm:$0xff] %v342
      %v351 = vld [vmem:[%s2] sm:$0x1]
      %s352 = scalar_lea.vmem %s2, 1
      %v353 = vld [vmem:[%s352] sm:$0x1]
      %s354 = scalar_lea.vmem %s2, 2
      %v355 = vld [vmem:[%s354] sm:$0x1]
      %s356 = scalar_lea.vmem %s2, 3
      %v357 = vld [vmem:[%s356] sm:$0x1]
      %s358 = scalar_lea.vmem %s2, 4
      %v359 = vld [vmem:[%s358] sm:$0x1]
      %s360 = scalar_lea.vmem %s2, 5
      %v361 = vld [vmem:[%s360] sm:$0x1]
      %s362 = scalar_lea.vmem %s2, 6
      %v363 = vld [vmem:[%s362] sm:$0x1]
      %s364 = scalar_lea.vmem %s2, 7
      %v365 = vld [vmem:[%s364] sm:$0x1]
      %s366 = scalar_lea.vmem %s2, 8
      %v367 = vld [vmem:[%s366] sm:$0x1]
      %v368 = vld [vmem:[#allocation2] sm:$0xff]
      %v369 = vld [vmem:[#allocation2 + $0x8] sm:$0xff]
      %v370 = vld [vmem:[#allocation2 + $0x10] sm:$0xff]
      %v371 = vld [vmem:[#allocation2 + $0x18] sm:$0xff]
      %v372 = vld [vmem:[#allocation2 + $0x20] sm:$0xff]
      %v373 = vld [vmem:[#allocation2 + $0x28] sm:$0xff]
      %v374 = vld [vmem:[#allocation2 + $0x30] sm:$0xff]
      %v375 = vld [vmem:[#allocation2 + $0x38] sm:$0xff]
      %v376 = vld [vmem:[#allocation2 + $0x40] sm:$0xff]
      %v377 = vld [vmem:[#allocation2 + $0x48] sm:$0x3f]
      %v379 = vperm.slane %v351, 0
      %v381 = vmul.f32 %v368, %v379
      %v382 = vmul.f32 %v369, %v379
      %v383 = vmul.f32 %v370, %v379
      %v384 = vmul.f32 %v371, %v379
      %v385 = vmul.f32 %v372, %v379
      %v386 = vmul.f32 %v373, %v379
      %v387 = vmul.f32 %v374, %v379
      %v388 = vmul.f32 %v375, %v379
      %v389 = vmul.f32 %v376, %v379
      %v390 = vmul.f32 %v377, %v379
      %v391 = vld [vmem:[#allocation2 + $0x1] sm:$0xff]
      %v392 = vld [vmem:[#allocation2 + $0x9] sm:$0xff]
      %v393 = vld [vmem:[#allocation2 + $0x11] sm:$0xff]
      %v394 = vld [vmem:[#allocation2 + $0x19] sm:$0xff]
      %v395 = vld [vmem:[#allocation2 + $0x21] sm:$0xff]
      %v396 = vld [vmem:[#allocation2 + $0x29] sm:$0xff]
      %v397 = vld [vmem:[#allocation2 + $0x31] sm:$0xff]
      %v398 = vld [vmem:[#allocation2 + $0x39] sm:$0xff]
      %v399 = vld [vmem:[#allocation2 + $0x41] sm:$0xff]
      %v400 = vld [vmem:[#allocation2 + $0x49] sm:$0x3f]
      %v402 = vperm.slane %v353, 0
      %v404 = vmul.f32 %v391, %v402
      %v405 = vmul.f32 %v392, %v402
      %v406 = vmul.f32 %v393, %v402
      %v407 = vmul.f32 %v394, %v402
      %v408 = vmul.f32 %v395, %v402
      %v409 = vmul.f32 %v396, %v402
      %v410 = vmul.f32 %v397, %v402
      %v411 = vmul.f32 %v398, %v402
      %v412 = vmul.f32 %v399, %v402
      %v413 = vmul.f32 %v400, %v402
      %v414 = vadd.f32 %v381, %v404
      %v415 = vadd.f32 %v382, %v405
      %v416 = vadd.f32 %v383, %v406
      %v417 = vadd.f32 %v384, %v407
      %v418 = vadd.f32 %v385, %v408
      %v419 = vadd.f32 %v386, %v409
      %v420 = vadd.f32 %v387, %v410
      %v421 = vadd.f32 %v388, %v411
      %v422 = vadd.f32 %v389, %v412
      %v423 = vadd.f32 %v390, %v413
      %v424 = vld [vmem:[#allocation2 + $0x2] sm:$0xff]
      %v425 = vld [vmem:[#allocation2 + $0xa] sm:$0xff]
      %v426 = vld [vmem:[#allocation2 + $0x12] sm:$0xff]
      %v427 = vld [vmem:[#allocation2 + $0x1a] sm:$0xff]
      %v428 = vld [vmem:[#allocation2 + $0x22] sm:$0xff]
      %v429 = vld [vmem:[#allocation2 + $0x2a] sm:$0xff]
      %v430 = vld [vmem:[#allocation2 + $0x32] sm:$0xff]
      %v431 = vld [vmem:[#allocation2 + $0x3a] sm:$0xff]
      %v432 = vld [vmem:[#allocation2 + $0x42] sm:$0xff]
      %v433 = vld [vmem:[#allocation2 + $0x4a] sm:$0x3f]
      %v435 = vperm.slane %v355, 0
      %v437 = vmul.f32 %v424, %v435
      %v438 = vmul.f32 %v425, %v435
      %v439 = vmul.f32 %v426, %v435
      %v440 = vmul.f32 %v427, %v435
      %v441 = vmul.f32 %v428, %v435
      %v442 = vmul.f32 %v429, %v435
      %v443 = vmul.f32 %v430, %v435
      %v444 = vmul.f32 %v431, %v435
      %v445 = vmul.f32 %v432, %v435
      %v446 = vmul.f32 %v433, %v435
      %v447 = vadd.f32 %v414, %v437
      %v448 = vadd.f32 %v415, %v438
      %v449 = vadd.f32 %v416, %v439
      %v450 = vadd.f32 %v417, %v440
      %v451 = vadd.f32 %v418, %v441
      %v452 = vadd.f32 %v419, %v442
      %v453 = vadd.f32 %v420, %v443
      %v454 = vadd.f32 %v421, %v444
      %v455 = vadd.f32 %v422, %v445
      %v456 = vadd.f32 %v423, %v446
      %v457 = vld [vmem:[#allocation2 + $0x4a] sm:$0xff]
      %v458 = vld [vmem:[#allocation2 + $0x52] sm:$0x3f]
      %v460 = vperm.slane %v357, 0
      %v462 = vmul.f32 %v425, %v460
      %v463 = vmul.f32 %v426, %v460
      %v464 = vmul.f32 %v427, %v460
      %v465 = vmul.f32 %v428, %v460
      %v466 = vmul.f32 %v429, %v460
      %v467 = vmul.f32 %v430, %v460
      %v468 = vmul.f32 %v431, %v460
      %v469 = vmul.f32 %v432, %v460
      %v470 = vmul.f32 %v457, %v460
      %v471 = vmul.f32 %v458, %v460
      %v472 = vadd.f32 %v447, %v462
      %v473 = vadd.f32 %v448, %v463
      %v474 = vadd.f32 %v449, %v464
      %v475 = vadd.f32 %v450, %v465
      %v476 = vadd.f32 %v451, %v466
      %v477 = vadd.f32 %v452, %v467
      %v478 = vadd.f32 %v453, %v468
      %v479 = vadd.f32 %v454, %v469
      %v480 = vadd.f32 %v455, %v470
      %v481 = vadd.f32 %v456, %v471
      %v482 = vld [vmem:[#allocation2 + $0xb] sm:$0xff]
      %v483 = vld [vmem:[#allocation2 + $0x13] sm:$0xff]
      %v484 = vld [vmem:[#allocation2 + $0x1b] sm:$0xff]
      %v485 = vld [vmem:[#allocation2 + $0x23] sm:$0xff]
      %v486 = vld [vmem:[#allocation2 + $0x2b] sm:$0xff]
      %v487 = vld [vmem:[#allocation2 + $0x33] sm:$0xff]
      %v488 = vld [vmem:[#allocation2 + $0x3b] sm:$0xff]
      %v489 = vld [vmem:[#allocation2 + $0x43] sm:$0xff]
      %v490 = vld [vmem:[#allocation2 + $0x4b] sm:$0xff]
      %v491 = vld [vmem:[#allocation2 + $0x53] sm:$0x3f]
      %v493 = vperm.slane %v359, 0
      %v495 = vmul.f32 %v482, %v493
      %v496 = vmul.f32 %v483, %v493
      %v497 = vmul.f32 %v484, %v493
      %v498 = vmul.f32 %v485, %v493
      %v499 = vmul.f32 %v486, %v493
      %v500 = vmul.f32 %v487, %v493
      %v501 = vmul.f32 %v488, %v493
      %v502 = vmul.f32 %v489, %v493
      %v503 = vmul.f32 %v490, %v493
      %v504 = vmul.f32 %v491, %v493
      %v505 = vadd.f32 %v472, %v495
      %v506 = vadd.f32 %v473, %v496
      %v507 = vadd.f32 %v474, %v497
      %v508 = vadd.f32 %v475, %v498
      %v509 = vadd.f32 %v476, %v499
      %v510 = vadd.f32 %v477, %v500
      %v511 = vadd.f32 %v478, %v501
      %v512 = vadd.f32 %v479, %v502
      %v513 = vadd.f32 %v480, %v503
      %v514 = vadd.f32 %v481, %v504
      %v515 = vld [vmem:[#allocation2 + $0xc] sm:$0xff]
      %v516 = vld [vmem:[#allocation2 + $0x14] sm:$0xff]
      %v517 = vld [vmem:[#allocation2 + $0x1c] sm:$0xff]
      %v518 = vld [vmem:[#allocation2 + $0x24] sm:$0xff]
      %v519 = vld [vmem:[#allocation2 + $0x2c] sm:$0xff]
      %v520 = vld [vmem:[#allocation2 + $0x34] sm:$0xff]
      %v521 = vld [vmem:[#allocation2 + $0x3c] sm:$0xff]
      %v522 = vld [vmem:[#allocation2 + $0x44] sm:$0xff]
      %v523 = vld [vmem:[#allocation2 + $0x4c] sm:$0xff]
      %v524 = vld [vmem:[#allocation2 + $0x54] sm:$0x3f]
      %v526 = vperm.slane %v361, 0
      %v528 = vmul.f32 %v515, %v526
      %v529 = vmul.f32 %v516, %v526
      %v530 = vmul.f32 %v517, %v526
      %v531 = vmul.f32 %v518, %v526
      %v532 = vmul.f32 %v519, %v526
      %v533 = vmul.f32 %v520, %v526
      %v534 = vmul.f32 %v521, %v526
      %v535 = vmul.f32 %v522, %v526
      %v536 = vmul.f32 %v523, %v526
      %v537 = vmul.f32 %v524, %v526
      %v538 = vadd.f32 %v505, %v528
      %v539 = vadd.f32 %v506, %v529
      %v540 = vadd.f32 %v507, %v530
      %v541 = vadd.f32 %v508, %v531
      %v542 = vadd.f32 %v509, %v532
      %v543 = vadd.f32 %v510, %v533
      %v544 = vadd.f32 %v511, %v534
      %v545 = vadd.f32 %v512, %v535
      %v546 = vadd.f32 %v513, %v536
      %v547 = vadd.f32 %v514, %v537
      %v548 = vld [vmem:[#allocation2 + $0x54] sm:$0xff]
      %v549 = vld [vmem:[#allocation2 + $0x5c] sm:$0x3f]
      %v551 = vperm.slane %v363, 0
      %v553 = vmul.f32 %v516, %v551
      %v554 = vmul.f32 %v517, %v551
      %v555 = vmul.f32 %v518, %v551
      %v556 = vmul.f32 %v519, %v551
      %v557 = vmul.f32 %v520, %v551
      %v558 = vmul.f32 %v521, %v551
      %v559 = vmul.f32 %v522, %v551
      %v560 = vmul.f32 %v523, %v551
      %v561 = vmul.f32 %v548, %v551
      %v562 = vmul.f32 %v549, %v551
      %v563 = vadd.f32 %v538, %v553
      %v564 = vadd.f32 %v539, %v554
      %v565 = vadd.f32 %v540, %v555
      %v566 = vadd.f32 %v541, %v556
      %v567 = vadd.f32 %v542, %v557
      %v568 = vadd.f32 %v543, %v558
      %v569 = vadd.f32 %v544, %v559
      %v570 = vadd.f32 %v545, %v560
      %v571 = vadd.f32 %v546, %v561
      %v572 = vadd.f32 %v547, %v562
      %v573 = vld [vmem:[#allocation2 + $0x15] sm:$0xff]
      %v574 = vld [vmem:[#allocation2 + $0x1d] sm:$0xff]
      %v575 = vld [vmem:[#allocation2 + $0x25] sm:$0xff]
      %v576 = vld [vmem:[#allocation2 + $0x2d] sm:$0xff]
      %v577 = vld [vmem:[#allocation2 + $0x35] sm:$0xff]
      %v578 = vld [vmem:[#allocation2 + $0x3d] sm:$0xff]
      %v579 = vld [vmem:[#allocation2 + $0x45] sm:$0xff]
      %v580 = vld [vmem:[#allocation2 + $0x4d] sm:$0xff]
      %v581 = vld [vmem:[#allocation2 + $0x55] sm:$0xff]
      %v582 = vld [vmem:[#allocation2 + $0x5d] sm:$0x3f]
      %v584 = vperm.slane %v365, 0
      %v586 = vmul.f32 %v573, %v584
      %v587 = vmul.f32 %v574, %v584
      %v588 = vmul.f32 %v575, %v584
      %v589 = vmul.f32 %v576, %v584
      %v590 = vmul.f32 %v577, %v584
      %v591 = vmul.f32 %v578, %v584
      %v592 = vmul.f32 %v579, %v584
      %v593 = vmul.f32 %v580, %v584
      %v594 = vmul.f32 %v581, %v584
      %v595 = vmul.f32 %v582, %v584
      %v596 = vadd.f32 %v563, %v586
      %v597 = vadd.f32 %v564, %v587
      %v598 = vadd.f32 %v565, %v588
      %v599 = vadd.f32 %v566, %v589
      %v600 = vadd.f32 %v567, %v590
      %v601 = vadd.f32 %v568, %v591
      %v602 = vadd.f32 %v569, %v592
      %v603 = vadd.f32 %v570, %v593
      %v604 = vadd.f32 %v571, %v594
      %v605 = vadd.f32 %v572, %v595
      %v606 = vld [vmem:[#allocation2 + $0x16] sm:$0xff]
      %v607 = vld [vmem:[#allocation2 + $0x1e] sm:$0xff]
      %v608 = vld [vmem:[#allocation2 + $0x26] sm:$0xff]
      %v609 = vld [vmem:[#allocation2 + $0x2e] sm:$0xff]
      %v610 = vld [vmem:[#allocation2 + $0x36] sm:$0xff]
      %v611 = vld [vmem:[#allocation2 + $0x3e] sm:$0xff]
      %v612 = vld [vmem:[#allocation2 + $0x46] sm:$0xff]
      %v613 = vld [vmem:[#allocation2 + $0x4e] sm:$0xff]
      %v614 = vld [vmem:[#allocation2 + $0x56] sm:$0xff]
      %v615 = vld [vmem:[#allocation2 + $0x5e] sm:$0x3f]
      %v617 = vperm.slane %v367, 0
      %v619 = vmul.f32 %v606, %v617
      %v620 = vmul.f32 %v607, %v617
      %v621 = vmul.f32 %v608, %v617
      %v622 = vmul.f32 %v609, %v617
      %v623 = vmul.f32 %v610, %v617
      %v624 = vmul.f32 %v611, %v617
      %v625 = vmul.f32 %v612, %v617
      %v626 = vmul.f32 %v613, %v617
      %v627 = vmul.f32 %v614, %v617
      %v628 = vmul.f32 %v615, %v617
      %v629 = vadd.f32 %v596, %v619
      %v630 = vadd.f32 %v597, %v620
      %v631 = vadd.f32 %v598, %v621
      %v632 = vadd.f32 %v599, %v622
      %v633 = vadd.f32 %v600, %v623
      %v634 = vadd.f32 %v601, %v624
      %v635 = vadd.f32 %v602, %v625
      %v636 = vadd.f32 %v603, %v626
      %v637 = vadd.f32 %v604, %v627
      %v638 = vadd.f32 %v605, %v628
      %v639 = vmax.f32 %v629, 0.0
      %v640 = vmax.f32 %v630, 0.0
      %v641 = vmax.f32 %v631, 0.0
      %v642 = vmax.f32 %v632, 0.0
      %v643 = vmax.f32 %v633, 0.0
      %v644 = vmax.f32 %v634, 0.0
      %v645 = vmax.f32 %v635, 0.0
      %v646 = vmax.f32 %v636, 0.0
      %v647 = vmax.f32 %v637, 0.0
      %v648 = vmax.f32 %v638, 0.0
      %v649 = vpack.c.bf16 %v640, %v639
      %v650 = vpack.c.bf16 %v642, %v641
      %v651 = vpack.c.bf16 %v644, %v643
      %v652 = vpack.c.bf16 %v646, %v645
      %v653 = vpack.c.bf16 %v648, %v647
      %v654 = vld [vmem:[%s3] sm:$0xf]
      %v655 = vld [vmem:[%s3 + $0x4] sm:$0xf]
      %v656 = vld [vmem:[%s3 + $0x8] sm:$0xf]
      %v657 = vld [vmem:[%s3 + $0xc] sm:$0xf]
      %v658 = vld [vmem:[%s3 + $0x10] sm:$0xf]
      %v659 = vld [vmem:[%s3 + $0x14] sm:$0xf]
      %v660 = vld [vmem:[%s3 + $0x18] sm:$0xf]
      %v661 = vld [vmem:[%s3 + $0x1c] sm:$0xf]
      %v662 = vld [vmem:[%s3 + $0x20] sm:$0xf]
      %v663 = vld [vmem:[%s3 + $0x24] sm:$0xf]
      %v664 = vld [vmem:[%s3 + $0x28] sm:$0xf]
      %v665 = vld [vmem:[%s3 + $0x2c] sm:$0xf]
      %v666 = vld [vmem:[%s3 + $0x30] sm:$0xf]
      %v667 = vld [vmem:[%s3 + $0x34] sm:$0xf]
      %v668 = vld [vmem:[%s3 + $0x38] sm:$0xf]
      %v669 = vld [vmem:[%s3 + $0x3c] sm:$0xf]
      %v686 = vunpack.c.l.b16 %v654
      %v687 = vunpack.c.l.b16 %v655
      %v688 = vunpack.c.l.b16 %v656
      %v689 = vunpack.c.l.b16 %v657
      %v690 = vunpack.c.l.b16 %v658
      %v691 = vunpack.c.l.b16 %v659
      %v692 = vunpack.c.l.b16 %v660
      %v693 = vunpack.c.l.b16 %v661
      %v694 = vunpack.c.l.b16 %v662
      %v695 = vunpack.c.l.b16 %v663
      %v696 = vunpack.c.l.b16 %v664
      %v697 = vunpack.c.l.b16 %v665
      %v698 = vunpack.c.l.b16 %v666
      %v699 = vunpack.c.l.b16 %v667
      %v700 = vunpack.c.l.b16 %v668
      %v701 = vunpack.c.l.b16 %v669
      %v702 = vpack.c.b16 %v687, %v686
      %v703 = vpack.c.b16 %v689, %v688
      %v704 = vpack.c.b16 %v691, %v690
      %v705 = vpack.c.b16 %v693, %v692
      %v706 = vpack.c.b16 %v695, %v694
      %v707 = vpack.c.b16 %v697, %v696
      %v708 = vpack.c.b16 %v699, %v698
      %v709 = vpack.c.b16 %v701, %v700
      %718 = vmatpush.bf16.msra.mxu0 %v709
      %719 = vmatpush.bf16.msra.mxu0 %v708
      %720 = vmatpush.bf16.msra.mxu0 %v707
      %721 = vmatpush.bf16.msra.mxu0 %v706
      %722 = vmatpush.bf16.msra.mxu0 %v705
      %723 = vmatpush.bf16.msra.mxu0 %v704
      %724 = vmatpush.bf16.msra.mxu0 %v703
      %725 = vmatpush.bf16.msra.mxu0 %v702
      %726 = vmatmul.bf16.gmra.mxu0 %v649
      %v727 = vpop.f32.mrf.mxu0
      %v728 = vadd.f32 0.0, %v727
      %v729 = vpop.f32.mrf.mxu0
      %v730 = vadd.f32 0.0, %v729
      %731 = vmatmul.bf16.gmra.mxu0 %v650
      %v732 = vpop.f32.mrf.mxu0
      %v733 = vadd.f32 0.0, %v732
      %v734 = vpop.f32.mrf.mxu0
      %v735 = vadd.f32 0.0, %v734
      %736 = vmatmul.bf16.gmra.mxu0 %v651
      %v737 = vpop.f32.mrf.mxu0
      %v738 = vadd.f32 0.0, %v737
      %v739 = vpop.f32.mrf.mxu0
      %v740 = vadd.f32 0.0, %v739
      %741 = vmatmul.bf16.gmra.mxu0 %v652
      %v742 = vpop.f32.mrf.mxu0
      %v743 = vadd.f32 0.0, %v742
      %v744 = vpop.f32.mrf.mxu0
      %v745 = vadd.f32 0.0, %v744
      %746 = vmatmul.bf16.gmra.mxu0 %v653
      %v747 = vpop.f32.mrf.mxu0
      %v748 = vadd.f32 0.0, %v747
      %v749 = vpop.f32.mrf.mxu0
      %v750 = vadd.f32 0.0, %v749
      %751 = vdwg.mxu0
      %v752 = vld [vmem:[%s192] sm:$0xf]
      %v753 = vunpack.c.l.bf16 %v752
      %v754 = vadd.f32 %v728, %v753
      %v755 = vpack.c.bf16 %v754, %v754
      %756 = vst [vmem:[%s197] sm:$0xf] %v755
      %v757 = vld [vmem:[%s192 + $0x4] sm:$0xf]
      %v758 = vunpack.c.l.bf16 %v757
      %v760 = vrot.slane %v758, 6
      %v762 = vadd.f32 %v730, %v760
      %v763 = vadd.f32 %v733, %v760
      %v764 = vpack.c.bf16 %v762, %v762
      %v765 = vpack.c.bf16 %v763, %v763
      %vm768 = vcmask 1042432
      %vm769 = vcmask 1046532
      %vm770 = vmor %vm768, %vm769
      %v771 = vrot.slane %v764, 5
      %v772 = vrot.slane %v771, 4
      %v773 = vrot.slane %v765, 5
      %v774 = vsel %vm770, %v772, %v773
      %776 = vst [vmem:[%s197 + $0x4] sm:$0xf] %v774
      %v777 = vld [vmem:[%s192 + $0x8] sm:$0xf]
      %v778 = vunpack.c.l.bf16 %v777
      %v780 = vrot.slane %v778, 4
      %v782 = vadd.f32 %v733, %v780
      %v783 = vadd.f32 %v735, %v780
      %v784 = vpack.c.bf16 %v782, %v782
      %v785 = vpack.c.bf16 %v783, %v783
      %vm788 = vcmask 1041408
      %vm789 = vcmask 1045508
      %vm790 = vmor %vm788, %vm789
      %v791 = vrot.slane %v784, 6
      %v792 = vrot.slane %v791, 4
      %v793 = vrot.slane %v785, 6
      %v794 = vsel %vm790, %v792, %v793
      %796 = vst [vmem:[%s197 + $0x8] sm:$0xf] %v794
      %v797 = vld [vmem:[%s192 + $0xc] sm:$0xf]
      %v798 = vunpack.c.l.bf16 %v797
      %v800 = vrot.slane %v798, 2
      %v802 = vadd.f32 %v735, %v800
      %v803 = vadd.f32 %v738, %v800
      %v804 = vpack.c.bf16 %v802, %v802
      %v805 = vpack.c.bf16 %v803, %v803
      %vm808 = vcmask 1040384
      %vm809 = vcmask 1044484
      %vm810 = vmor %vm808, %vm809
      %v811 = vrot.slane %v804, 7
      %v812 = vrot.slane %v811, 4
      %v813 = vrot.slane %v805, 7
      %v814 = vsel %vm810, %v812, %v813
      %816 = vst [vmem:[%s197 + $0xc] sm:$0xf] %v814
      %v817 = vld [vmem:[%s192 + $0x10] sm:$0xf]
      %v818 = vunpack.c.l.bf16 %v817
      %v819 = vadd.f32 %v740, %v818
      %v820 = vpack.c.bf16 %v819, %v819
      %821 = vst [vmem:[%s197 + $0x10] sm:$0xf] %v820
      %v822 = vld [vmem:[%s192 + $0x14] sm:$0xf]
      %v823 = vunpack.c.l.bf16 %v822
      %v825 = vrot.slane %v823, 6
      %v827 = vadd.f32 %v743, %v825
      %v828 = vadd.f32 %v745, %v825
      %v829 = vpack.c.bf16 %v827, %v827
      %v830 = vpack.c.bf16 %v828, %v828
      %v833 = vrot.slane %v829, 5
      %v834 = vrot.slane %v833, 4
      %v835 = vrot.slane %v830, 5
      %v836 = vsel %vm770, %v834, %v835
      %838 = vst [vmem:[%s197 + $0x14] sm:$0xf] %v836
      %v839 = vld [vmem:[%s192 + $0x18] sm:$0xf]
      %v840 = vunpack.c.l.bf16 %v839
      %v842 = vrot.slane %v840, 4
      %v844 = vadd.f32 %v745, %v842
      %v845 = vadd.f32 %v748, %v842
      %v846 = vpack.c.bf16 %v844, %v844
      %v847 = vpack.c.bf16 %v845, %v845
      %v850 = vrot.slane %v846, 6
      %v851 = vrot.slane %v850, 4
      %v852 = vrot.slane %v847, 6
      %v853 = vsel %vm790, %v851, %v852
      %855 = vst [vmem:[%s197 + $0x18] sm:$0xf] %v853
      %v856 = vld [vmem:[%s192 + $0x1c] sm:$0xf]
      %v857 = vunpack.c.l.bf16 %v856
      %v859 = vrot.slane %v857, 2
      %v861 = vadd.f32 %v748, %v859
      %v862 = vadd.f32 %v750, %v859
      %v863 = vpack.c.bf16 %v861, %v861
      %v864 = vpack.c.bf16 %v862, %v862
      %v867 = vrot.slane %v863, 7
      %v868 = vrot.slane %v867, 4
      %v869 = vrot.slane %v864, 7
      %v870 = vsel %vm810, %v868, %v869
      %872 = vst [vmem:[%s197 + $0x1c] sm:$0xf] %v870
      %p873 = scmp.lt.s32.totalorder %s15, 1
      %s874 = scalar_select %p873, %s15, 1
      %s875 = smul.addr %s874, 8
      %s876 = smul.addr %s875, 4
      %s877 = scalar_lea.vmem %s4, %s876
      // Predicated region
      $region37: #{_lambda_.10} parent=35 // pred_check
        %p878 = pneg %p122
      $region38: #{_lambda_.10} parent=35 // pred_check_branch
        %880 = sbr.rel (%p878) target = $region40
      $region39: #{_lambda_.10} parent=35 // pred_region
        _
      $region40: #{_lambda_.10} parent=35 // pred_fallthru
        _
    $region36: #{_lambda_.10} parent=5 // pred_fallthru
      _
    %p881 = scmp.le.s32.totalorder 2, %s10
    // Predicated region
    $region41: #{_lambda_.10} parent=5 // pred_check
      %p882 = pneg %p881
    $region42: #{_lambda_.10} parent=5 // pred_check_branch
      %884 = sbr.rel (%p882) target = $region44
    $region43: #{_lambda_.10} parent=5 // pred_region
      %s885 = ssub.s32 %s10, 2
      // Predicated region
      $region45: #{_lambda_.10} parent=43 // pred_check
        %p886 = pneg %p128
      $region46: #{_lambda_.10} parent=43 // pred_check_branch
        %888 = sbr.rel (%p886) target = $region48
      $region47: #{_lambda_.10} parent=43 // pred_region
        %p889 = scmp.lt.s32.totalorder %s16, 1
        %s890 = scalar_select %p889, %s16, 1
        %s891 = smul.addr %s890, 8
        %s892 = smul.addr %s891, 4
        %s893 = scalar_lea.vmem %s4, %s892
      $region48: #{_lambda_.10} parent=43 // pred_fallthru
        _
    $region44: #{_lambda_.10} parent=5 // pred_fallthru
      _
  $region6: #{_lambda_.10} parent=0 // loop_footer
    %s14 = sadd.s32 1, %s10
  $region7: #{_lambda_.10} parent=0 // loop_footer_branch
    %9 = sbr.rel target = $region3
  $region8: #{_lambda_.10} parent=0 // loop_exit
    _

// kernel: _lambda_.11
$region0: #{_lambda_.11}
  #allocation0 [shape = 'u32[]', space=smem, size = 0x4, offset = 0x4, fixed_abs, tag = 'smem constant byte address 0x4 - core index']
  #allocation1 [shape = 'u32[72,128]{1,0:T(1,128)}', space=vmem, size = 0x9000, scoped, tag = 'internal scratch']
  #allocation2 [shape = 'f32[36,128]{1,0:T(8,128)}', space=vmem, size = 0x5000, scoped, tag = 'scratch operand']
  %s0 = inlined_call_operand.vmem [shape: bf16[2,64,128], index: 0, kind: input, shape index: {}]
  %s1 = inlined_call_operand.vmem [shape: bf16[128,128], index: 1, kind: input, shape index: {}]
  %s2 = inlined_call_operand.vmem [shape: f32[9,1,128], index: 2, kind: input, shape index: {}]
  %s3 = inlined_call_operand.vmem [shape: bf16[128,128], index: 3, kind: input, shape index: {}]
  %s4 = inlined_call_operand.vmem [shape: bf16[2,16,128], index: 4, kind: output, shape index: {}]
  %s5 = sld [smem:[#allocation0]]
  $region49: #{_lambda_.11} parent=0
    _
  %s7 = ssub.s32 1, %s5
  %s8 = scalar_select 0, %s7, %s5
  loop: start=0, step=1, limit=4
  $region2: #{_lambda_.11} parent=0 // loop_pre_header
    _
  $region3: #{_lambda_.11} parent=0 // loop_header
    %s10 = sphi 0, %s14
    %p11 = scmp.ge.s32.totalorder %s10, 4
    %s20 = sphi 0, %s22
    %s23 = sphi 0, %s20
    %s24 = sphi 0, %s23
    %s40 = sphi 0, %s24
    %s44 = sphi 0, %s44
    %s46 = sphi 0, %s44
    %s47 = sphi 0, %s46
    %s61 = sphi 0, %s47
    %s65 = sphi 0, %s65
    %s67 = sphi 0, %s65
    %s68 = sphi 0, %s67
    %s82 = sphi 0, %s68
    %s86 = sphi 0, %s86
    %s88 = sphi 0, %s86
    %s89 = sphi 0, %s88
    %s103 = sphi 0, %s89
    %s109 = sphi 0, %s111
    %s112 = sphi 0, %s109
    %s113 = sphi 0, %s112
    %s129 = sphi 0, %s113
  $region4: #{_lambda_.11} parent=0 // loop_header_branch
    %13 = sbr.rel (%p11) target = $region8
  $region5: #{_lambda_.11} parent=0 // loop_body
    %s15 = ssub.s32 %s10, 1
    %s16 = ssub.s32 %s10, 2
    %s17 = sadd.s32 %s10, 1
    %s18 = ssub.s32 %s10, %s17
    %p19 = scmp.eq.s32.totalorder %s18, 0
    %s21 = sadd.s32 %s20, 1
    %s22 = scalar_select %p19, %s20, %s21
    %p25 = pneg %p19
    %p26 = scmp.eq.s32.totalorder %s10, 1
    %p27 = por %p25, %p26
    %p28 = scmp.ne.s32.totalorder %s20, %s23
    %p29 = scmp.eq.s32.totalorder %s10, 0
    %p30 = por %p28, %p29
    %p31 = scmp.ne.s32.totalorder %s20, %s23
    %p32 = scmp.eq.s32.totalorder %s15, 1
    %p33 = por %p31, %p32
    %p34 = scmp.ne.s32.totalorder %s23, %s24
    %p35 = scmp.eq.s32.totalorder %s15, 0
    %p36 = por %p34, %p35
    %p37 = scmp.ne.s32.totalorder %s23, %s24
    %p38 = scmp.eq.s32.totalorder %s16, 1
    %p39 = por %p37, %p38
    %p41 = scmp.ne.s32.totalorder %s24, %s40
    %p42 = scmp.eq.s32.totalorder %s16, 0
    %p43 = por %p41, %p42
    %s45 = sadd.s32 %s44, 1
    %p48 = scmp.eq.s32.totalorder %s10, 1
    %p49 = scmp.ne.s32.totalorder %s44, %s46
    %p50 = scmp.eq.s32.totalorder %s10, 0
    %p51 = por %p49, %p50
    %p52 = scmp.ne.s32.totalorder %s44, %s46
    %p53 = scmp.eq.s32.totalorder %s15, 1
    %p54 = por %p52, %p53
    %p55 = scmp.ne.s32.totalorder %s46, %s47
    %p56 = scmp.eq.s32.totalorder %s15, 0
    %p57 = por %p55, %p56
    %p58 = scmp.ne.s32.totalorder %s46, %s47
    %p59 = scmp.eq.s32.totalorder %s16, 1
    %p60 = por %p58, %p59
    %p62 = scmp.ne.s32.totalorder %s47, %s61
    %p63 = scmp.eq.s32.totalorder %s16, 0
    %p64 = por %p62, %p63
    %s66 = sadd.s32 %s65, 1
    %p69 = scmp.eq.s32.totalorder %s10, 1
    %p70 = scmp.ne.s32.totalorder %s65, %s67
    %p71 = scmp.eq.s32.totalorder %s10, 0
    %p72 = por %p70, %p71
    %p73 = scmp.ne.s32.totalorder %s65, %s67
    %p74 = scmp.eq.s32.totalorder %s15, 1
    %p75 = por %p73, %p74
    %p76 = scmp.ne.s32.totalorder %s67, %s68
    %p77 = scmp.eq.s32.totalorder %s15, 0
    %p78 = por %p76, %p77
    %p79 = scmp.ne.s32.totalorder %s67, %s68
    %p80 = scmp.eq.s32.totalorder %s16, 1
    %p81 = por %p79, %p80
    %p83 = scmp.ne.s32.totalorder %s68, %s82
    %p84 = scmp.eq.s32.totalorder %s16, 0
    %p85 = por %p83, %p84
    %s87 = sadd.s32 %s86, 1
    %p90 = scmp.eq.s32.totalorder %s10, 1
    %p91 = scmp.ne.s32.totalorder %s86, %s88
    %p92 = scmp.eq.s32.totalorder %s10, 0
    %p93 = por %p91, %p92
    %p94 = scmp.ne.s32.totalorder %s86, %s88
    %p95 = scmp.eq.s32.totalorder %s15, 1
    %p96 = por %p94, %p95
    %p97 = scmp.ne.s32.totalorder %s88, %s89
    %p98 = scmp.eq.s32.totalorder %s15, 0
    %p99 = por %p97, %p98
    %p100 = scmp.ne.s32.totalorder %s88, %s89
    %p101 = scmp.eq.s32.totalorder %s16, 1
    %p102 = por %p100, %p101
    %p104 = scmp.ne.s32.totalorder %s89, %s103
    %p105 = scmp.eq.s32.totalorder %s16, 0
    %p106 = por %p104, %p105
    %s107 = ssub.s32 %s10, %s17
    %p108 = scmp.eq.s32.totalorder %s107, 0
    %s110 = sadd.s32 %s109, 1
    %s111 = scalar_select %p108, %s109, %s110
    %p114 = pneg %p108
    %p115 = scmp.eq.s32.totalorder %s10, 1
    %p116 = por %p114, %p115
    %p117 = scmp.ne.s32.totalorder %s109, %s112
    %p118 = scmp.eq.s32.totalorder %s10, 0
    %p119 = por %p117, %p118
    %p120 = scmp.ne.s32.totalorder %s109, %s112
    %p121 = scmp.eq.s32.totalorder %s15, 1
    %p122 = por %p120, %p121
    %p123 = scmp.ne.s32.totalorder %s112, %s113
    %p124 = scmp.eq.s32.totalorder %s15, 0
    %p125 = por %p123, %p124
    %p126 = scmp.ne.s32.totalorder %s112, %s113
    %p127 = scmp.eq.s32.totalorder %s16, 1
    %p128 = por %p126, %p127
    %p130 = scmp.ne.s32.totalorder %s113, %s129
    %p131 = scmp.eq.s32.totalorder %s16, 0
    %p132 = por %p130, %p131
    %p133 = scmp.le.s32.totalorder 1, %s10
    %p134 = scmp.lt.s32.totalorder %s10, 3
    %p135 = pnand %p133, %p134
    %p136 = pneg %p135
    // Predicated region
    $region9: #{_lambda_.11} parent=5 // pred_check
      _
    $region10: #{_lambda_.11} parent=5 // pred_check_branch
      %138 = sbr.rel (%p135) target = $region12
    $region11: #{_lambda_.11} parent=5 // pred_region
      %s139 = ssub.s32 %s10, 1
      // Predicated region
      $region13: #{_lambda_.11} parent=11 // pred_check
        %p140 = pneg %p57
      $region14: #{_lambda_.11} parent=11 // pred_check_branch
        %142 = sbr.rel (%p140) target = $region16
      $region15: #{_lambda_.11} parent=11 // pred_region
        _
      $region16: #{_lambda_.11} parent=11 // pred_fallthru
        _
      // Predicated region
      $region17: #{_lambda_.11} parent=11 // pred_check
        %p143 = pneg %p78
      $region18: #{_lambda_.11} parent=11 // pred_check_branch
        %145 = sbr.rel (%p143) target = $region20
      $region19: #{_lambda_.11} parent=11 // pred_region
        _
      $region20: #{_lambda_.11} parent=11 // pred_fallthru
        _
      // Predicated region
      $region21: #{_lambda_.11} parent=11 // pred_check
        %p146 = pneg %p99
      $region22: #{_lambda_.11} parent=11 // pred_check_branch
        %148 = sbr.rel (%p146) target = $region24
      $region23: #{_lambda_.11} parent=11 // pred_region
        _
      $region24: #{_lambda_.11} parent=11 // pred_fallthru
        _
    $region12: #{_lambda_.11} parent=5 // pred_fallthru
      _
    %p149 = scmp.lt.s32.totalorder %s10, 2
    // Predicated region
    $region25: #{_lambda_.11} parent=5 // pred_check
      %p150 = pneg %p149
    $region26: #{_lambda_.11} parent=5 // pred_check_branch
      %152 = sbr.rel (%p150) target = $region28
    $region27: #{_lambda_.11} parent=5 // pred_region
      // Predicated region
      $region29: #{_lambda_.11} parent=27 // pred_check
        %p153 = pneg %p30
      $region30: #{_lambda_.11} parent=27 // pred_check_branch
        %155 = sbr.rel (%p153) target = $region32
      $region31: #{_lambda_.11} parent=27 // pred_region
        %p156 = scmp.lt.s32.totalorder %s10, 1
        %s157 = scalar_select %p156, %s10, 1
        %s158 = smul.addr %s157, 8
        %s159 = smul.addr %s158, 4
        %s160 = scalar_lea.vmem %s0, %s159
      $region32: #{_lambda_.11} parent=27 // pred_fallthru
        _
    $region28: #{_lambda_.11} parent=5 // pred_fallthru
      _
    %p161 = scmp.le.s32.totalorder 1, %s10
    %p162 = scmp.lt.s32.totalorder %s10, 3
    %p163 = pnand %p161, %p162
    %p164 = pneg %p163
    // Predicated region
    $region33: #{_lambda_.11} parent=5 // pred_check
      _
    $region34: #{_lambda_.11} parent=5 // pred_check_branch
      %166 = sbr.rel (%p163) target = $region36
    $region35: #{_lambda_.11} parent=5 // pred_region
      %s167 = ssub.s32 %s10, 1
      %p168 = scmp.lt.s32.totalorder %s15, 1
      %s169 = scalar_select %p168, %s15, 1
      %s170 = smul.addr %s169, 8
      %s171 = smul.addr %s170, 4
      %s172 = scalar_lea.vmem %s0, %s171
      %p173 = pneg %p36
      %p174 = pneg %p33
      %p175 = pneg %p57
      %p176 = pneg %p54
      %p177 = pneg %p78
      %p178 = pneg %p75
      %p179 = pneg %p99
      %p180 = pneg %p96
      %p181 = pneg %p125
      %p182 = pneg %p122
      %p183 = scmp.lt.s32.totalorder %s15, 1
      %s184 = scalar_select %p183, %s15, 1
      %s185 = smul.addr %s184, 2
      %s186 = smul.addr %s185, 4
      %s187 = scalar_lea.vmem %s4, %s186
      %p188 = scmp.lt.s32.totalorder %s15, 1
      %s189 = scalar_select %p188, %s15, 1
      %s190 = smul.addr %s189, 8
      %s191 = smul.addr %s190, 4
      %s192 = scalar_lea.vmem %s0, %s191
      %p193 = scmp.lt.s32.totalorder %s15, 1
      %s194 = scalar_select %p193, %s15, 1
      %s195 = smul.addr %s194, 2
      %s196 = smul.addr %s195, 4
      %s197 = scalar_lea.vmem %s4, %s196
      %198 = vst [vmem:[#allocation2] sm:$0x7f] 0.0
      %199 = vst [vmem:[#allocation2 + $0xb] sm:$0x3] 0.0
      %200 = vst [vmem:[#allocation2 + $0x11] sm:$0x3] 0.0
      %201 = vst [vmem:[#allocation2 + $0x17] sm:$0x3] 0.0
      %202 = vst [vmem:[#allocation2 + $0x1d] sm:$0x3] 0.0
      %203 = vst [vmem:[#allocation2 + $0x1f] sm:$0x1f] 0.0
      %v204 = vld [vmem:[%s192] sm:$0xf]
      %v205 = vld [vmem:[%s192 + $0x4] sm:$0xf]
      %v206 = vld [vmem:[%s192 + $0x8] sm:$0xf]
      %v207 = vld [vmem:[%s192 + $0xc] sm:$0xf]
      %v208 = vld [vmem:[%s192 + $0x10] sm:$0xf]
      %v209 = vld [vmem:[%s192 + $0x14] sm:$0xf]
      %v210 = vld [vmem:[%s192 + $0x18] sm:$0xf]
      %v211 = vld [vmem:[%s192 + $0x1c] sm:$0xf]
      %v212 = vld [vmem:[%s1] sm:$0xf]
      %v213 = vld [vmem:[%s1 + $0x4] sm:$0xf]
      %v214 = vld [vmem:[%s1 + $0x8] sm:$0xf]
      %v215 = vld [vmem:[%s1 + $0xc] sm:$0xf]
      %v216 = vld [vmem:[%s1 + $0x10] sm:$0xf]
      %v217 = vld [vmem:[%s1 + $0x14] sm:$0xf]
      %v218 = vld [vmem:[%s1 + $0x18] sm:$0xf]
      %v219 = vld [vmem:[%s1 + $0x1c] sm:$0xf]
      %v220 = vld [vmem:[%s1 + $0x20] sm:$0xf]
      %v221 = vld [vmem:[%s1 + $0x24] sm:$0xf]
      %v222 = vld [vmem:[%s1 + $0x28] sm:$0xf]
      %v223 = vld [vmem:[%s1 + $0x2c] sm:$0xf]
      %v224 = vld [vmem:[%s1 + $0x30] sm:$0xf]
      %v225 = vld [vmem:[%s1 + $0x34] sm:$0xf]
      %v226 = vld [vmem:[%s1 + $0x38] sm:$0xf]
      %v227 = vld [vmem:[%s1 + $0x3c] sm:$0xf]
      %v236 = vunpack.c.l.b16 %v204
      %v237 = vunpack.c.l.b16 %v205
      %v238 = vunpack.c.l.b16 %v206
      %v239 = vunpack.c.l.b16 %v207
      %v240 = vunpack.c.l.b16 %v208
      %v241 = vunpack.c.l.b16 %v209
      %v242 = vunpack.c.l.b16 %v210
      %v243 = vunpack.c.l.b16 %v211
      %v244 = vpack.c.b16 %v237, %v236
      %v245 = vpack.c.b16 %v239, %v238
      %v246 = vpack.c.b16 %v241, %v240
      %v247 = vpack.c.b16 %v243, %v242
      %v268 = vunpack.c.l.b16 %v212
      %v269 = vunpack.c.l.b16 %v213
      %v270 = vunpack.c.l.b16 %v214
      %v271 = vunpack.c.l.b16 %v215
      %v272 = vunpack.c.l.b16 %v216
      %v273 = vunpack.c.l.b16 %v217
      %v274 = vunpack.c.l.b16 %v218
      %v275 = vunpack.c.l.b16 %v219
      %v276 = vunpack.c.l.b16 %v220
      %v277 = vunpack.c.l.b16 %v221
      %v278 = vunpack.c.l.b16 %v222
      %v279 = vunpack.c.l.b16 %v223
      %v280 = vunpack.c.l.b16 %v224
      %v281 = vunpack.c.l.b16 %v225
      %v282 = vunpack.c.l.b16 %v226
      %v283 = vunpack.c.l.b16 %v227
      %v284 = vpack.c.b16 %v269, %v268
      %v285 = vpack.c.b16 %v271, %v270
      %v286 = vpack.c.b16 %v273, %v272
      %v287 = vpack.c.b16 %v275, %v274
      %v288 = vpack.c.b16 %v277, %v276
      %v289 = vpack.c.b16 %v279, %v278
      %v290 = vpack.c.b16 %v281, %v280
      %v291 = vpack.c.b16 %v283, %v282
      %300 = vmatpush.bf16.msra.mxu0 %v291
      %301 = vmatpush.bf16.msra.mxu0 %v290
      %302 = vmatpush.bf16.msra.mxu0 %v289
      %303 = vmatpush.bf16.msra.mxu0 %v288
      %304 = vmatpush.bf16.msra.mxu0 %v287
      %305 = vmatpush.bf16.msra.mxu0 %v286
      %306 = vmatpush.bf16.msra.mxu0 %v285
      %307 = vmatpush.bf16.msra.mxu0 %v284
      %308 = vmatmul.bf16.gmra.mxu0 %v244
      %v309 = vpop.f32.mrf.mxu0
      %v310 = vadd.f32 0.0, %v309
      %v311 = vpop.f32.mrf.mxu0
      %v312 = vadd.f32 0.0, %v311
      %313 = vmatmul.bf16.gmra.mxu0 %v245
      %v314 = vpop.f32.mrf.mxu0
      %v315 = vadd.f32 0.0, %v314
      %v316 = vpop.f32.mrf.mxu0
      %v317 = vadd.f32 0.0, %v316
      %318 = vmatmul.bf16.gmra.mxu0 %v246
      %v319 = vpop.f32.mrf.mxu0
      %v320 = vadd.f32 0.0, %v319
      %v321 = vpop.f32.mrf.mxu0
      %v322 = vadd.f32 0.0, %v321
      %323 = vmatmul.bf16.gmra.mxu0 %v247
      %v324 = vpop.f32.mrf.mxu0
      %v325 = vadd.f32 0.0, %v324
      %v326 = vpop.f32.mrf.mxu0
      %v327 = vadd.f32 0.0, %v326
      %328 = vdwg.mxu0
      %v329 = vmax.f32 %v310, 0.0
      %v330 = vmax.f32 %v312, 0.0
      %v331 = vmax.f32 %v315, 0.0
      %v332 = vmax.f32 %v317, 0.0
      %v333 = vmax.f32 %v320, 0.0
      %v334 = vmax.f32 %v322, 0.0
      %v335 = vmax.f32 %v325, 0.0
      %v336 = vmax.f32 %v327, 0.0
      %v337 = vmax.f32 %v329, %v331
      %v338 = vmax.f32 %v330, %v332
      %v339 = vmax.f32 %v333, %v335
      %v340 = vmax.f32 %v334, %v336
      %v341 = vmax.f32 %v337, %v339
      %v342 = vmax.f32 %v338, %v340
      %343 = vst [vmem:[#allocation2 + $0x7] sm:$0xf] %v341
      %344 = vst [vmem:[#allocation2 + $0x9] sm:$0xf0] %v341
      %345 = vst [vmem:[#allocation2 + $0x13] sm:$0xf] %v342
      %346 = vst [vmem:[#allocation2 + $0x15] sm:$0xf0] %v342
      %v347 = vld [vmem:[%s2] sm:$0x1]
      %s348 = scalar_lea.vmem %s2, 1
      %v349 = vld [vmem:[%s348] sm:$0x1]
      %s350 = scalar_lea.vmem %s2, 2
      %v351 = vld [vmem:[%s350] sm:$0x1]
      %s352 = scalar_lea.vmem %s2, 3
      %v353 = vld [vmem:[%s352] sm:$0x1]
      %s354 = scalar_lea.vmem %s2, 4
      %v355 = vld [vmem:[%s354] sm:$0x1]
      %s356 = scalar_lea.vmem %s2, 5
      %v357 = vld [vmem:[%s356] sm:$0x1]
      %s358 = scalar_lea.vmem %s2, 6
      %v359 = vld [vmem:[%s358] sm:$0x1]
      %s360 = scalar_lea.vmem %s2, 7
      %v361 = vld [vmem:[%s360] sm:$0x1]
      %s362 = scalar_lea.vmem %s2, 8
      %v363 = vld [vmem:[%s362] sm:$0x1]
      %v364 = vld [vmem:[#allocation2] sm:$0xff]
      %v365 = vld [vmem:[#allocation2 + $0x8] sm:$0xff]
      %v366 = vld [vmem:[#allocation2 + $0x10] sm:$0x3f]
      %v368 = vperm.slane %v347, 0
      %v370 = vmul.f32 %v364, %v368
      %v371 = vmul.f32 %v365, %v368
      %v372 = vmul.f32 %v366, %v368
      %v373 = vld [vmem:[#allocation2 + $0x1] sm:$0xff]
      %v374 = vld [vmem:[#allocation2 + $0x9] sm:$0xff]
      %v375 = vld [vmem:[#allocation2 + $0x11] sm:$0x3f]
      %v377 = vperm.slane %v349, 0
      %v379 = vmul.f32 %v373, %v377
      %v380 = vmul.f32 %v374, %v377
      %v381 = vmul.f32 %v375, %v377
      %v382 = vadd.f32 %v370, %v379
      %v383 = vadd.f32 %v371, %v380
      %v384 = vadd.f32 %v372, %v381
      %v385 = vld [vmem:[#allocation2 + $0x2] sm:$0xff]
      %v386 = vld [vmem:[#allocation2 + $0xa] sm:$0xff]
      %v387 = vld [vmem:[#allocation2 + $0x12] sm:$0x3f]
      %v389 = vperm.slane %v351, 0
      %v391 = vmul.f32 %v385, %v389
      %v392 = vmul.f32 %v386, %v389
      %v393 = vmul.f32 %v387, %v389
      %v394 = vadd.f32 %v382, %v391
      %v395 = vadd.f32 %v383, %v392
      %v396 = vadd.f32 %v384, %v393
      %v397 = vld [vmem:[#allocation2 + $0x6] sm:$0xff]
      %v398 = vld [vmem:[#allocation2 + $0xe] sm:$0xff]
      %v399 = vld [vmem:[#allocation2 + $0x16] sm:$0x3f]
      %v401 = vperm.slane %v353, 0
      %v403 = vmul.f32 %v397, %v401
      %v404 = vmul.f32 %v398, %v401
      %v405 = vmul.f32 %v399, %v401
      %v406 = vadd.f32 %v394, %v403
      %v407 = vadd.f32 %v395, %v404
      %v408 = vadd.f32 %v396, %v405
      %v409 = vld [vmem:[#allocation2 + $0x7] sm:$0xff]
      %v410 = vld [vmem:[#allocation2 + $0xf] sm:$0xff]
      %v411 = vld [vmem:[#allocation2 + $0x17] sm:$0x3f]
      %v413 = vperm.slane %v355, 0
      %v415 = vmul.f32 %v409, %v413
      %v416 = vmul.f32 %v410, %v413
      %v417 = vmul.f32 %v411, %v413
      %v418 = vadd.f32 %v406, %v415
      %v419 = vadd.f32 %v407, %v416
      %v420 = vadd.f32 %v408, %v417
      %v421 = vld [vmem:[#allocation2 + $0x10] sm:$0xff]
      %v422 = vld [vmem:[#allocation2 + $0x18] sm:$0x3f]
      %v424 = vperm.slane %v357, 0
      %v426 = vmul.f32 %v365, %v424
      %v427 = vmul.f32 %v421, %v424
      %v428 = vmul.f32 %v422, %v424
      %v429 = vadd.f32 %v418, %v426
      %v430 = vadd.f32 %v419, %v427
      %v431 = vadd.f32 %v420, %v428
      %v432 = vld [vmem:[#allocation2 + $0xc] sm:$0xff]
      %v433 = vld [vmem:[#allocation2 + $0x14] sm:$0xff]
      %v434 = vld [vmem:[#allocation2 + $0x1c] sm:$0x3f]
      %v436 = vperm.slane %v359, 0
      %v438 = vmul.f32 %v432, %v436
      %v439 = vmul.f32 %v433, %v436
      %v440 = vmul.f32 %v434, %v436
      %v441 = vadd.f32 %v429, %v438
      %v442 = vadd.f32 %v430, %v439
      %v443 = vadd.f32 %v431, %v440
      %v444 = vld [vmem:[#allocation2 + $0xd] sm:$0xff]
      %v445 = vld [vmem:[#allocation2 + $0x15] sm:$0xff]
      %v446 = vld [vmem:[#allocation2 + $0x1d] sm:$0x3f]
      %v448 = vperm.slane %v361, 0
      %v450 = vmul.f32 %v444, %v448
      %v451 = vmul.f32 %v445, %v448
      %v452 = vmul.f32 %v446, %v448
      %v453 = vadd.f32 %v441, %v450
      %v454 = vadd.f32 %v442, %v451
      %v455 = vadd.f32 %v443, %v452
      %v456 = vld [vmem:[#allocation2 + $0xe] sm:$0xff]
      %v457 = vld [vmem:[#allocation2 + $0x16] sm:$0xff]
      %v458 = vld [vmem:[#allocation2 + $0x1e] sm:$0x3f]
      %v460 = vperm.slane %v363, 0
      %v462 = vmul.f32 %v456, %v460
      %v463 = vmul.f32 %v457, %v460
      %v464 = vmul.f32 %v458, %v460
      %v465 = vadd.f32 %v453, %v462
      %v466 = vadd.f32 %v454, %v463
      %v467 = vadd.f32 %v455, %v464
      %v468 = vmax.f32 %v465, 0.0
      %v469 = vmax.f32 %v466, 0.0
      %v470 = vmax.f32 %v467, 0.0
      %v471 = vpack.c.bf16 %v469, %v468
      %v472 = vpack.c.bf16 %v470, %v470
      %v473 = vld [vmem:[%s3] sm:$0xf]
      %v474 = vld [vmem:[%s3 + $0x4] sm:$0xf]
      %v475 = vld [vmem:[%s3 + $0x8] sm:$0xf]
      %v476 = vld [vmem:[%s3 + $0xc] sm:$0xf]
      %v477 = vld [vmem:[%s3 + $0x10] sm:$0xf]
      %v478 = vld [vmem:[%s3 + $0x14] sm:$0xf]
      %v479 = vld [vmem:[%s3 + $0x18] sm:$0xf]
      %v480 = vld [vmem:[%s3 + $0x1c] sm:$0xf]
      %v481 = vld [vmem:[%s3 + $0x20] sm:$0xf]
      %v482 = vld [vmem:[%s3 + $0x24] sm:$0xf]
      %v483 = vld [vmem:[%s3 + $0x28] sm:$0xf]
      %v484 = vld [vmem:[%s3 + $0x2c] sm:$0xf]
      %v485 = vld [vmem:[%s3 + $0x30] sm:$0xf]
      %v486 = vld [vmem:[%s3 + $0x34] sm:$0xf]
      %v487 = vld [vmem:[%s3 + $0x38] sm:$0xf]
      %v488 = vld [vmem:[%s3 + $0x3c] sm:$0xf]
      %v505 = vunpack.c.l.b16 %v473
      %v506 = vunpack.c.l.b16 %v474
      %v507 = vunpack.c.l.b16 %v475
      %v508 = vunpack.c.l.b16 %v476
      %v509 = vunpack.c.l.b16 %v477
      %v510 = vunpack.c.l.b16 %v478
      %v511 = vunpack.c.l.b16 %v479
      %v512 = vunpack.c.l.b16 %v480
      %v513 = vunpack.c.l.b16 %v481
      %v514 = vunpack.c.l.b16 %v482
      %v515 = vunpack.c.l.b16 %v483
      %v516 = vunpack.c.l.b16 %v484
      %v517 = vunpack.c.l.b16 %v485
      %v518 = vunpack.c.l.b16 %v486
      %v519 = vunpack.c.l.b16 %v487
      %v520 = vunpack.c.l.b16 %v488
      %v521 = vpack.c.b16 %v506, %v505
      %v522 = vpack.c.b16 %v508, %v507
      %v523 = vpack.c.b16 %v510, %v509
      %v524 = vpack.c.b16 %v512, %v511
      %v525 = vpack.c.b16 %v514, %v513
      %v526 = vpack.c.b16 %v516, %v515
      %v527 = vpack.c.b16 %v518, %v517
      %v528 = vpack.c.b16 %v520, %v519
      %537 = vmatpush.bf16.msra.mxu0 %v528
      %538 = vmatpush.bf16.msra.mxu0 %v527
      %539 = vmatpush.bf16.msra.mxu0 %v526
      %540 = vmatpush.bf16.msra.mxu0 %v525
      %541 = vmatpush.bf16.msra.mxu0 %v524
      %542 = vmatpush.bf16.msra.mxu0 %v523
      %543 = vmatpush.bf16.msra.mxu0 %v522
      %544 = vmatpush.bf16.msra.mxu0 %v521
      %545 = vmatmul.bf16.gmra.mxu0 %v471
      %v546 = vpop.f32.mrf.mxu0
      %v547 = vadd.f32 0.0, %v546
      %v548 = vpop.f32.mrf.mxu0
      %v549 = vadd.f32 0.0, %v548
      %550 = vmatmul.bf16.gmra.mxu0 %v472
      %v551 = vpop.f32.mrf.mxu0
      %v552 = vadd.f32 0.0, %v551
      %v553 = vpop.f32.mrf.mxu0
      %554 = vdwg.mxu0
      %v555 = vpack.c.bf16 %v547, %v547
      %556 = vst [vmem:[%s197] sm:$0x3] %v555
      %v557 = vpack.c.bf16 %v549, %v549
      %vm560 = vcmask 1042432
      %vm561 = vcmask 1046532
      %vm562 = vmor %vm560, %vm561
      %v563 = vrot.slane %v555, 5
      %v564 = vrot.slane %v563, 4
      %v565 = vrot.slane %v557, 5
      %v566 = vsel %vm562, %v564, %v565
      %568 = vst [vmem:[%s197] sm:$0xc] %v566
      %v569 = vrot.slane %v557, 6
      %v570 = vrot.slane %v569, 4
      %572 = vst [vmem:[%s197 + $0x4] sm:$0x3] %v570
      %v573 = vpack.c.bf16 %v552, %v552
      %v575 = vrot.slane %v573, 7
      %577 = vst [vmem:[%s197 + $0x4] sm:$0xc] %v575
      %p578 = scmp.lt.s32.totalorder %s15, 1
      %s579 = scalar_select %p578, %s15, 1
      %s580 = smul.addr %s579, 2
      %s581 = smul.addr %s580, 4
      %s582 = scalar_lea.vmem %s4, %s581
      // Predicated region
      $region37: #{_lambda_.11} parent=35 // pred_check
        %p583 = pneg %p122
      $region38: #{_lambda_.11} parent=35 // pred_check_branch
        %585 = sbr.rel (%p583) target = $region40
      $region39: #{_lambda_.11} parent=35 // pred_region
        _
      $region40: #{_lambda_.11} parent=35 // pred_fallthru
        _
    $region36: #{_lambda_.11} parent=5 // pred_fallthru
      _
    %p586 = scmp.le.s32.totalorder 2, %s10
    // Predicated region
    $region41: #{_lambda_.11} parent=5 // pred_check
      %p587 = pneg %p586
    $region42: #{_lambda_.11} parent=5 // pred_check_branch
      %589 = sbr.rel (%p587) target = $region44
    $region43: #{_lambda_.11} parent=5 // pred_region
      %s590 = ssub.s32 %s10, 2
      // Predicated region
      $region45: #{_lambda_.11} parent=43 // pred_check
        %p591 = pneg %p128
      $region46: #{_lambda_.11} parent=43 // pred_check_branch
        %593 = sbr.rel (%p591) target = $region48
      $region47: #{_lambda_.11} parent=43 // pred_region
        %p594 = scmp.lt.s32.totalorder %s16, 1
        %s595 = scalar_select %p594, %s16, 1
        %s596 = smul.addr %s595, 2
        %s597 = smul.addr %s596, 4
        %s598 = scalar_lea.vmem %s4, %s597
      $region48: #{_lambda_.11} parent=43 // pred_fallthru
        _
    $region44: #{_lambda_.11} parent=5 // pred_fallthru
      _
  $region6: #{_lambda_.11} parent=0 // loop_footer
    %s14 = sadd.s32 1, %s10
  $region7: #{_lambda_.11} parent=0 // loop_footer_branch
    %9 = sbr.rel target = $region3
  $region8: #{_lambda_.11} parent=0 // loop_exit
    _

// kernel: _lambda_.13
$region0: #{_lambda_.13}
  #allocation0 [shape = 'u32[]', space=smem, size = 0x4, offset = 0x4, fixed_abs, tag = 'smem constant byte address 0x4 - core index']
  #allocation1 [shape = 'u32[72,128]{1,0:T(1,128)}', space=vmem, size = 0x9000, scoped, tag = 'internal scratch']
  %s0 = inlined_call_operand.vmem [shape: bf16[2,128], index: 0, kind: input, shape index: {}]
  %s1 = inlined_call_operand.vmem [shape: bf16[128,128], index: 1, kind: input, shape index: {}]
  %s2 = inlined_call_operand.hbm [shape: f32[2,128], index: 2, kind: output, shape index: {}]
  %s3 = sld [smem:[#allocation0]]
  $region18: #{_lambda_.13} parent=0
    _
  %s5 = ssub.s32 1, %s3
  %s6 = scalar_select 0, %s5, %s3
  $region1: #{_lambda_.13} parent=0
    #allocation2 [shape = 'u8[1024]{0}', space=vmem, size = 0x400, scoped, tag = 'output window, operand 0, single buffered']
    #allocation3 [shape = 's32[1]{0}', space=sflag, size = 0x4, scoped, tag = 'scoped memory for _lambda_.13']
    %7 = vsyncpa [#allocation3], 0
    // Predicated region
    $region2: #{_lambda_.13} parent=1 // pred_check
      _
    $region3: #{_lambda_.13} parent=1 // pred_check_branch
      %9 = sbr.rel (0) target = $region5
    $region4: #{_lambda_.13} parent=1 // pred_region
      _
    $region5: #{_lambda_.13} parent=1 // pred_fallthru
      _
    // Predicated region
    $region6: #{_lambda_.13} parent=1 // pred_check
      _
    $region7: #{_lambda_.13} parent=1 // pred_check_branch
      %11 = sbr.rel (0) target = $region9
    $region8: #{_lambda_.13} parent=1 // pred_region
      _
    $region9: #{_lambda_.13} parent=1 // pred_fallthru
      _
    %v12 = vld [vmem:[%s0] sm:$0x1]
    %v13 = vld [vmem:[%s1] sm:$0xf]
    %v14 = vld [vmem:[%s1 + $0x4] sm:$0xf]
    %v15 = vld [vmem:[%s1 + $0x8] sm:$0xf]
    %v16 = vld [vmem:[%s1 + $0xc] sm:$0xf]
    %v17 = vld [vmem:[%s1 + $0x10] sm:$0xf]
    %v18 = vld [vmem:[%s1 + $0x14] sm:$0xf]
    %v19 = vld [vmem:[%s1 + $0x18] sm:$0xf]
    %v20 = vld [vmem:[%s1 + $0x1c] sm:$0xf]
    %v21 = vld [vmem:[%s1 + $0x20] sm:$0xf]
    %v22 = vld [vmem:[%s1 + $0x24] sm:$0xf]
    %v23 = vld [vmem:[%s1 + $0x28] sm:$0xf]
    %v24 = vld [vmem:[%s1 + $0x2c] sm:$0xf]
    %v25 = vld [vmem:[%s1 + $0x30] sm:$0xf]
    %v26 = vld [vmem:[%s1 + $0x34] sm:$0xf]
    %v27 = vld [vmem:[%s1 + $0x38] sm:$0xf]
    %v28 = vld [vmem:[%s1 + $0x3c] sm:$0xf]
    %v45 = vunpack.c.l.b16 %v13
    %v46 = vunpack.c.l.b16 %v14
    %v47 = vunpack.c.l.b16 %v15
    %v48 = vunpack.c.l.b16 %v16
    %v49 = vunpack.c.l.b16 %v17
    %v50 = vunpack.c.l.b16 %v18
    %v51 = vunpack.c.l.b16 %v19
    %v52 = vunpack.c.l.b16 %v20
    %v53 = vunpack.c.l.b16 %v21
    %v54 = vunpack.c.l.b16 %v22
    %v55 = vunpack.c.l.b16 %v23
    %v56 = vunpack.c.l.b16 %v24
    %v57 = vunpack.c.l.b16 %v25
    %v58 = vunpack.c.l.b16 %v26
    %v59 = vunpack.c.l.b16 %v27
    %v60 = vunpack.c.l.b16 %v28
    %v61 = vpack.c.b16 %v46, %v45
    %v62 = vpack.c.b16 %v48, %v47
    %v63 = vpack.c.b16 %v50, %v49
    %v64 = vpack.c.b16 %v52, %v51
    %v65 = vpack.c.b16 %v54, %v53
    %v66 = vpack.c.b16 %v56, %v55
    %v67 = vpack.c.b16 %v58, %v57
    %v68 = vpack.c.b16 %v60, %v59
    %77 = vmatpush.bf16.msra.mxu0 %v68
    %78 = vmatpush.bf16.msra.mxu0 %v67
    %79 = vmatpush.bf16.msra.mxu0 %v66
    %80 = vmatpush.bf16.msra.mxu0 %v65
    %81 = vmatpush.bf16.msra.mxu0 %v64
    %82 = vmatpush.bf16.msra.mxu0 %v63
    %83 = vmatpush.bf16.msra.mxu0 %v62
    %84 = vmatpush.bf16.msra.mxu0 %v61
    %85 = vmatmul.bf16.gmra.mxu0 %v12
    %v86 = vpop.f32.mrf.mxu0
    %v87 = vadd.f32 0.0, %v86
    %v88 = vpop.f32.mrf.mxu0
    %89 = vdwg.mxu0
    %v90 = vmul.f32 %v87, %v87
    %vm91 = vcmask 1041408
    %v92 = vsel %vm91, %v90, 0.0
    %93 = vadd.xlane.f32.xlu0 %v92
    %v94 = vpop.xlane.xlu0 %93
    %v95 = vmax.f32 %v94, 1e-24
    %v96 = vrsqrt.pop %v95
    %v97 = vmul.f32 %v96, %v95
    %v98 = vmul.f32 %v97, %v96
    %v99 = vmul.f32 0.5, %v98
    %v100 = vsub.f32 1.5, %v99
    %v101 = vmul.f32 %v96, %v100
    %vm102 = vweird.f32 %v95
    %vm103 = vweird.f32 %v96
    %vm104 = vmor %vm102, %vm103
    %v105 = vsel %vm104, %v96, %v101
    %v106 = vmul.f32 %v87, %v105
    %107 = vst [vmem:[#allocation2] sm:$0x3] %v106
    // Predicated region
    $region10: #{_lambda_.13} parent=1 // pred_check
      _
    $region11: #{_lambda_.13} parent=1 // pred_check_branch
      %109 = sbr.rel (0) target = $region13
    $region12: #{_lambda_.13} parent=1 // pred_region
      %111 = vsyncadd [#allocation3], 0
      %s113 = sshll.u32 [#allocation2], 4
      %s114 = int_to_ptr.vmem [resolvable:$true] %s113
      %s115 = sshll.u32 %s2, 4
      %s116 = int_to_ptr.hbm [resolvable:$true] %s115
      %118 = dma.vmem_to_hbm [thread:$0]  %s114, 32, %s116, [#allocation3]
    $region13: #{_lambda_.13} parent=1 // pred_fallthru
      _
    // Predicated region
    $region14: #{_lambda_.13} parent=1 // pred_check
      _
    $region15: #{_lambda_.13} parent=1 // pred_check_branch
      %120 = sbr.rel (0) target = $region17
    $region16: #{_lambda_.13} parent=1 // pred_region
      %122 = dma.done [#allocation3], 32
    $region17: #{_lambda_.13} parent=1 // pred_fallthru
      _
    %123 = vsyncpa [#allocation3], 1

</llo_original>
